<compile_context>
chip_gen: v7x
topology: tpu7x:2x2x1
jax: 0.10.0
libtpu: 0.0.40
codegen_flags: <defaults>
</compile_context>

<pallas_src>
import functools

import jax
import jax.numpy as jnp
from jax.experimental import pallas as pl
from jax.experimental.pallas import tpu as pltpu


# Cached capability flag: whether pipeline_mode=pl.Buffered(1) lowers on this build.
_BUFFERED_WEIGHTS_SUPPORTED = True


def _physical_vmem_bytes():
  try:
    return int(pltpu.get_tpu_info().vmem_capacity_bytes)
  except Exception:
    return 64 * 2**20  # conservative (v7x per-TC size); safe on all generations


# ----------------------------------------------------------------------------
# Fused TransformerBlock kernel (one batch tile per grid step)
# ----------------------------------------------------------------------------
def transformer_block_kernel(
    x_ref, bias_ref,
    wqkv_ref, wo_ref,
    ln1_g_ref, ln1_b_ref, ln2_g_ref, ln2_b_ref,
    wff0_ref, bff0_ref, wff1_ref, bff1_ref,
    out_ref,
    ctx_scratch,
    *, num_heads, inv_scale, eps):
  bt, seq, embed = x_ref.shape
  head_dim = embed // num_heads
  mm_dtype = wqkv_ref.dtype             # MXU operand dtype (bf16 default, f32 strict)

  x_res = x_ref[...].reshape(bt * seq, embed)        # residual-stream dtype
  xf = x_res.astype(mm_dtype)                        # flattened rows -> fill the MXU

  # --- fused QKV: one wide matmul, f32 accumulation ---
  qkv = jnp.dot(xf, wqkv_ref[...], preferred_element_type=jnp.float32)   # (B*S, 3E)

  # --- precomputed additive mask bias (f32), shared by every head ---
  mask_bias = bias_ref[...]                                              # (B, S, S)

  # --- multi-head attention; contexts packed lane-dense into VMEM scratch ---
  # Group heads so stores into ctx_scratch cover >= 128 lanes (v5e store slot).
  heads_per_group = max(1, min(num_heads, 128 // head_dim))
  for g0 in range(0, num_heads, heads_per_group):
    g_heads = range(g0, min(g0 + heads_per_group, num_heads))
    group_ctx = []
    for h in g_heads:
      lo = h * head_dim
      qh = qkv[:, lo:lo + head_dim].reshape(bt, seq, head_dim).astype(mm_dtype)
      kh = qkv[:, embed + lo:embed + lo + head_dim].reshape(bt, seq, head_dim).astype(mm_dtype)
      vh = qkv[:, 2 * embed + lo:2 * embed + lo + head_dim].reshape(bt, seq, head_dim).astype(mm_dtype)

      # batched over the batch tile; contraction on last dims (no explicit .T)
      energy = jnp.einsum('bqd,bkd->bqk', qh, kh,
                          preferred_element_type=jnp.float32)            # (B, S, S)
      energy = energy * inv_scale + mask_bias
      energy = energy - jnp.max(energy, axis=-1, keepdims=True)
      p = jnp.exp(energy)
      denom = jnp.sum(p, axis=-1, keepdims=True)
      inv_d = pl.reciprocal(denom, approx=True)      # EUP slot
      inv_d = inv_d * (2.0 - denom * inv_d)          # one Newton step -> f32-accurate
      p = p * inv_d

      ctx = jnp.einsum('bqk,bkd->bqd', p.astype(mm_dtype), vh,
                       preferred_element_type=jnp.float32)               # (B, S, D)
      group_ctx.append(ctx.reshape(bt * seq, head_dim))

    glo = g0 * head_dim
    gwidth = len(group_ctx) * head_dim
    block = group_ctx[0] if len(group_ctx) == 1 else jnp.concatenate(group_ctx, axis=-1)
    ctx_scratch[:, glo:glo + gwidth] = block

  # --- single K=embed output projection (full MXU depth, one drain) ---
  attn = jnp.dot(ctx_scratch[...].astype(mm_dtype), wo_ref[...],
                 preferred_element_type=jnp.float32)                     # (B*S, E)

  def layer_norm(z, g, b):
    # single-pass: var = E[z^2] - E[z]^2 (all f32)
    mean = jnp.mean(z, axis=-1, keepdims=True)
    ms = jnp.mean(z * z, axis=-1, keepdims=True)
    var = ms - mean * mean
    return (z - mean) * jax.lax.rsqrt(var + eps) * g + b

  # --- residual + LayerNorm1 (dropout = identity / eval mode) ---
  x1 = layer_norm(attn + x_res.astype(jnp.float32), ln1_g_ref[...], ln1_b_ref[...])

  # --- feed-forward: Linear -> ReLU -> Linear ---
  y = jnp.dot(x1.astype(mm_dtype), wff0_ref[...],
              preferred_element_type=jnp.float32) + bff0_ref[...]
  y = jnp.maximum(y, 0.0)
  y = jnp.dot(y.astype(mm_dtype), wff1_ref[...],
              preferred_element_type=jnp.float32) + bff1_ref[...]

  # --- residual + LayerNorm2 (dropout = identity) ---
  out = layer_norm(x1 + y, ln2_g_ref[...], ln2_b_ref[...])
  out_ref[...] = out.reshape(bt, seq, embed).astype(out_ref.dtype)


# ----------------------------------------------------------------------------
# Wrapper: BlockSpecs, VMEM budget, megacore-friendly batch tiling
# ----------------------------------------------------------------------------
def transformer_block(x, mask_bias, lp, *, num_heads, b_tile=None):
  """x: (bs, seq, embed) residual stream, mask_bias: (bs, seq, seq) f32."""
  global _BUFFERED_WEIGHTS_SUPPORTED
  bs, seq, embed = x.shape
  fe = lp['wff0'].shape[1]
  compute_dtype = lp['wqkv'].dtype

  # Batch-tile so each grid step gives the MXU ~512 rows, but keep grid >= 2
  # whenever bs >= 2 so both v7x TensorCores are fed.
  if b_tile is None:
    target_rows = 512
    max_tile = bs if bs < 2 else max(1, bs // 2)
    b_tile = 1
    for d in range(1, max_tile + 1):
      if bs % d == 0 and d * seq <= max(target_rows, seq):
        b_tile = d
  grid = (bs // b_tile,)

  kernel = functools.partial(
      transformer_block_kernel,
      num_heads=num_heads,
      inv_scale=1.0 / float(embed) ** 0.5,
      eps=1e-5,
  )

  rows = b_tile * seq
  w_item = jnp.dtype(compute_dtype).itemsize
  x_item = jnp.dtype(x.dtype).itemsize

  def _vmem_limit(weight_buf_count):
    weight_bytes = (3 * embed * embed + embed * embed + embed * fe + fe * embed) * w_item \
        + (4 * embed + fe + embed) * 4
    pipelined = 2 * (rows * embed * x_item            # x tile
                     + b_tile * seq * seq * 4         # mask bias tile
                     + rows * embed * x_item)         # out tile
    temps = 4 * rows * (3 * embed + 3 * embed + fe) \
        + 4 * rows * embed \
        + 4 * 2 * b_tile * seq * seq                  # energy + p (per head, live)
    budget = weight_buf_count * weight_bytes + pipelined + temps
    phys = _physical_vmem_bytes()
    return int(min(int(0.875 * phys), max(16 * 2**20, int(1.25 * budget) + (2 << 20))))

  def _call(use_buffered_weights):
    wkw = dict(pipeline_mode=pl.Buffered(1)) if use_buffered_weights else {}

    def full(shape):
      n = len(shape)
      return pl.BlockSpec(shape, lambda *_a, _n=n: (0,) * _n, **wkw)

    in_specs = [
        pl.BlockSpec((b_tile, seq, embed), lambda b: (b, 0, 0)),   # x
        pl.BlockSpec((b_tile, seq, seq), lambda b: (b, 0, 0)),     # mask bias
        full((embed, 3 * embed)),                                  # fused wqkv
        full((embed, embed)),                                      # wo
        full((1, embed)), full((1, embed)),                        # ln1 gamma/beta
        full((1, embed)), full((1, embed)),                        # ln2 gamma/beta
        full((embed, fe)), full((1, fe)),                          # ff0 W, b
        full((fe, embed)), full((1, embed)),                       # ff1 W, b
    ]
    return pl.pallas_call(
        kernel,
        out_shape=jax.ShapeDtypeStruct((bs, seq, embed), x.dtype),
        grid=grid,
        in_specs=in_specs,
        out_specs=pl.BlockSpec((b_tile, seq, embed), lambda b: (b, 0, 0)),
        scratch_shapes=[pltpu.VMEM((rows, embed), jnp.float32)],   # packed head contexts
        compiler_params=pltpu.CompilerParams(
            dimension_semantics=("parallel",),
            vmem_limit_bytes=_vmem_limit(1 if use_buffered_weights else 2)),
    )(x, mask_bias, lp['wqkv'], lp['wo'],
      lp['ln1_g'], lp['ln1_b'], lp['ln2_g'], lp['ln2_b'],
      lp['wff0'], lp['bff0'], lp['wff1'], lp['bff1'])

  if _BUFFERED_WEIGHTS_SUPPORTED:
    try:
      return _call(True)
    except Exception:
      _BUFFERED_WEIGHTS_SUPPORTED = False   # fall back once, remember the decision
  return _call(False)


# ----------------------------------------------------------------------------
# Parameter preparation (fuse QKV, cast weights) — done ONCE, outside forward
# ----------------------------------------------------------------------------
def prepare_encoder_params(params, compute_dtype=jnp.bfloat16):
  prepared = {
      'num_heads': params['num_heads'],
      'word_emb': params['word_emb'],
      'pos_emb': params['pos_emb'],
      'compute_dtype': jnp.dtype(compute_dtype),
      'layers': [],
  }
  for lp in params['layers']:
    prepared['layers'].append({
        'wqkv': jnp.concatenate([lp['wq'], lp['wk'], lp['wv']], axis=1).astype(compute_dtype),
        'wo': lp['wo'].astype(compute_dtype),
        'wff0': lp['wff0'].astype(compute_dtype),
        'wff1': lp['wff1'].astype(compute_dtype),
        'ln1_g': lp['ln1_g'], 'ln1_b': lp['ln1_b'],
        'ln2_g': lp['ln2_g'], 'ln2_b': lp['ln2_b'],
        'bff0': lp['bff0'], 'bff1': lp['bff1'],
    })
  return prepared


# ----------------------------------------------------------------------------
# Encoder forward (embedding glue + stacked fused-block kernels)
# ----------------------------------------------------------------------------
def encoder_forward(tokens, mask, prepared):
  bs, seq = tokens.shape
  compute_dtype = prepared['compute_dtype']
  positions = jnp.arange(seq)
  out = prepared['word_emb'][tokens] + prepared['pos_emb'][positions][None, :, :]
  out = out.astype(compute_dtype)   # residual stream carried in compute_dtype
  # Additive mask bias is layer-invariant: compute once per forward, in f32.
  mask_bias = jnp.where(mask[:, 0] == 0, jnp.float32(-1e20), jnp.float32(0.0))
  # TODO(synk): nn.Dropout has no deterministic forward; treated as identity (eval mode).
  for lp in prepared['layers']:
    out = transformer_block(out, mask_bias, lp, num_heads=prepared['num_heads'])
  return out


# ----------------------------------------------------------------------------
# Pure-JAX reference (mirrors the PyTorch forward) for a correctness check
# ----------------------------------------------------------------------------
def _ref_block(x, mask, p, num_heads):
  bs, seq, embed = x.shape
  hd = embed // num_heads
  q = (x @ p['wq']).reshape(bs, seq, num_heads, hd)
  k = (x @ p['wk']).reshape(bs, seq, num_heads, hd)
  v = (x @ p['wv']).reshape(bs, seq, num_heads, hd)
  energy = jnp.einsum('nqhd,nkhd->nhqk', q, k)
  energy = jnp.where(mask == 0, -1e20, energy)
  attn = jax.nn.softmax(energy / float(embed) ** 0.5, axis=3)
  out = jnp.einsum('nhql,nlhd->nqhd', attn, v).reshape(bs, seq, embed) @ p['wo']

  def ln(z, g, b):
    mu = z.mean(-1, keepdims=True)
    var = ((z - mu) ** 2).mean(-1, keepdims=True)
    return (z - mu) / jnp.sqrt(var + 1e-5) * g + b

  x1 = ln(out + x, p['ln1_g'], p['ln1_b'])
  y = jnp.maximum(x1 @ p['wff0'] + p['bff0'], 0.0) @ p['wff1'] + p['bff1']
  return ln(x1 + y, p['ln2_g'], p['ln2_b'])


def _ref_encoder(tokens, mask, params):
  bs, seq = tokens.shape
  out = params['word_emb'][tokens] + params['pos_emb'][jnp.arange(seq)][None]
  for lp in params['layers']:
    out = _ref_block(out, mask, lp, params['num_heads'])
  return out


# ----------------------------------------------------------------------------
# Deterministic parameter construction
# ----------------------------------------------------------------------------
def make_params(key, *, vocab, max_len, embed, num_heads, num_layers, forward_expansion):
  fe = forward_expansion * embed
  keys = jax.random.split(key, 2 + num_layers)
  params = {
      'num_heads': num_heads,
      'word_emb': 0.02 * jax.random.normal(keys[0], (vocab, embed), jnp.float32),
      'pos_emb': 0.02 * jax.random.normal(keys[1], (max_len, embed), jnp.float32),
      'layers': [],
  }
  for li in range(num_layers):
    ks = jax.random.split(keys[2 + li], 8)
    s = 1.0 / float(embed) ** 0.5
    params['layers'].append({
        'wq': s * jax.random.normal(ks[0], (embed, embed), jnp.float32),
        'wk': s * jax.random.normal(ks[1], (embed, embed), jnp.float32),
        'wv': s * jax.random.normal(ks[2], (embed, embed), jnp.float32),
        'wo': s * jax.random.normal(ks[3], (embed, embed), jnp.float32),
        'ln1_g': jnp.ones((1, embed), jnp.float32),
        'ln1_b': jnp.zeros((1, embed), jnp.float32),
        'ln2_g': jnp.ones((1, embed), jnp.float32),
        'ln2_b': jnp.zeros((1, embed), jnp.float32),
        'wff0': s * jax.random.normal(ks[4], (embed, fe), jnp.float32),
        'bff0': 0.01 * jax.random.normal(ks[5], (1, fe), jnp.float32),
        'wff1': (1.0 / float(fe) ** 0.5) * jax.random.normal(ks[6], (fe, embed), jnp.float32),
        'bff1': 0.01 * jax.random.normal(ks[7], (1, embed), jnp.float32),
    })
  return params


if __name__ == "__main__":
  # Lane-dense embed (multiple of 128); small demo config.
  bs, seq = 2, 8
  embed, num_heads, num_layers, forward_expansion = 128, 4, 2, 4
  vocab, max_len = 64, 16

  key = jax.random.PRNGKey(0)
  k_tok, k_par = jax.random.split(key)
  params = make_params(k_par, vocab=vocab, max_len=max_len, embed=embed,
                       num_heads=num_heads, num_layers=num_layers,
                       forward_expansion=forward_expansion)

  tokens = jax.random.randint(k_tok, (bs, seq), 0, vocab, dtype=jnp.int32)
  mask = jnp.ones((bs, 1, seq, seq), jnp.int32)   # all-visible padding mask

  ref = jax.block_until_ready(_ref_encoder(tokens, mask, params))

  # f32 path: strict correctness check.
  prepared_f32 = prepare_encoder_params(params, compute_dtype=jnp.float32)
  out = jax.block_until_ready(encoder_forward(tokens, mask, prepared_f32))
  assert out.shape == (bs, seq, embed)
  assert jnp.allclose(out, ref, rtol=1e-4, atol=1e-4), "f32 mismatch vs JAX reference"

  # Default bf16 path (bf16 MXU operands + bf16 residual stream): loose check.
  prepared_bf16 = prepare_encoder_params(params)   # compute_dtype=bfloat16 default
  out_bf16 = jax.block_until_ready(encoder_forward(tokens, mask, prepared_bf16))
  assert out_bf16.dtype == jnp.bfloat16
  out_bf16_f32 = out_bf16.astype(jnp.float32)
  assert jnp.all(jnp.isfinite(out_bf16_f32))
  assert float(jnp.max(jnp.abs(out_bf16_f32 - ref))) < 0.25, "bf16 path diverged"

  print("KERNEL_OK")
</pallas_src>

<mosaic_0001>
module attributes {stable_mosaic.version = 11 : i64} {
  func.func @transformer_block_kernel(%arg0: i32, %arg1: memref<1x8x128xf32, #tpu.memory_space<vmem>>, %arg2: memref<1x8x8xf32, #tpu.memory_space<vmem>>, %arg3: memref<128x384xf32, #tpu.memory_space<vmem>>, %arg4: memref<128x128xf32, #tpu.memory_space<vmem>>, %arg5: memref<1x128xf32, #tpu.memory_space<vmem>>, %arg6: memref<1x128xf32, #tpu.memory_space<vmem>>, %arg7: memref<1x128xf32, #tpu.memory_space<vmem>>, %arg8: memref<1x128xf32, #tpu.memory_space<vmem>>, %arg9: memref<128x512xf32, #tpu.memory_space<vmem>>, %arg10: memref<1x512xf32, #tpu.memory_space<vmem>>, %arg11: memref<512x128xf32, #tpu.memory_space<vmem>>, %arg12: memref<1x128xf32, #tpu.memory_space<vmem>>, %arg13: memref<1x8x128xf32, #tpu.memory_space<vmem>>, %arg14: memref<8x128xf32, #tpu.memory_space<vmem>>) attributes {dimension_semantics = [#tpu.dimension_semantics<parallel>], iteration_bounds = array<i64: 2>, scalar_prefetch = 0 : i64, scratch_operands = 1 : i64, tpu.core_type = #tpu.core_type<tc>, window_params = [{transform_indices = @transform_0, window_bounds = array<i64: 1, 8, 128>}, {transform_indices = @transform_1, window_bounds = array<i64: 1, 8, 8>}, {pipeline_mode = #tpu.pipeline_mode<synchronous>, transform_indices = @transform_2, window_bounds = array<i64: 128, 384>}, {pipeline_mode = #tpu.pipeline_mode<synchronous>, transform_indices = @transform_3, window_bounds = array<i64: 128, 128>}, {pipeline_mode = #tpu.pipeline_mode<synchronous>, transform_indices = @transform_4, window_bounds = array<i64: 1, 128>}, {pipeline_mode = #tpu.pipeline_mode<synchronous>, transform_indices = @transform_5, window_bounds = array<i64: 1, 128>}, {pipeline_mode = #tpu.pipeline_mode<synchronous>, transform_indices = @transform_6, window_bounds = array<i64: 1, 128>}, {pipeline_mode = #tpu.pipeline_mode<synchronous>, transform_indices = @transform_7, window_bounds = array<i64: 1, 128>}, {pipeline_mode = #tpu.pipeline_mode<synchronous>, transform_indices = @transform_8, window_bounds = array<i64: 128, 512>}, {pipeline_mode = #tpu.pipeline_mode<synchronous>, transform_indices = @transform_9, window_bounds = array<i64: 1, 512>}, {pipeline_mode = #tpu.pipeline_mode<synchronous>, transform_indices = @transform_10, window_bounds = array<i64: 512, 128>}, {pipeline_mode = #tpu.pipeline_mode<synchronous>, transform_indices = @transform_11, window_bounds = array<i64: 1, 128>}, {transform_indices = @transform_12, window_bounds = array<i64: 1, 8, 128>}]} {
    %c0 = arith.constant 0 : index
    %c0_0 = arith.constant 0 : index
    %c0_1 = arith.constant 0 : index
    %0 = vector.load %arg1[%c0, %c0_0, %c0_1] : memref<1x8x128xf32, #tpu.memory_space<vmem>>, vector<1x8x128xf32>
    %1 = vector.shape_cast %0 : vector<1x8x128xf32> to vector<8x128xf32>
    %c0_2 = arith.constant 0 : index
    %c0_3 = arith.constant 0 : index
    %2 = vector.load %arg3[%c0_2, %c0_3] : memref<128x384xf32, #tpu.memory_space<vmem>>, vector<128x384xf32>
    %cst = arith.constant dense<0.000000e+00> : vector<8x384xf32>
    %3 = tpu.matmul %1, %2, %cst {dimension_numbers = #tpu.dot_dimension_numbers<[1], [0], [0], [1], [0, 0, 1, 1], [], []>} : vector<8x128xf32>, vector<128x384xf32>, vector<8x384xf32> -> vector<8x384xf32>
    %c0_4 = arith.constant 0 : index
    %c0_5 = arith.constant 0 : index
    %c0_6 = arith.constant 0 : index
    %4 = vector.load %arg2[%c0_4, %c0_5, %c0_6] : memref<1x8x8xf32, #tpu.memory_space<vmem>>, vector<1x8x8xf32>
    %5 = vector.extract_strided_slice %3 {offsets = [0, 0], sizes = [8, 32], strides = [1, 1]} : vector<8x384xf32> to vector<8x32xf32>
    %6 = vector.shape_cast %5 : vector<8x32xf32> to vector<1x8x32xf32>
    %7 = vector.extract_strided_slice %3 {offsets = [0, 128], sizes = [8, 32], strides = [1, 1]} : vector<8x384xf32> to vector<8x32xf32>
    %8 = vector.shape_cast %7 : vector<8x32xf32> to vector<1x8x32xf32>
    %9 = vector.extract_strided_slice %3 {offsets = [0, 256], sizes = [8, 32], strides = [1, 1]} : vector<8x384xf32> to vector<8x32xf32>
    %10 = vector.shape_cast %9 : vector<8x32xf32> to vector<1x8x32xf32>
    "tpu.trace_start"() <{level = 10 : i32, message = "bqd,bkd->bqk"}> : () -> ()
    %cst_7 = arith.constant dense<0.000000e+00> : vector<1x8x8xf32>
    %11 = tpu.matmul %6, %8, %cst_7 {dimension_numbers = #tpu.dot_dimension_numbers<[2], [2], [1], [1], [0, 0, 0, 1, 1, 1], [0], [0]>} : vector<1x8x32xf32>, vector<1x8x32xf32>, vector<1x8x8xf32> -> vector<1x8x8xf32>
    "tpu.trace_stop"() : () -> ()
    %cst_8 = arith.constant 0.0883883461 : f32
    %12 = vector.broadcast %cst_8 : f32 to vector<1x8x8xf32>
    %13 = arith.mulf %11, %12 : vector<1x8x8xf32>
    %14 = arith.addf %13, %4 : vector<1x8x8xf32>
    %cst_9 = arith.constant dense<0xFF800000> : vector<1x8xf32>
    %15 = vector.multi_reduction <maximumf>, %14, %cst_9 [2] : vector<1x8x8xf32> to vector<1x8xf32>
    %16 = vector.shape_cast %15 : vector<1x8xf32> to vector<1x8x1xf32>
    %17 = vector.broadcast %16 : vector<1x8x1xf32> to vector<1x8x8xf32>
    %18 = arith.subf %14, %17 : vector<1x8x8xf32>
    %19 = math.exp %18 : vector<1x8x8xf32>
    %cst_10 = arith.constant dense<0.000000e+00> : vector<1x8xf32>
    %20 = vector.multi_reduction <add>, %19, %cst_10 [2] : vector<1x8x8xf32> to vector<1x8xf32>
    %21 = vector.shape_cast %20 : vector<1x8xf32> to vector<1x8x1xf32>
    %22 = tpu.reciprocal %21 {approx = true} : vector<1x8x1xf32> -> vector<1x8x1xf32>
    %23 = arith.mulf %21, %22 : vector<1x8x1xf32>
    %cst_11 = arith.constant 2.000000e+00 : f32
    %24 = vector.broadcast %cst_11 : f32 to vector<1x8x1xf32>
    %25 = arith.subf %24, %23 : vector<1x8x1xf32>
    %26 = arith.mulf %22, %25 : vector<1x8x1xf32>
    %27 = vector.broadcast %26 : vector<1x8x1xf32> to vector<1x8x8xf32>
    %28 = arith.mulf %19, %27 : vector<1x8x8xf32>
    "tpu.trace_start"() <{level = 10 : i32, message = "bqk,bkd->bqd"}> : () -> ()
    %cst_12 = arith.constant dense<0.000000e+00> : vector<1x8x32xf32>
    %29 = tpu.matmul %28, %10, %cst_12 {dimension_numbers = #tpu.dot_dimension_numbers<[2], [1], [1], [2], [0, 0, 0, 1, 1, 2], [0], [0]>} : vector<1x8x8xf32>, vector<1x8x32xf32>, vector<1x8x32xf32> -> vector<1x8x32xf32>
    "tpu.trace_stop"() : () -> ()
    %30 = vector.shape_cast %29 : vector<1x8x32xf32> to vector<8x32xf32>
    %31 = vector.extract_strided_slice %3 {offsets = [0, 32], sizes = [8, 32], strides = [1, 1]} : vector<8x384xf32> to vector<8x32xf32>
    %32 = vector.shape_cast %31 : vector<8x32xf32> to vector<1x8x32xf32>
    %33 = vector.extract_strided_slice %3 {offsets = [0, 160], sizes = [8, 32], strides = [1, 1]} : vector<8x384xf32> to vector<8x32xf32>
    %34 = vector.shape_cast %33 : vector<8x32xf32> to vector<1x8x32xf32>
    %35 = vector.extract_strided_slice %3 {offsets = [0, 288], sizes = [8, 32], strides = [1, 1]} : vector<8x384xf32> to vector<8x32xf32>
    %36 = vector.shape_cast %35 : vector<8x32xf32> to vector<1x8x32xf32>
    "tpu.trace_start"() <{level = 10 : i32, message = "bqd,bkd->bqk"}> : () -> ()
    %cst_13 = arith.constant dense<0.000000e+00> : vector<1x8x8xf32>
    %37 = tpu.matmul %32, %34, %cst_13 {dimension_numbers = #tpu.dot_dimension_numbers<[2], [2], [1], [1], [0, 0, 0, 1, 1, 1], [0], [0]>} : vector<1x8x32xf32>, vector<1x8x32xf32>, vector<1x8x8xf32> -> vector<1x8x8xf32>
    "tpu.trace_stop"() : () -> ()
    %cst_14 = arith.constant 0.0883883461 : f32
    %38 = vector.broadcast %cst_14 : f32 to vector<1x8x8xf32>
    %39 = arith.mulf %37, %38 : vector<1x8x8xf32>
    %40 = arith.addf %39, %4 : vector<1x8x8xf32>
    %cst_15 = arith.constant dense<0xFF800000> : vector<1x8xf32>
    %41 = vector.multi_reduction <maximumf>, %40, %cst_15 [2] : vector<1x8x8xf32> to vector<1x8xf32>
    %42 = vector.shape_cast %41 : vector<1x8xf32> to vector<1x8x1xf32>
    %43 = vector.broadcast %42 : vector<1x8x1xf32> to vector<1x8x8xf32>
    %44 = arith.subf %40, %43 : vector<1x8x8xf32>
    %45 = math.exp %44 : vector<1x8x8xf32>
    %cst_16 = arith.constant dense<0.000000e+00> : vector<1x8xf32>
    %46 = vector.multi_reduction <add>, %45, %cst_16 [2] : vector<1x8x8xf32> to vector<1x8xf32>
    %47 = vector.shape_cast %46 : vector<1x8xf32> to vector<1x8x1xf32>
    %48 = tpu.reciprocal %47 {approx = true} : vector<1x8x1xf32> -> vector<1x8x1xf32>
    %49 = arith.mulf %47, %48 : vector<1x8x1xf32>
    %cst_17 = arith.constant 2.000000e+00 : f32
    %50 = vector.broadcast %cst_17 : f32 to vector<1x8x1xf32>
    %51 = arith.subf %50, %49 : vector<1x8x1xf32>
    %52 = arith.mulf %48, %51 : vector<1x8x1xf32>
    %53 = vector.broadcast %52 : vector<1x8x1xf32> to vector<1x8x8xf32>
    %54 = arith.mulf %45, %53 : vector<1x8x8xf32>
    "tpu.trace_start"() <{level = 10 : i32, message = "bqk,bkd->bqd"}> : () -> ()
    %cst_18 = arith.constant dense<0.000000e+00> : vector<1x8x32xf32>
    %55 = tpu.matmul %54, %36, %cst_18 {dimension_numbers = #tpu.dot_dimension_numbers<[2], [1], [1], [2], [0, 0, 0, 1, 1, 2], [0], [0]>} : vector<1x8x8xf32>, vector<1x8x32xf32>, vector<1x8x32xf32> -> vector<1x8x32xf32>
    "tpu.trace_stop"() : () -> ()
    %56 = vector.shape_cast %55 : vector<1x8x32xf32> to vector<8x32xf32>
    %57 = vector.extract_strided_slice %3 {offsets = [0, 64], sizes = [8, 32], strides = [1, 1]} : vector<8x384xf32> to vector<8x32xf32>
    %58 = vector.shape_cast %57 : vector<8x32xf32> to vector<1x8x32xf32>
    %59 = vector.extract_strided_slice %3 {offsets = [0, 192], sizes = [8, 32], strides = [1, 1]} : vector<8x384xf32> to vector<8x32xf32>
    %60 = vector.shape_cast %59 : vector<8x32xf32> to vector<1x8x32xf32>
    %61 = vector.extract_strided_slice %3 {offsets = [0, 320], sizes = [8, 32], strides = [1, 1]} : vector<8x384xf32> to vector<8x32xf32>
    %62 = vector.shape_cast %61 : vector<8x32xf32> to vector<1x8x32xf32>
    "tpu.trace_start"() <{level = 10 : i32, message = "bqd,bkd->bqk"}> : () -> ()
    %cst_19 = arith.constant dense<0.000000e+00> : vector<1x8x8xf32>
    %63 = tpu.matmul %58, %60, %cst_19 {dimension_numbers = #tpu.dot_dimension_numbers<[2], [2], [1], [1], [0, 0, 0, 1, 1, 1], [0], [0]>} : vector<1x8x32xf32>, vector<1x8x32xf32>, vector<1x8x8xf32> -> vector<1x8x8xf32>
    "tpu.trace_stop"() : () -> ()
    %cst_20 = arith.constant 0.0883883461 : f32
    %64 = vector.broadcast %cst_20 : f32 to vector<1x8x8xf32>
    %65 = arith.mulf %63, %64 : vector<1x8x8xf32>
    %66 = arith.addf %65, %4 : vector<1x8x8xf32>
    %cst_21 = arith.constant dense<0xFF800000> : vector<1x8xf32>
    %67 = vector.multi_reduction <maximumf>, %66, %cst_21 [2] : vector<1x8x8xf32> to vector<1x8xf32>
    %68 = vector.shape_cast %67 : vector<1x8xf32> to vector<1x8x1xf32>
    %69 = vector.broadcast %68 : vector<1x8x1xf32> to vector<1x8x8xf32>
    %70 = arith.subf %66, %69 : vector<1x8x8xf32>
    %71 = math.exp %70 : vector<1x8x8xf32>
    %cst_22 = arith.constant dense<0.000000e+00> : vector<1x8xf32>
    %72 = vector.multi_reduction <add>, %71, %cst_22 [2] : vector<1x8x8xf32> to vector<1x8xf32>
    %73 = vector.shape_cast %72 : vector<1x8xf32> to vector<1x8x1xf32>
    %74 = tpu.reciprocal %73 {approx = true} : vector<1x8x1xf32> -> vector<1x8x1xf32>
    %75 = arith.mulf %73, %74 : vector<1x8x1xf32>
    %cst_23 = arith.constant 2.000000e+00 : f32
    %76 = vector.broadcast %cst_23 : f32 to vector<1x8x1xf32>
    %77 = arith.subf %76, %75 : vector<1x8x1xf32>
    %78 = arith.mulf %74, %77 : vector<1x8x1xf32>
    %79 = vector.broadcast %78 : vector<1x8x1xf32> to vector<1x8x8xf32>
    %80 = arith.mulf %71, %79 : vector<1x8x8xf32>
    "tpu.trace_start"() <{level = 10 : i32, message = "bqk,bkd->bqd"}> : () -> ()
    %cst_24 = arith.constant dense<0.000000e+00> : vector<1x8x32xf32>
    %81 = tpu.matmul %80, %62, %cst_24 {dimension_numbers = #tpu.dot_dimension_numbers<[2], [1], [1], [2], [0, 0, 0, 1, 1, 2], [0], [0]>} : vector<1x8x8xf32>, vector<1x8x32xf32>, vector<1x8x32xf32> -> vector<1x8x32xf32>
    "tpu.trace_stop"() : () -> ()
    %82 = vector.shape_cast %81 : vector<1x8x32xf32> to vector<8x32xf32>
    %83 = vector.extract_strided_slice %3 {offsets = [0, 96], sizes = [8, 32], strides = [1, 1]} : vector<8x384xf32> to vector<8x32xf32>
    %84 = vector.shape_cast %83 : vector<8x32xf32> to vector<1x8x32xf32>
    %85 = vector.extract_strided_slice %3 {offsets = [0, 224], sizes = [8, 32], strides = [1, 1]} : vector<8x384xf32> to vector<8x32xf32>
    %86 = vector.shape_cast %85 : vector<8x32xf32> to vector<1x8x32xf32>
    %87 = vector.extract_strided_slice %3 {offsets = [0, 352], sizes = [8, 32], strides = [1, 1]} : vector<8x384xf32> to vector<8x32xf32>
    %88 = vector.shape_cast %87 : vector<8x32xf32> to vector<1x8x32xf32>
    "tpu.trace_start"() <{level = 10 : i32, message = "bqd,bkd->bqk"}> : () -> ()
    %cst_25 = arith.constant dense<0.000000e+00> : vector<1x8x8xf32>
    %89 = tpu.matmul %84, %86, %cst_25 {dimension_numbers = #tpu.dot_dimension_numbers<[2], [2], [1], [1], [0, 0, 0, 1, 1, 1], [0], [0]>} : vector<1x8x32xf32>, vector<1x8x32xf32>, vector<1x8x8xf32> -> vector<1x8x8xf32>
    "tpu.trace_stop"() : () -> ()
    %cst_26 = arith.constant 0.0883883461 : f32
    %90 = vector.broadcast %cst_26 : f32 to vector<1x8x8xf32>
    %91 = arith.mulf %89, %90 : vector<1x8x8xf32>
    %92 = arith.addf %91, %4 : vector<1x8x8xf32>
    %cst_27 = arith.constant dense<0xFF800000> : vector<1x8xf32>
    %93 = vector.multi_reduction <maximumf>, %92, %cst_27 [2] : vector<1x8x8xf32> to vector<1x8xf32>
    %94 = vector.shape_cast %93 : vector<1x8xf32> to vector<1x8x1xf32>
    %95 = vector.broadcast %94 : vector<1x8x1xf32> to vector<1x8x8xf32>
    %96 = arith.subf %92, %95 : vector<1x8x8xf32>
    %97 = math.exp %96 : vector<1x8x8xf32>
    %cst_28 = arith.constant dense<0.000000e+00> : vector<1x8xf32>
    %98 = vector.multi_reduction <add>, %97, %cst_28 [2] : vector<1x8x8xf32> to vector<1x8xf32>
    %99 = vector.shape_cast %98 : vector<1x8xf32> to vector<1x8x1xf32>
    %100 = tpu.reciprocal %99 {approx = true} : vector<1x8x1xf32> -> vector<1x8x1xf32>
    %101 = arith.mulf %99, %100 : vector<1x8x1xf32>
    %cst_29 = arith.constant 2.000000e+00 : f32
    %102 = vector.broadcast %cst_29 : f32 to vector<1x8x1xf32>
    %103 = arith.subf %102, %101 : vector<1x8x1xf32>
    %104 = arith.mulf %100, %103 : vector<1x8x1xf32>
    %105 = vector.broadcast %104 : vector<1x8x1xf32> to vector<1x8x8xf32>
    %106 = arith.mulf %97, %105 : vector<1x8x8xf32>
    "tpu.trace_start"() <{level = 10 : i32, message = "bqk,bkd->bqd"}> : () -> ()
    %cst_30 = arith.constant dense<0.000000e+00> : vector<1x8x32xf32>
    %107 = tpu.matmul %106, %88, %cst_30 {dimension_numbers = #tpu.dot_dimension_numbers<[2], [1], [1], [2], [0, 0, 0, 1, 1, 2], [0], [0]>} : vector<1x8x8xf32>, vector<1x8x32xf32>, vector<1x8x32xf32> -> vector<1x8x32xf32>
    "tpu.trace_stop"() : () -> ()
    %108 = vector.shape_cast %107 : vector<1x8x32xf32> to vector<8x32xf32>
    %109 = tpu.concatenate %30, %56, %82, %108 in 1 : vector<8x32xf32>, vector<8x32xf32>, vector<8x32xf32>, vector<8x32xf32> -> vector<8x128xf32>
    %c0_31 = arith.constant 0 : index
    %c0_32 = arith.constant 0 : index
    %110 = vector.load %arg14[%c0_31, %c0_32] : memref<8x128xf32, #tpu.memory_space<vmem>>, vector<8x128xf32>
    tpu.vector_store %arg14[%c0_31, %c0_32], %109 {strides = array<i32>} : memref<8x128xf32, #tpu.memory_space<vmem>>, vector<8x128xf32>,
    %c0_33 = arith.constant 0 : index
    %c0_34 = arith.constant 0 : index
    %111 = vector.load %arg14[%c0_33, %c0_34] : memref<8x128xf32, #tpu.memory_space<vmem>>, vector<8x128xf32>
    %c0_35 = arith.constant 0 : index
    %c0_36 = arith.constant 0 : index
    %112 = vector.load %arg4[%c0_35, %c0_36] : memref<128x128xf32, #tpu.memory_space<vmem>>, vector<128x128xf32>
    %cst_37 = arith.constant dense<0.000000e+00> : vector<8x128xf32>
    %113 = tpu.matmul %111, %112, %cst_37 {dimension_numbers = #tpu.dot_dimension_numbers<[1], [0], [0], [1], [0, 0, 1, 1], [], []>} : vector<8x128xf32>, vector<128x128xf32>, vector<8x128xf32> -> vector<8x128xf32>
    %114 = arith.addf %113, %1 : vector<8x128xf32>
    %c0_38 = arith.constant 0 : index
    %c0_39 = arith.constant 0 : index
    %115 = vector.load %arg5[%c0_38, %c0_39] : memref<1x128xf32, #tpu.memory_space<vmem>>, vector<1x128xf32>
    %c0_40 = arith.constant 0 : index
    %c0_41 = arith.constant 0 : index
    %116 = vector.load %arg6[%c0_40, %c0_41] : memref<1x128xf32, #tpu.memory_space<vmem>>, vector<1x128xf32>
    %cst_42 = arith.constant dense<0.000000e+00> : vector<8xf32>
    %117 = vector.multi_reduction <add>, %114, %cst_42 [1] : vector<8x128xf32> to vector<8xf32>
    %118 = vector.shape_cast %117 : vector<8xf32> to vector<8x1xf32>
    %cst_43 = arith.constant 1.280000e+02 : f32
    %119 = vector.broadcast %cst_43 : f32 to vector<8x1xf32>
    %120 = arith.divf %118, %119 : vector<8x1xf32>
    %121 = arith.mulf %114, %114 : vector<8x128xf32>
    %cst_44 = arith.constant dense<0.000000e+00> : vector<8xf32>
    %122 = vector.multi_reduction <add>, %121, %cst_44 [1] : vector<8x128xf32> to vector<8xf32>
    %123 = vector.shape_cast %122 : vector<8xf32> to vector<8x1xf32>
    %cst_45 = arith.constant 1.280000e+02 : f32
    %124 = vector.broadcast %cst_45 : f32 to vector<8x1xf32>
    %125 = arith.divf %123, %124 : vector<8x1xf32>
    %126 = arith.mulf %120, %120 : vector<8x1xf32>
    %127 = arith.subf %125, %126 : vector<8x1xf32>
    %128 = vector.broadcast %120 : vector<8x1xf32> to vector<8x128xf32>
    %129 = arith.subf %114, %128 : vector<8x128xf32>
    %cst_46 = arith.constant 9.99999974E-6 : f32
    %130 = vector.broadcast %cst_46 : f32 to vector<8x1xf32>
    %131 = arith.addf %127, %130 : vector<8x1xf32>
    %132 = math.rsqrt %131 : vector<8x1xf32>
    %133 = vector.broadcast %132 : vector<8x1xf32> to vector<8x128xf32>
    %134 = arith.mulf %129, %133 : vector<8x128xf32>
    %135 = vector.broadcast %115 : vector<1x128xf32> to vector<8x128xf32>
    %136 = arith.mulf %134, %135 : vector<8x128xf32>
    %137 = vector.broadcast %116 : vector<1x128xf32> to vector<8x128xf32>
    %138 = arith.addf %136, %137 : vector<8x128xf32>
    %c0_47 = arith.constant 0 : index
    %c0_48 = arith.constant 0 : index
    %139 = vector.load %arg9[%c0_47, %c0_48] : memref<128x512xf32, #tpu.memory_space<vmem>>, vector<128x512xf32>
    %cst_49 = arith.constant dense<0.000000e+00> : vector<8x512xf32>
    %140 = tpu.matmul %138, %139, %cst_49 {dimension_numbers = #tpu.dot_dimension_numbers<[1], [0], [0], [1], [0, 0, 1, 1], [], []>} : vector<8x128xf32>, vector<128x512xf32>, vector<8x512xf32> -> vector<8x512xf32>
    %c0_50 = arith.constant 0 : index
    %c0_51 = arith.constant 0 : index
    %141 = vector.load %arg10[%c0_50, %c0_51] : memref<1x512xf32, #tpu.memory_space<vmem>>, vector<1x512xf32>
    %142 = vector.broadcast %141 : vector<1x512xf32> to vector<8x512xf32>
    %143 = arith.addf %140, %142 : vector<8x512xf32>
    %cst_52 = arith.constant 0.000000e+00 : f32
    %144 = vector.broadcast %cst_52 : f32 to vector<8x512xf32>
    %145 = arith.maximumf %143, %144 : vector<8x512xf32>
    %c0_53 = arith.constant 0 : index
    %c0_54 = arith.constant 0 : index
    %146 = vector.load %arg11[%c0_53, %c0_54] : memref<512x128xf32, #tpu.memory_space<vmem>>, vector<512x128xf32>
    %cst_55 = arith.constant dense<0.000000e+00> : vector<8x128xf32>
    %147 = tpu.matmul %145, %146, %cst_55 {dimension_numbers = #tpu.dot_dimension_numbers<[1], [0], [0], [1], [0, 0, 1, 1], [], []>} : vector<8x512xf32>, vector<512x128xf32>, vector<8x128xf32> -> vector<8x128xf32>
    %c0_56 = arith.constant 0 : index
    %c0_57 = arith.constant 0 : index
    %148 = vector.load %arg12[%c0_56, %c0_57] : memref<1x128xf32, #tpu.memory_space<vmem>>, vector<1x128xf32>
    %149 = vector.broadcast %148 : vector<1x128xf32> to vector<8x128xf32>
    %150 = arith.addf %147, %149 : vector<8x128xf32>
    %151 = arith.addf %138, %150 : vector<8x128xf32>
    %c0_58 = arith.constant 0 : index
    %c0_59 = arith.constant 0 : index
    %152 = vector.load %arg7[%c0_58, %c0_59] : memref<1x128xf32, #tpu.memory_space<vmem>>, vector<1x128xf32>
    %c0_60 = arith.constant 0 : index
    %c0_61 = arith.constant 0 : index
    %153 = vector.load %arg8[%c0_60, %c0_61] : memref<1x128xf32, #tpu.memory_space<vmem>>, vector<1x128xf32>
    %cst_62 = arith.constant dense<0.000000e+00> : vector<8xf32>
    %154 = vector.multi_reduction <add>, %151, %cst_62 [1] : vector<8x128xf32> to vector<8xf32>
    %155 = vector.shape_cast %154 : vector<8xf32> to vector<8x1xf32>
    %cst_63 = arith.constant 1.280000e+02 : f32
    %156 = vector.broadcast %cst_63 : f32 to vector<8x1xf32>
    %157 = arith.divf %155, %156 : vector<8x1xf32>
    %158 = arith.mulf %151, %151 : vector<8x128xf32>
    %cst_64 = arith.constant dense<0.000000e+00> : vector<8xf32>
    %159 = vector.multi_reduction <add>, %158, %cst_64 [1] : vector<8x128xf32> to vector<8xf32>
    %160 = vector.shape_cast %159 : vector<8xf32> to vector<8x1xf32>
    %cst_65 = arith.constant 1.280000e+02 : f32
    %161 = vector.broadcast %cst_65 : f32 to vector<8x1xf32>
    %162 = arith.divf %160, %161 : vector<8x1xf32>
    %163 = arith.mulf %157, %157 : vector<8x1xf32>
    %164 = arith.subf %162, %163 : vector<8x1xf32>
    %165 = vector.broadcast %157 : vector<8x1xf32> to vector<8x128xf32>
    %166 = arith.subf %151, %165 : vector<8x128xf32>
    %cst_66 = arith.constant 9.99999974E-6 : f32
    %167 = vector.broadcast %cst_66 : f32 to vector<8x1xf32>
    %168 = arith.addf %164, %167 : vector<8x1xf32>
    %169 = math.rsqrt %168 : vector<8x1xf32>
    %170 = vector.broadcast %169 : vector<8x1xf32> to vector<8x128xf32>
    %171 = arith.mulf %166, %170 : vector<8x128xf32>
    %172 = vector.broadcast %152 : vector<1x128xf32> to vector<8x128xf32>
    %173 = arith.mulf %171, %172 : vector<8x128xf32>
    %174 = vector.broadcast %153 : vector<1x128xf32> to vector<8x128xf32>
    %175 = arith.addf %173, %174 : vector<8x128xf32>
    %176 = vector.shape_cast %175 : vector<8x128xf32> to vector<1x8x128xf32>
    %c0_67 = arith.constant 0 : index
    %c0_68 = arith.constant 0 : index
    %c0_69 = arith.constant 0 : index
    %177 = vector.load %arg13[%c0_67, %c0_68, %c0_69] : memref<1x8x128xf32, #tpu.memory_space<vmem>>, vector<1x8x128xf32>
    tpu.vector_store %arg13[%c0_67, %c0_68, %c0_69], %176 {strides = array<i32>} : memref<1x8x128xf32, #tpu.memory_space<vmem>>, vector<1x8x128xf32>,
    return
  }
  func.func @transform_0(%arg0: i32) -> (i32, i32, i32) {
    %c0_i32 = arith.constant 0 : i32
    %c0_i32_0 = arith.constant 0 : i32
    %c0_i32_1 = arith.constant 0 : i32
    return %arg0, %c0_i32, %c0_i32_0 : i32, i32, i32
  }
  func.func @transform_1(%arg0: i32) -> (i32, i32, i32) {
    %c0_i32 = arith.constant 0 : i32
    %c0_i32_0 = arith.constant 0 : i32
    %c0_i32_1 = arith.constant 0 : i32
    return %arg0, %c0_i32, %c0_i32_0 : i32, i32, i32
  }
  func.func @transform_2(%arg0: i32) -> (i32, i32) {
    %c0_i32 = arith.constant 0 : i32
    %c0_i32_0 = arith.constant 0 : i32
    %c0_i32_1 = arith.constant 0 : i32
    return %c0_i32, %c0_i32_0 : i32, i32
  }
  func.func @transform_3(%arg0: i32) -> (i32, i32) {
    %c0_i32 = arith.constant 0 : i32
    %c0_i32_0 = arith.constant 0 : i32
    %c0_i32_1 = arith.constant 0 : i32
    return %c0_i32, %c0_i32_0 : i32, i32
  }
  func.func @transform_4(%arg0: i32) -> (i32, i32) {
    %c0_i32 = arith.constant 0 : i32
    %c0_i32_0 = arith.constant 0 : i32
    %c0_i32_1 = arith.constant 0 : i32
    return %c0_i32, %c0_i32_0 : i32, i32
  }
  func.func @transform_5(%arg0: i32) -> (i32, i32) {
    %c0_i32 = arith.constant 0 : i32
    %c0_i32_0 = arith.constant 0 : i32
    %c0_i32_1 = arith.constant 0 : i32
    return %c0_i32, %c0_i32_0 : i32, i32
  }
  func.func @transform_6(%arg0: i32) -> (i32, i32) {
    %c0_i32 = arith.constant 0 : i32
    %c0_i32_0 = arith.constant 0 : i32
    %c0_i32_1 = arith.constant 0 : i32
    return %c0_i32, %c0_i32_0 : i32, i32
  }
  func.func @transform_7(%arg0: i32) -> (i32, i32) {
    %c0_i32 = arith.constant 0 : i32
    %c0_i32_0 = arith.constant 0 : i32
    %c0_i32_1 = arith.constant 0 : i32
    return %c0_i32, %c0_i32_0 : i32, i32
  }
  func.func @transform_8(%arg0: i32) -> (i32, i32) {
    %c0_i32 = arith.constant 0 : i32
    %c0_i32_0 = arith.constant 0 : i32
    %c0_i32_1 = arith.constant 0 : i32
    return %c0_i32, %c0_i32_0 : i32, i32
  }
  func.func @transform_9(%arg0: i32) -> (i32, i32) {
    %c0_i32 = arith.constant 0 : i32
    %c0_i32_0 = arith.constant 0 : i32
    %c0_i32_1 = arith.constant 0 : i32
    return %c0_i32, %c0_i32_0 : i32, i32
  }
  func.func @transform_10(%arg0: i32) -> (i32, i32) {
    %c0_i32 = arith.constant 0 : i32
    %c0_i32_0 = arith.constant 0 : i32
    %c0_i32_1 = arith.constant 0 : i32
    return %c0_i32, %c0_i32_0 : i32, i32
  }
  func.func @transform_11(%arg0: i32) -> (i32, i32) {
    %c0_i32 = arith.constant 0 : i32
    %c0_i32_0 = arith.constant 0 : i32
    %c0_i32_1 = arith.constant 0 : i32
    return %c0_i32, %c0_i32_0 : i32, i32
  }
  func.func @transform_12(%arg0: i32) -> (i32, i32, i32) {
    %c0_i32 = arith.constant 0 : i32
    %c0_i32_0 = arith.constant 0 : i32
    %c0_i32_1 = arith.constant 0 : i32
    return %arg0, %c0_i32, %c0_i32_0 : i32, i32, i32
  }
}

module attributes {stable_mosaic.version = 11 : i64} {
  func.func @transformer_block_kernel(%arg0: i32, %arg1: memref<1x8x128xf32, #tpu.memory_space<vmem>>, %arg2: memref<1x8x8xf32, #tpu.memory_space<vmem>>, %arg3: memref<128x384xf32, #tpu.memory_space<vmem>>, %arg4: memref<128x128xf32, #tpu.memory_space<vmem>>, %arg5: memref<1x128xf32, #tpu.memory_space<vmem>>, %arg6: memref<1x128xf32, #tpu.memory_space<vmem>>, %arg7: memref<1x128xf32, #tpu.memory_space<vmem>>, %arg8: memref<1x128xf32, #tpu.memory_space<vmem>>, %arg9: memref<128x512xf32, #tpu.memory_space<vmem>>, %arg10: memref<1x512xf32, #tpu.memory_space<vmem>>, %arg11: memref<512x128xf32, #tpu.memory_space<vmem>>, %arg12: memref<1x128xf32, #tpu.memory_space<vmem>>, %arg13: memref<1x8x128xf32, #tpu.memory_space<vmem>>, %arg14: memref<8x128xf32, #tpu.memory_space<vmem>>) attributes {dimension_semantics = [#tpu.dimension_semantics<parallel>], iteration_bounds = array<i64: 2>, scalar_prefetch = 0 : i64, scratch_operands = 1 : i64, tpu.core_type = #tpu.core_type<tc>, window_params = [{transform_indices = @transform_0, window_bounds = array<i64: 1, 8, 128>}, {transform_indices = @transform_1, window_bounds = array<i64: 1, 8, 8>}, {pipeline_mode = #tpu.pipeline_mode<synchronous>, transform_indices = @transform_2, window_bounds = array<i64: 128, 384>}, {pipeline_mode = #tpu.pipeline_mode<synchronous>, transform_indices = @transform_3, window_bounds = array<i64: 128, 128>}, {pipeline_mode = #tpu.pipeline_mode<synchronous>, transform_indices = @transform_4, window_bounds = array<i64: 1, 128>}, {pipeline_mode = #tpu.pipeline_mode<synchronous>, transform_indices = @transform_5, window_bounds = array<i64: 1, 128>}, {pipeline_mode = #tpu.pipeline_mode<synchronous>, transform_indices = @transform_6, window_bounds = array<i64: 1, 128>}, {pipeline_mode = #tpu.pipeline_mode<synchronous>, transform_indices = @transform_7, window_bounds = array<i64: 1, 128>}, {pipeline_mode = #tpu.pipeline_mode<synchronous>, transform_indices = @transform_8, window_bounds = array<i64: 128, 512>}, {pipeline_mode = #tpu.pipeline_mode<synchronous>, transform_indices = @transform_9, window_bounds = array<i64: 1, 512>}, {pipeline_mode = #tpu.pipeline_mode<synchronous>, transform_indices = @transform_10, window_bounds = array<i64: 512, 128>}, {pipeline_mode = #tpu.pipeline_mode<synchronous>, transform_indices = @transform_11, window_bounds = array<i64: 1, 128>}, {transform_indices = @transform_12, window_bounds = array<i64: 1, 8, 128>}]} {
    %c0 = arith.constant 0 : index
    %c0_0 = arith.constant 0 : index
    %c0_1 = arith.constant 0 : index
    %0 = vector.load %arg1[%c0, %c0_0, %c0_1] : memref<1x8x128xf32, #tpu.memory_space<vmem>>, vector<1x8x128xf32>
    %1 = vector.shape_cast %0 : vector<1x8x128xf32> to vector<8x128xf32>
    %c0_2 = arith.constant 0 : index
    %c0_3 = arith.constant 0 : index
    %2 = vector.load %arg3[%c0_2, %c0_3] : memref<128x384xf32, #tpu.memory_space<vmem>>, vector<128x384xf32>
    %cst = arith.constant dense<0.000000e+00> : vector<8x384xf32>
    %3 = tpu.matmul %1, %2, %cst {dimension_numbers = #tpu.dot_dimension_numbers<[1], [0], [0], [1], [0, 0, 1, 1], [], []>} : vector<8x128xf32>, vector<128x384xf32>, vector<8x384xf32> -> vector<8x384xf32>
    %c0_4 = arith.constant 0 : index
    %c0_5 = arith.constant 0 : index
    %c0_6 = arith.constant 0 : index
    %4 = vector.load %arg2[%c0_4, %c0_5, %c0_6] : memref<1x8x8xf32, #tpu.memory_space<vmem>>, vector<1x8x8xf32>
    %5 = vector.extract_strided_slice %3 {offsets = [0, 0], sizes = [8, 32], strides = [1, 1]} : vector<8x384xf32> to vector<8x32xf32>
    %6 = vector.shape_cast %5 : vector<8x32xf32> to vector<1x8x32xf32>
    %7 = vector.extract_strided_slice %3 {offsets = [0, 128], sizes = [8, 32], strides = [1, 1]} : vector<8x384xf32> to vector<8x32xf32>
    %8 = vector.shape_cast %7 : vector<8x32xf32> to vector<1x8x32xf32>
    %9 = vector.extract_strided_slice %3 {offsets = [0, 256], sizes = [8, 32], strides = [1, 1]} : vector<8x384xf32> to vector<8x32xf32>
    %10 = vector.shape_cast %9 : vector<8x32xf32> to vector<1x8x32xf32>
    "tpu.trace_start"() <{level = 10 : i32, message = "bqd,bkd->bqk"}> : () -> ()
    %cst_7 = arith.constant dense<0.000000e+00> : vector<1x8x8xf32>
    %11 = tpu.matmul %6, %8, %cst_7 {dimension_numbers = #tpu.dot_dimension_numbers<[2], [2], [1], [1], [0, 0, 0, 1, 1, 1], [0], [0]>} : vector<1x8x32xf32>, vector<1x8x32xf32>, vector<1x8x8xf32> -> vector<1x8x8xf32>
    "tpu.trace_stop"() : () -> ()
    %cst_8 = arith.constant 0.0883883461 : f32
    %12 = vector.broadcast %cst_8 : f32 to vector<1x8x8xf32>
    %13 = arith.mulf %11, %12 : vector<1x8x8xf32>
    %14 = arith.addf %13, %4 : vector<1x8x8xf32>
    %cst_9 = arith.constant dense<0xFF800000> : vector<1x8xf32>
    %15 = vector.multi_reduction <maximumf>, %14, %cst_9 [2] : vector<1x8x8xf32> to vector<1x8xf32>
    %16 = vector.shape_cast %15 : vector<1x8xf32> to vector<1x8x1xf32>
    %17 = vector.broadcast %16 : vector<1x8x1xf32> to vector<1x8x8xf32>
    %18 = arith.subf %14, %17 : vector<1x8x8xf32>
    %19 = math.exp %18 : vector<1x8x8xf32>
    %cst_10 = arith.constant dense<0.000000e+00> : vector<1x8xf32>
    %20 = vector.multi_reduction <add>, %19, %cst_10 [2] : vector<1x8x8xf32> to vector<1x8xf32>
    %21 = vector.shape_cast %20 : vector<1x8xf32> to vector<1x8x1xf32>
    %22 = tpu.reciprocal %21 {approx = true} : vector<1x8x1xf32> -> vector<1x8x1xf32>
    %23 = arith.mulf %21, %22 : vector<1x8x1xf32>
    %cst_11 = arith.constant 2.000000e+00 : f32
    %24 = vector.broadcast %cst_11 : f32 to vector<1x8x1xf32>
    %25 = arith.subf %24, %23 : vector<1x8x1xf32>
    %26 = arith.mulf %22, %25 : vector<1x8x1xf32>
    %27 = vector.broadcast %26 : vector<1x8x1xf32> to vector<1x8x8xf32>
    %28 = arith.mulf %19, %27 : vector<1x8x8xf32>
    "tpu.trace_start"() <{level = 10 : i32, message = "bqk,bkd->bqd"}> : () -> ()
    %cst_12 = arith.constant dense<0.000000e+00> : vector<1x8x32xf32>
    %29 = tpu.matmul %28, %10, %cst_12 {dimension_numbers = #tpu.dot_dimension_numbers<[2], [1], [1], [2], [0, 0, 0, 1, 1, 2], [0], [0]>} : vector<1x8x8xf32>, vector<1x8x32xf32>, vector<1x8x32xf32> -> vector<1x8x32xf32>
    "tpu.trace_stop"() : () -> ()
    %30 = vector.shape_cast %29 : vector<1x8x32xf32> to vector<8x32xf32>
    %31 = vector.extract_strided_slice %3 {offsets = [0, 32], sizes = [8, 32], strides = [1, 1]} : vector<8x384xf32> to vector<8x32xf32>
    %32 = vector.shape_cast %31 : vector<8x32xf32> to vector<1x8x32xf32>
    %33 = vector.extract_strided_slice %3 {offsets = [0, 160], sizes = [8, 32], strides = [1, 1]} : vector<8x384xf32> to vector<8x32xf32>
    %34 = vector.shape_cast %33 : vector<8x32xf32> to vector<1x8x32xf32>
    %35 = vector.extract_strided_slice %3 {offsets = [0, 288], sizes = [8, 32], strides = [1, 1]} : vector<8x384xf32> to vector<8x32xf32>
    %36 = vector.shape_cast %35 : vector<8x32xf32> to vector<1x8x32xf32>
    "tpu.trace_start"() <{level = 10 : i32, message = "bqd,bkd->bqk"}> : () -> ()
    %cst_13 = arith.constant dense<0.000000e+00> : vector<1x8x8xf32>
    %37 = tpu.matmul %32, %34, %cst_13 {dimension_numbers = #tpu.dot_dimension_numbers<[2], [2], [1], [1], [0, 0, 0, 1, 1, 1], [0], [0]>} : vector<1x8x32xf32>, vector<1x8x32xf32>, vector<1x8x8xf32> -> vector<1x8x8xf32>
    "tpu.trace_stop"() : () -> ()
    %cst_14 = arith.constant 0.0883883461 : f32
    %38 = vector.broadcast %cst_14 : f32 to vector<1x8x8xf32>
    %39 = arith.mulf %37, %38 : vector<1x8x8xf32>
    %40 = arith.addf %39, %4 : vector<1x8x8xf32>
    %cst_15 = arith.constant dense<0xFF800000> : vector<1x8xf32>
    %41 = vector.multi_reduction <maximumf>, %40, %cst_15 [2] : vector<1x8x8xf32> to vector<1x8xf32>
    %42 = vector.shape_cast %41 : vector<1x8xf32> to vector<1x8x1xf32>
    %43 = vector.broadcast %42 : vector<1x8x1xf32> to vector<1x8x8xf32>
    %44 = arith.subf %40, %43 : vector<1x8x8xf32>
    %45 = math.exp %44 : vector<1x8x8xf32>
    %cst_16 = arith.constant dense<0.000000e+00> : vector<1x8xf32>
    %46 = vector.multi_reduction <add>, %45, %cst_16 [2] : vector<1x8x8xf32> to vector<1x8xf32>
    %47 = vector.shape_cast %46 : vector<1x8xf32> to vector<1x8x1xf32>
    %48 = tpu.reciprocal %47 {approx = true} : vector<1x8x1xf32> -> vector<1x8x1xf32>
    %49 = arith.mulf %47, %48 : vector<1x8x1xf32>
    %cst_17 = arith.constant 2.000000e+00 : f32
    %50 = vector.broadcast %cst_17 : f32 to vector<1x8x1xf32>
    %51 = arith.subf %50, %49 : vector<1x8x1xf32>
    %52 = arith.mulf %48, %51 : vector<1x8x1xf32>
    %53 = vector.broadcast %52 : vector<1x8x1xf32> to vector<1x8x8xf32>
    %54 = arith.mulf %45, %53 : vector<1x8x8xf32>
    "tpu.trace_start"() <{level = 10 : i32, message = "bqk,bkd->bqd"}> : () -> ()
    %cst_18 = arith.constant dense<0.000000e+00> : vector<1x8x32xf32>
    %55 = tpu.matmul %54, %36, %cst_18 {dimension_numbers = #tpu.dot_dimension_numbers<[2], [1], [1], [2], [0, 0, 0, 1, 1, 2], [0], [0]>} : vector<1x8x8xf32>, vector<1x8x32xf32>, vector<1x8x32xf32> -> vector<1x8x32xf32>
    "tpu.trace_stop"() : () -> ()
    %56 = vector.shape_cast %55 : vector<1x8x32xf32> to vector<8x32xf32>
    %57 = vector.extract_strided_slice %3 {offsets = [0, 64], sizes = [8, 32], strides = [1, 1]} : vector<8x384xf32> to vector<8x32xf32>
    %58 = vector.shape_cast %57 : vector<8x32xf32> to vector<1x8x32xf32>
    %59 = vector.extract_strided_slice %3 {offsets = [0, 192], sizes = [8, 32], strides = [1, 1]} : vector<8x384xf32> to vector<8x32xf32>
    %60 = vector.shape_cast %59 : vector<8x32xf32> to vector<1x8x32xf32>
    %61 = vector.extract_strided_slice %3 {offsets = [0, 320], sizes = [8, 32], strides = [1, 1]} : vector<8x384xf32> to vector<8x32xf32>
    %62 = vector.shape_cast %61 : vector<8x32xf32> to vector<1x8x32xf32>
    "tpu.trace_start"() <{level = 10 : i32, message = "bqd,bkd->bqk"}> : () -> ()
    %cst_19 = arith.constant dense<0.000000e+00> : vector<1x8x8xf32>
    %63 = tpu.matmul %58, %60, %cst_19 {dimension_numbers = #tpu.dot_dimension_numbers<[2], [2], [1], [1], [0, 0, 0, 1, 1, 1], [0], [0]>} : vector<1x8x32xf32>, vector<1x8x32xf32>, vector<1x8x8xf32> -> vector<1x8x8xf32>
    "tpu.trace_stop"() : () -> ()
    %cst_20 = arith.constant 0.0883883461 : f32
    %64 = vector.broadcast %cst_20 : f32 to vector<1x8x8xf32>
    %65 = arith.mulf %63, %64 : vector<1x8x8xf32>
    %66 = arith.addf %65, %4 : vector<1x8x8xf32>
    %cst_21 = arith.constant dense<0xFF800000> : vector<1x8xf32>
    %67 = vector.multi_reduction <maximumf>, %66, %cst_21 [2] : vector<1x8x8xf32> to vector<1x8xf32>
    %68 = vector.shape_cast %67 : vector<1x8xf32> to vector<1x8x1xf32>
    %69 = vector.broadcast %68 : vector<1x8x1xf32> to vector<1x8x8xf32>
    %70 = arith.subf %66, %69 : vector<1x8x8xf32>
    %71 = math.exp %70 : vector<1x8x8xf32>
    %cst_22 = arith.constant dense<0.000000e+00> : vector<1x8xf32>
    %72 = vector.multi_reduction <add>, %71, %cst_22 [2] : vector<1x8x8xf32> to vector<1x8xf32>
    %73 = vector.shape_cast %72 : vector<1x8xf32> to vector<1x8x1xf32>
    %74 = tpu.reciprocal %73 {approx = true} : vector<1x8x1xf32> -> vector<1x8x1xf32>
    %75 = arith.mulf %73, %74 : vector<1x8x1xf32>
    %cst_23 = arith.constant 2.000000e+00 : f32
    %76 = vector.broadcast %cst_23 : f32 to vector<1x8x1xf32>
    %77 = arith.subf %76, %75 : vector<1x8x1xf32>
    %78 = arith.mulf %74, %77 : vector<1x8x1xf32>
    %79 = vector.broadcast %78 : vector<1x8x1xf32> to vector<1x8x8xf32>
    %80 = arith.mulf %71, %79 : vector<1x8x8xf32>
    "tpu.trace_start"() <{level = 10 : i32, message = "bqk,bkd->bqd"}> : () -> ()
    %cst_24 = arith.constant dense<0.000000e+00> : vector<1x8x32xf32>
    %81 = tpu.matmul %80, %62, %cst_24 {dimension_numbers = #tpu.dot_dimension_numbers<[2], [1], [1], [2], [0, 0, 0, 1, 1, 2], [0], [0]>} : vector<1x8x8xf32>, vector<1x8x32xf32>, vector<1x8x32xf32> -> vector<1x8x32xf32>
    "tpu.trace_stop"() : () -> ()
    %82 = vector.shape_cast %81 : vector<1x8x32xf32> to vector<8x32xf32>
    %83 = vector.extract_strided_slice %3 {offsets = [0, 96], sizes = [8, 32], strides = [1, 1]} : vector<8x384xf32> to vector<8x32xf32>
    %84 = vector.shape_cast %83 : vector<8x32xf32> to vector<1x8x32xf32>
    %85 = vector.extract_strided_slice %3 {offsets = [0, 224], sizes = [8, 32], strides = [1, 1]} : vector<8x384xf32> to vector<8x32xf32>
    %86 = vector.shape_cast %85 : vector<8x32xf32> to vector<1x8x32xf32>
    %87 = vector.extract_strided_slice %3 {offsets = [0, 352], sizes = [8, 32], strides = [1, 1]} : vector<8x384xf32> to vector<8x32xf32>
    %88 = vector.shape_cast %87 : vector<8x32xf32> to vector<1x8x32xf32>
    "tpu.trace_start"() <{level = 10 : i32, message = "bqd,bkd->bqk"}> : () -> ()
    %cst_25 = arith.constant dense<0.000000e+00> : vector<1x8x8xf32>
    %89 = tpu.matmul %84, %86, %cst_25 {dimension_numbers = #tpu.dot_dimension_numbers<[2], [2], [1], [1], [0, 0, 0, 1, 1, 1], [0], [0]>} : vector<1x8x32xf32>, vector<1x8x32xf32>, vector<1x8x8xf32> -> vector<1x8x8xf32>
    "tpu.trace_stop"() : () -> ()
    %cst_26 = arith.constant 0.0883883461 : f32
    %90 = vector.broadcast %cst_26 : f32 to vector<1x8x8xf32>
    %91 = arith.mulf %89, %90 : vector<1x8x8xf32>
    %92 = arith.addf %91, %4 : vector<1x8x8xf32>
    %cst_27 = arith.constant dense<0xFF800000> : vector<1x8xf32>
    %93 = vector.multi_reduction <maximumf>, %92, %cst_27 [2] : vector<1x8x8xf32> to vector<1x8xf32>
    %94 = vector.shape_cast %93 : vector<1x8xf32> to vector<1x8x1xf32>
    %95 = vector.broadcast %94 : vector<1x8x1xf32> to vector<1x8x8xf32>
    %96 = arith.subf %92, %95 : vector<1x8x8xf32>
    %97 = math.exp %96 : vector<1x8x8xf32>
    %cst_28 = arith.constant dense<0.000000e+00> : vector<1x8xf32>
    %98 = vector.multi_reduction <add>, %97, %cst_28 [2] : vector<1x8x8xf32> to vector<1x8xf32>
    %99 = vector.shape_cast %98 : vector<1x8xf32> to vector<1x8x1xf32>
    %100 = tpu.reciprocal %99 {approx = true} : vector<1x8x1xf32> -> vector<1x8x1xf32>
    %101 = arith.mulf %99, %100 : vector<1x8x1xf32>
    %cst_29 = arith.constant 2.000000e+00 : f32
    %102 = vector.broadcast %cst_29 : f32 to vector<1x8x1xf32>
    %103 = arith.subf %102, %101 : vector<1x8x1xf32>
    %104 = arith.mulf %100, %103 : vector<1x8x1xf32>
    %105 = vector.broadcast %104 : vector<1x8x1xf32> to vector<1x8x8xf32>
    %106 = arith.mulf %97, %105 : vector<1x8x8xf32>
    "tpu.trace_start"() <{level = 10 : i32, message = "bqk,bkd->bqd"}> : () -> ()
    %cst_30 = arith.constant dense<0.000000e+00> : vector<1x8x32xf32>
    %107 = tpu.matmul %106, %88, %cst_30 {dimension_numbers = #tpu.dot_dimension_numbers<[2], [1], [1], [2], [0, 0, 0, 1, 1, 2], [0], [0]>} : vector<1x8x8xf32>, vector<1x8x32xf32>, vector<1x8x32xf32> -> vector<1x8x32xf32>
    "tpu.trace_stop"() : () -> ()
    %108 = vector.shape_cast %107 : vector<1x8x32xf32> to vector<8x32xf32>
    %109 = tpu.concatenate %30, %56, %82, %108 in 1 : vector<8x32xf32>, vector<8x32xf32>, vector<8x32xf32>, vector<8x32xf32> -> vector<8x128xf32>
    %c0_31 = arith.constant 0 : index
    %c0_32 = arith.constant 0 : index
    %110 = vector.load %arg14[%c0_31, %c0_32] : memref<8x128xf32, #tpu.memory_space<vmem>>, vector<8x128xf32>
    tpu.vector_store %arg14[%c0_31, %c0_32], %109 {strides = array<i32>} : memref<8x128xf32, #tpu.memory_space<vmem>>, vector<8x128xf32>,
    %c0_33 = arith.constant 0 : index
    %c0_34 = arith.constant 0 : index
    %111 = vector.load %arg14[%c0_33, %c0_34] : memref<8x128xf32, #tpu.memory_space<vmem>>, vector<8x128xf32>
    %c0_35 = arith.constant 0 : index
    %c0_36 = arith.constant 0 : index
    %112 = vector.load %arg4[%c0_35, %c0_36] : memref<128x128xf32, #tpu.memory_space<vmem>>, vector<128x128xf32>
    %cst_37 = arith.constant dense<0.000000e+00> : vector<8x128xf32>
    %113 = tpu.matmul %111, %112, %cst_37 {dimension_numbers = #tpu.dot_dimension_numbers<[1], [0], [0], [1], [0, 0, 1, 1], [], []>} : vector<8x128xf32>, vector<128x128xf32>, vector<8x128xf32> -> vector<8x128xf32>
    %114 = arith.addf %113, %1 : vector<8x128xf32>
    %c0_38 = arith.constant 0 : index
    %c0_39 = arith.constant 0 : index
    %115 = vector.load %arg5[%c0_38, %c0_39] : memref<1x128xf32, #tpu.memory_space<vmem>>, vector<1x128xf32>
    %c0_40 = arith.constant 0 : index
    %c0_41 = arith.constant 0 : index
    %116 = vector.load %arg6[%c0_40, %c0_41] : memref<1x128xf32, #tpu.memory_space<vmem>>, vector<1x128xf32>
    %cst_42 = arith.constant dense<0.000000e+00> : vector<8xf32>
    %117 = vector.multi_reduction <add>, %114, %cst_42 [1] : vector<8x128xf32> to vector<8xf32>
    %118 = vector.shape_cast %117 : vector<8xf32> to vector<8x1xf32>
    %cst_43 = arith.constant 1.280000e+02 : f32
    %119 = vector.broadcast %cst_43 : f32 to vector<8x1xf32>
    %120 = arith.divf %118, %119 : vector<8x1xf32>
    %121 = arith.mulf %114, %114 : vector<8x128xf32>
    %cst_44 = arith.constant dense<0.000000e+00> : vector<8xf32>
    %122 = vector.multi_reduction <add>, %121, %cst_44 [1] : vector<8x128xf32> to vector<8xf32>
    %123 = vector.shape_cast %122 : vector<8xf32> to vector<8x1xf32>
    %cst_45 = arith.constant 1.280000e+02 : f32
    %124 = vector.broadcast %cst_45 : f32 to vector<8x1xf32>
    %125 = arith.divf %123, %124 : vector<8x1xf32>
    %126 = arith.mulf %120, %120 : vector<8x1xf32>
    %127 = arith.subf %125, %126 : vector<8x1xf32>
    %128 = vector.broadcast %120 : vector<8x1xf32> to vector<8x128xf32>
    %129 = arith.subf %114, %128 : vector<8x128xf32>
    %cst_46 = arith.constant 9.99999974E-6 : f32
    %130 = vector.broadcast %cst_46 : f32 to vector<8x1xf32>
    %131 = arith.addf %127, %130 : vector<8x1xf32>
    %132 = math.rsqrt %131 : vector<8x1xf32>
    %133 = vector.broadcast %132 : vector<8x1xf32> to vector<8x128xf32>
    %134 = arith.mulf %129, %133 : vector<8x128xf32>
    %135 = vector.broadcast %115 : vector<1x128xf32> to vector<8x128xf32>
    %136 = arith.mulf %134, %135 : vector<8x128xf32>
    %137 = vector.broadcast %116 : vector<1x128xf32> to vector<8x128xf32>
    %138 = arith.addf %136, %137 : vector<8x128xf32>
    %c0_47 = arith.constant 0 : index
    %c0_48 = arith.constant 0 : index
    %139 = vector.load %arg9[%c0_47, %c0_48] : memref<128x512xf32, #tpu.memory_space<vmem>>, vector<128x512xf32>
    %cst_49 = arith.constant dense<0.000000e+00> : vector<8x512xf32>
    %140 = tpu.matmul %138, %139, %cst_49 {dimension_numbers = #tpu.dot_dimension_numbers<[1], [0], [0], [1], [0, 0, 1, 1], [], []>} : vector<8x128xf32>, vector<128x512xf32>, vector<8x512xf32> -> vector<8x512xf32>
    %c0_50 = arith.constant 0 : index
    %c0_51 = arith.constant 0 : index
    %141 = vector.load %arg10[%c0_50, %c0_51] : memref<1x512xf32, #tpu.memory_space<vmem>>, vector<1x512xf32>
    %142 = vector.broadcast %141 : vector<1x512xf32> to vector<8x512xf32>
    %143 = arith.addf %140, %142 : vector<8x512xf32>
    %cst_52 = arith.constant 0.000000e+00 : f32
    %144 = vector.broadcast %cst_52 : f32 to vector<8x512xf32>
    %145 = arith.maximumf %143, %144 : vector<8x512xf32>
    %c0_53 = arith.constant 0 : index
    %c0_54 = arith.constant 0 : index
    %146 = vector.load %arg11[%c0_53, %c0_54] : memref<512x128xf32, #tpu.memory_space<vmem>>, vector<512x128xf32>
    %cst_55 = arith.constant dense<0.000000e+00> : vector<8x128xf32>
    %147 = tpu.matmul %145, %146, %cst_55 {dimension_numbers = #tpu.dot_dimension_numbers<[1], [0], [0], [1], [0, 0, 1, 1], [], []>} : vector<8x512xf32>, vector<512x128xf32>, vector<8x128xf32> -> vector<8x128xf32>
    %c0_56 = arith.constant 0 : index
    %c0_57 = arith.constant 0 : index
    %148 = vector.load %arg12[%c0_56, %c0_57] : memref<1x128xf32, #tpu.memory_space<vmem>>, vector<1x128xf32>
    %149 = vector.broadcast %148 : vector<1x128xf32> to vector<8x128xf32>
    %150 = arith.addf %147, %149 : vector<8x128xf32>
    %151 = arith.addf %138, %150 : vector<8x128xf32>
    %c0_58 = arith.constant 0 : index
    %c0_59 = arith.constant 0 : index
    %152 = vector.load %arg7[%c0_58, %c0_59] : memref<1x128xf32, #tpu.memory_space<vmem>>, vector<1x128xf32>
    %c0_60 = arith.constant 0 : index
    %c0_61 = arith.constant 0 : index
    %153 = vector.load %arg8[%c0_60, %c0_61] : memref<1x128xf32, #tpu.memory_space<vmem>>, vector<1x128xf32>
    %cst_62 = arith.constant dense<0.000000e+00> : vector<8xf32>
    %154 = vector.multi_reduction <add>, %151, %cst_62 [1] : vector<8x128xf32> to vector<8xf32>
    %155 = vector.shape_cast %154 : vector<8xf32> to vector<8x1xf32>
    %cst_63 = arith.constant 1.280000e+02 : f32
    %156 = vector.broadcast %cst_63 : f32 to vector<8x1xf32>
    %157 = arith.divf %155, %156 : vector<8x1xf32>
    %158 = arith.mulf %151, %151 : vector<8x128xf32>
    %cst_64 = arith.constant dense<0.000000e+00> : vector<8xf32>
    %159 = vector.multi_reduction <add>, %158, %cst_64 [1] : vector<8x128xf32> to vector<8xf32>
    %160 = vector.shape_cast %159 : vector<8xf32> to vector<8x1xf32>
    %cst_65 = arith.constant 1.280000e+02 : f32
    %161 = vector.broadcast %cst_65 : f32 to vector<8x1xf32>
    %162 = arith.divf %160, %161 : vector<8x1xf32>
    %163 = arith.mulf %157, %157 : vector<8x1xf32>
    %164 = arith.subf %162, %163 : vector<8x1xf32>
    %165 = vector.broadcast %157 : vector<8x1xf32> to vector<8x128xf32>
    %166 = arith.subf %151, %165 : vector<8x128xf32>
    %cst_66 = arith.constant 9.99999974E-6 : f32
    %167 = vector.broadcast %cst_66 : f32 to vector<8x1xf32>
    %168 = arith.addf %164, %167 : vector<8x1xf32>
    %169 = math.rsqrt %168 : vector<8x1xf32>
    %170 = vector.broadcast %169 : vector<8x1xf32> to vector<8x128xf32>
    %171 = arith.mulf %166, %170 : vector<8x128xf32>
    %172 = vector.broadcast %152 : vector<1x128xf32> to vector<8x128xf32>
    %173 = arith.mulf %171, %172 : vector<8x128xf32>
    %174 = vector.broadcast %153 : vector<1x128xf32> to vector<8x128xf32>
    %175 = arith.addf %173, %174 : vector<8x128xf32>
    %176 = vector.shape_cast %175 : vector<8x128xf32> to vector<1x8x128xf32>
    %c0_67 = arith.constant 0 : index
    %c0_68 = arith.constant 0 : index
    %c0_69 = arith.constant 0 : index
    %177 = vector.load %arg13[%c0_67, %c0_68, %c0_69] : memref<1x8x128xf32, #tpu.memory_space<vmem>>, vector<1x8x128xf32>
    tpu.vector_store %arg13[%c0_67, %c0_68, %c0_69], %176 {strides = array<i32>} : memref<1x8x128xf32, #tpu.memory_space<vmem>>, vector<1x8x128xf32>,
    return
  }
  func.func @transform_0(%arg0: i32) -> (i32, i32, i32) {
    %c0_i32 = arith.constant 0 : i32
    %c0_i32_0 = arith.constant 0 : i32
    %c0_i32_1 = arith.constant 0 : i32
    return %arg0, %c0_i32, %c0_i32_0 : i32, i32, i32
  }
  func.func @transform_1(%arg0: i32) -> (i32, i32, i32) {
    %c0_i32 = arith.constant 0 : i32
    %c0_i32_0 = arith.constant 0 : i32
    %c0_i32_1 = arith.constant 0 : i32
    return %arg0, %c0_i32, %c0_i32_0 : i32, i32, i32
  }
  func.func @transform_2(%arg0: i32) -> (i32, i32) {
    %c0_i32 = arith.constant 0 : i32
    %c0_i32_0 = arith.constant 0 : i32
    %c0_i32_1 = arith.constant 0 : i32
    return %c0_i32, %c0_i32_0 : i32, i32
  }
  func.func @transform_3(%arg0: i32) -> (i32, i32) {
    %c0_i32 = arith.constant 0 : i32
    %c0_i32_0 = arith.constant 0 : i32
    %c0_i32_1 = arith.constant 0 : i32
    return %c0_i32, %c0_i32_0 : i32, i32
  }
  func.func @transform_4(%arg0: i32) -> (i32, i32) {
    %c0_i32 = arith.constant 0 : i32
    %c0_i32_0 = arith.constant 0 : i32
    %c0_i32_1 = arith.constant 0 : i32
    return %c0_i32, %c0_i32_0 : i32, i32
  }
  func.func @transform_5(%arg0: i32) -> (i32, i32) {
    %c0_i32 = arith.constant 0 : i32
    %c0_i32_0 = arith.constant 0 : i32
    %c0_i32_1 = arith.constant 0 : i32
    return %c0_i32, %c0_i32_0 : i32, i32
  }
  func.func @transform_6(%arg0: i32) -> (i32, i32) {
    %c0_i32 = arith.constant 0 : i32
    %c0_i32_0 = arith.constant 0 : i32
    %c0_i32_1 = arith.constant 0 : i32
    return %c0_i32, %c0_i32_0 : i32, i32
  }
  func.func @transform_7(%arg0: i32) -> (i32, i32) {
    %c0_i32 = arith.constant 0 : i32
    %c0_i32_0 = arith.constant 0 : i32
    %c0_i32_1 = arith.constant 0 : i32
    return %c0_i32, %c0_i32_0 : i32, i32
  }
  func.func @transform_8(%arg0: i32) -> (i32, i32) {
    %c0_i32 = arith.constant 0 : i32
    %c0_i32_0 = arith.constant 0 : i32
    %c0_i32_1 = arith.constant 0 : i32
    return %c0_i32, %c0_i32_0 : i32, i32
  }
  func.func @transform_9(%arg0: i32) -> (i32, i32) {
    %c0_i32 = arith.constant 0 : i32
    %c0_i32_0 = arith.constant 0 : i32
    %c0_i32_1 = arith.constant 0 : i32
    return %c0_i32, %c0_i32_0 : i32, i32
  }
  func.func @transform_10(%arg0: i32) -> (i32, i32) {
    %c0_i32 = arith.constant 0 : i32
    %c0_i32_0 = arith.constant 0 : i32
    %c0_i32_1 = arith.constant 0 : i32
    return %c0_i32, %c0_i32_0 : i32, i32
  }
  func.func @transform_11(%arg0: i32) -> (i32, i32) {
    %c0_i32 = arith.constant 0 : i32
    %c0_i32_0 = arith.constant 0 : i32
    %c0_i32_1 = arith.constant 0 : i32
    return %c0_i32, %c0_i32_0 : i32, i32
  }
  func.func @transform_12(%arg0: i32) -> (i32, i32, i32) {
    %c0_i32 = arith.constant 0 : i32
    %c0_i32_0 = arith.constant 0 : i32
    %c0_i32_1 = arith.constant 0 : i32
    return %arg0, %c0_i32, %c0_i32_0 : i32, i32, i32
  }
}

</mosaic_0001>

<llo_original>
// kernel: tpu_custom_call.1
$region0: #{tpu_custom_call.1}
  #allocation0 [shape = 'u32[]', space=smem, size = 0x4, offset = 0x4, fixed_abs, tag = 'smem constant byte address 0x4 - core index']
  #allocation1 [shape = 'u32[144,128]{1,0:T(1,128)}', space=vmem, size = 0x12000, scoped, tag = 'internal scratch']
  #allocation2 [shape = 'f32[8,128]{1,0:T(8,128)}', space=vmem, size = 0x1000, scoped, tag = 'scratch operand']
  %s0 = inlined_call_operand.hbm [shape: f32[2,8,128], index: 0, kind: input, shape index: {}]
  %s1 = inlined_call_operand.hbm [shape: f32[2,8,8], index: 1, kind: input, shape index: {}]
  %s2 = inlined_call_operand.hbm [shape: f32[128,384], index: 2, kind: input, shape index: {}]
  %s3 = inlined_call_operand.hbm [shape: f32[128,128], index: 3, kind: input, shape index: {}]
  %s4 = inlined_call_operand.vmem [shape: f32[1,128], index: 4, kind: input, shape index: {}]
  %s5 = inlined_call_operand.vmem [shape: f32[1,128], index: 5, kind: input, shape index: {}]
  %s6 = inlined_call_operand.vmem [shape: f32[1,128], index: 6, kind: input, shape index: {}]
  %s7 = inlined_call_operand.vmem [shape: f32[1,128], index: 7, kind: input, shape index: {}]
  %s8 = inlined_call_operand.hbm [shape: f32[128,512], index: 8, kind: input, shape index: {}]
  %s9 = inlined_call_operand.vmem [shape: f32[1,512], index: 9, kind: input, shape index: {}]
  %s10 = inlined_call_operand.hbm [shape: f32[512,128], index: 10, kind: input, shape index: {}]
  %s11 = inlined_call_operand.vmem [shape: f32[1,128], index: 11, kind: input, shape index: {}]
  %s12 = inlined_call_operand.hbm [shape: f32[2,8,128], index: 12, kind: output, shape index: {}]
  %s13 = sld [smem:[#allocation0]]
  $region105: #{tpu_custom_call.1} parent=0
    _
  %s15 = ssub.s32 1, %s13
  %s16 = scalar_select 0, %s15, %s13
  $region1: #{tpu_custom_call.1} parent=0
    #allocation3 [shape = 'u8[8192]{0}', space=vmem, size = 0x2000, scoped, tag = 'input window, operand 0']
    #allocation4 [shape = 's32[2]{0}', space=sflag, size = 0x8, scoped, tag = 'scoped memory for tpu_custom_call.1']
    #allocation5 [shape = 's32[2]{0}', space=sflag, size = 0x8, scoped, tag = 'scoped memory for tpu_custom_call.1']
    #allocation6 [shape = 'u8[8192]{0}', space=vmem, size = 0x2000, scoped, tag = 'input window, operand 1']
    #allocation7 [shape = 's32[2]{0}', space=sflag, size = 0x8, scoped, tag = 'scoped memory for tpu_custom_call.1']
    #allocation8 [shape = 'u8[196608]{0}', space=vmem, size = 0x30000, scoped, tag = 'input window, operand 2, single buffered']
    #allocation9 [shape = 'u8[65536]{0}', space=vmem, size = 0x10000, scoped, tag = 'input window, operand 3, single buffered']
    #allocation10 [shape = 's32[1]{0}', space=sflag, size = 0x4, scoped, tag = 'scoped memory for tpu_custom_call.1']
    #allocation11 [shape = 'u8[262144]{0}', space=vmem, size = 0x40000, scoped, tag = 'input window, operand 8, single buffered']
    #allocation12 [shape = 'u8[262144]{0}', space=vmem, size = 0x40000, scoped, tag = 'input window, operand 10, single buffered']
    #allocation13 [shape = 's32[1]{0}', space=sflag, size = 0x4, scoped, tag = 'scoped memory for tpu_custom_call.1']
    #allocation14 [shape = 'u8[8192]{0}', space=vmem, size = 0x2000, scoped, tag = 'output window, operand 0']
    %17 = vsyncpa [#allocation4], 0
    %s18 = scalar_lea.sflag [#allocation4], 1
    %19 = vsyncpa %s18, 0
    %20 = vsyncpa [#allocation7], 0
    %s21 = scalar_lea.sflag [#allocation7], 1
    %22 = vsyncpa %s21, 0
    %23 = vsyncpa [#allocation10], 0
    %24 = vsyncpa [#allocation13], 0
    %25 = vsyncpa [#allocation5], 0
    %s26 = scalar_lea.sflag [#allocation5], 1
    %27 = vsyncpa %s26, 0
    loop: start=0, step=1, limit=4
    $region2: #{tpu_custom_call.1} parent=1 // loop_pre_header
      _
    $region3: #{tpu_custom_call.1} parent=1 // loop_header
      %s29 = sphi 0, %s33
      %p30 = scmp.ge.s32.totalorder %s29, 4
      %s39 = sphi 0, %s41
      %s42 = sphi 0, %s39
      %s43 = sphi 0, %s42
      %s59 = sphi 0, %s43
      %s65 = sphi 0, %s67
      %s68 = sphi 0, %s65
      %s69 = sphi 0, %s68
      %s85 = sphi 0, %s69
      %s89 = sphi 0, %s89
      %s91 = sphi 0, %s89
      %s92 = sphi 0, %s91
      %s106 = sphi 0, %s92
      %s110 = sphi 0, %s110
      %s112 = sphi 0, %s110
      %s113 = sphi 0, %s112
      %s127 = sphi 0, %s113
      %s131 = sphi 0, %s131
      %s133 = sphi 0, %s131
      %s134 = sphi 0, %s133
      %s148 = sphi 0, %s134
      %s152 = sphi 0, %s152
      %s154 = sphi 0, %s152
      %s155 = sphi 0, %s154
      %s169 = sphi 0, %s155
      %s173 = sphi 0, %s173
      %s175 = sphi 0, %s173
      %s176 = sphi 0, %s175
      %s190 = sphi 0, %s176
      %s194 = sphi 0, %s194
      %s196 = sphi 0, %s194
      %s197 = sphi 0, %s196
      %s211 = sphi 0, %s197
      %s215 = sphi 0, %s215
      %s217 = sphi 0, %s215
      %s218 = sphi 0, %s217
      %s232 = sphi 0, %s218
      %s236 = sphi 0, %s236
      %s238 = sphi 0, %s236
      %s239 = sphi 0, %s238
      %s253 = sphi 0, %s239
      %s257 = sphi 0, %s257
      %s259 = sphi 0, %s257
      %s260 = sphi 0, %s259
      %s274 = sphi 0, %s260
      %s278 = sphi 0, %s278
      %s280 = sphi 0, %s278
      %s281 = sphi 0, %s280
      %s295 = sphi 0, %s281
      %s301 = sphi 0, %s303
      %s304 = sphi 0, %s301
      %s305 = sphi 0, %s304
      %s321 = sphi 0, %s305
    $region4: #{tpu_custom_call.1} parent=1 // loop_header_branch
      %32 = sbr.rel (%p30) target = $region8
    $region5: #{tpu_custom_call.1} parent=1 // loop_body
      %s34 = ssub.s32 %s29, 1
      %s35 = ssub.s32 %s29, 2
      %s36 = sadd.s32 %s29, 1
      %s37 = ssub.s32 %s29, %s36
      %p38 = scmp.eq.s32.totalorder %s37, 0
      %s40 = sadd.s32 %s39, 1
      %s41 = scalar_select %p38, %s39, %s40
      %p44 = pneg %p38
      %p45 = scmp.eq.s32.totalorder %s29, 1
      %p46 = por %p44, %p45
      %p47 = scmp.ne.s32.totalorder %s39, %s42
      %p48 = scmp.eq.s32.totalorder %s29, 0
      %p49 = por %p47, %p48
      %p50 = scmp.ne.s32.totalorder %s39, %s42
      %p51 = scmp.eq.s32.totalorder %s34, 1
      %p52 = por %p50, %p51
      %p53 = scmp.ne.s32.totalorder %s42, %s43
      %p54 = scmp.eq.s32.totalorder %s34, 0
      %p55 = por %p53, %p54
      %p56 = scmp.ne.s32.totalorder %s42, %s43
      %p57 = scmp.eq.s32.totalorder %s35, 1
      %p58 = por %p56, %p57
      %p60 = scmp.ne.s32.totalorder %s43, %s59
      %p61 = scmp.eq.s32.totalorder %s35, 0
      %p62 = por %p60, %p61
      %s63 = ssub.s32 %s29, %s36
      %p64 = scmp.eq.s32.totalorder %s63, 0
      %s66 = sadd.s32 %s65, 1
      %s67 = scalar_select %p64, %s65, %s66
      %p70 = pneg %p64
      %p71 = scmp.eq.s32.totalorder %s29, 1
      %p72 = por %p70, %p71
      %p73 = scmp.ne.s32.totalorder %s65, %s68
      %p74 = scmp.eq.s32.totalorder %s29, 0
      %p75 = por %p73, %p74
      %p76 = scmp.ne.s32.totalorder %s65, %s68
      %p77 = scmp.eq.s32.totalorder %s34, 1
      %p78 = por %p76, %p77
      %p79 = scmp.ne.s32.totalorder %s68, %s69
      %p80 = scmp.eq.s32.totalorder %s34, 0
      %p81 = por %p79, %p80
      %p82 = scmp.ne.s32.totalorder %s68, %s69
      %p83 = scmp.eq.s32.totalorder %s35, 1
      %p84 = por %p82, %p83
      %p86 = scmp.ne.s32.totalorder %s69, %s85
      %p87 = scmp.eq.s32.totalorder %s35, 0
      %p88 = por %p86, %p87
      %s90 = sadd.s32 %s89, 1
      %p93 = scmp.eq.s32.totalorder %s29, 1
      %p94 = scmp.ne.s32.totalorder %s89, %s91
      %p95 = scmp.eq.s32.totalorder %s29, 0
      %p96 = por %p94, %p95
      %p97 = scmp.ne.s32.totalorder %s89, %s91
      %p98 = scmp.eq.s32.totalorder %s34, 1
      %p99 = por %p97, %p98
      %p100 = scmp.ne.s32.totalorder %s91, %s92
      %p101 = scmp.eq.s32.totalorder %s34, 0
      %p102 = por %p100, %p101
      %p103 = scmp.ne.s32.totalorder %s91, %s92
      %p104 = scmp.eq.s32.totalorder %s35, 1
      %p105 = por %p103, %p104
      %p107 = scmp.ne.s32.totalorder %s92, %s106
      %p108 = scmp.eq.s32.totalorder %s35, 0
      %p109 = por %p107, %p108
      %s111 = sadd.s32 %s110, 1
      %p114 = scmp.eq.s32.totalorder %s29, 1
      %p115 = scmp.ne.s32.totalorder %s110, %s112
      %p116 = scmp.eq.s32.totalorder %s29, 0
      %p117 = por %p115, %p116
      %p118 = scmp.ne.s32.totalorder %s110, %s112
      %p119 = scmp.eq.s32.totalorder %s34, 1
      %p120 = por %p118, %p119
      %p121 = scmp.ne.s32.totalorder %s112, %s113
      %p122 = scmp.eq.s32.totalorder %s34, 0
      %p123 = por %p121, %p122
      %p124 = scmp.ne.s32.totalorder %s112, %s113
      %p125 = scmp.eq.s32.totalorder %s35, 1
      %p126 = por %p124, %p125
      %p128 = scmp.ne.s32.totalorder %s113, %s127
      %p129 = scmp.eq.s32.totalorder %s35, 0
      %p130 = por %p128, %p129
      %s132 = sadd.s32 %s131, 1
      %p135 = scmp.eq.s32.totalorder %s29, 1
      %p136 = scmp.ne.s32.totalorder %s131, %s133
      %p137 = scmp.eq.s32.totalorder %s29, 0
      %p138 = por %p136, %p137
      %p139 = scmp.ne.s32.totalorder %s131, %s133
      %p140 = scmp.eq.s32.totalorder %s34, 1
      %p141 = por %p139, %p140
      %p142 = scmp.ne.s32.totalorder %s133, %s134
      %p143 = scmp.eq.s32.totalorder %s34, 0
      %p144 = por %p142, %p143
      %p145 = scmp.ne.s32.totalorder %s133, %s134
      %p146 = scmp.eq.s32.totalorder %s35, 1
      %p147 = por %p145, %p146
      %p149 = scmp.ne.s32.totalorder %s134, %s148
      %p150 = scmp.eq.s32.totalorder %s35, 0
      %p151 = por %p149, %p150
      %s153 = sadd.s32 %s152, 1
      %p156 = scmp.eq.s32.totalorder %s29, 1
      %p157 = scmp.ne.s32.totalorder %s152, %s154
      %p158 = scmp.eq.s32.totalorder %s29, 0
      %p159 = por %p157, %p158
      %p160 = scmp.ne.s32.totalorder %s152, %s154
      %p161 = scmp.eq.s32.totalorder %s34, 1
      %p162 = por %p160, %p161
      %p163 = scmp.ne.s32.totalorder %s154, %s155
      %p164 = scmp.eq.s32.totalorder %s34, 0
      %p165 = por %p163, %p164
      %p166 = scmp.ne.s32.totalorder %s154, %s155
      %p167 = scmp.eq.s32.totalorder %s35, 1
      %p168 = por %p166, %p167
      %p170 = scmp.ne.s32.totalorder %s155, %s169
      %p171 = scmp.eq.s32.totalorder %s35, 0
      %p172 = por %p170, %p171
      %s174 = sadd.s32 %s173, 1
      %p177 = scmp.eq.s32.totalorder %s29, 1
      %p178 = scmp.ne.s32.totalorder %s173, %s175
      %p179 = scmp.eq.s32.totalorder %s29, 0
      %p180 = por %p178, %p179
      %p181 = scmp.ne.s32.totalorder %s173, %s175
      %p182 = scmp.eq.s32.totalorder %s34, 1
      %p183 = por %p181, %p182
      %p184 = scmp.ne.s32.totalorder %s175, %s176
      %p185 = scmp.eq.s32.totalorder %s34, 0
      %p186 = por %p184, %p185
      %p187 = scmp.ne.s32.totalorder %s175, %s176
      %p188 = scmp.eq.s32.totalorder %s35, 1
      %p189 = por %p187, %p188
      %p191 = scmp.ne.s32.totalorder %s176, %s190
      %p192 = scmp.eq.s32.totalorder %s35, 0
      %p193 = por %p191, %p192
      %s195 = sadd.s32 %s194, 1
      %p198 = scmp.eq.s32.totalorder %s29, 1
      %p199 = scmp.ne.s32.totalorder %s194, %s196
      %p200 = scmp.eq.s32.totalorder %s29, 0
      %p201 = por %p199, %p200
      %p202 = scmp.ne.s32.totalorder %s194, %s196
      %p203 = scmp.eq.s32.totalorder %s34, 1
      %p204 = por %p202, %p203
      %p205 = scmp.ne.s32.totalorder %s196, %s197
      %p206 = scmp.eq.s32.totalorder %s34, 0
      %p207 = por %p205, %p206
      %p208 = scmp.ne.s32.totalorder %s196, %s197
      %p209 = scmp.eq.s32.totalorder %s35, 1
      %p210 = por %p208, %p209
      %p212 = scmp.ne.s32.totalorder %s197, %s211
      %p213 = scmp.eq.s32.totalorder %s35, 0
      %p214 = por %p212, %p213
      %s216 = sadd.s32 %s215, 1
      %p219 = scmp.eq.s32.totalorder %s29, 1
      %p220 = scmp.ne.s32.totalorder %s215, %s217
      %p221 = scmp.eq.s32.totalorder %s29, 0
      %p222 = por %p220, %p221
      %p223 = scmp.ne.s32.totalorder %s215, %s217
      %p224 = scmp.eq.s32.totalorder %s34, 1
      %p225 = por %p223, %p224
      %p226 = scmp.ne.s32.totalorder %s217, %s218
      %p227 = scmp.eq.s32.totalorder %s34, 0
      %p228 = por %p226, %p227
      %p229 = scmp.ne.s32.totalorder %s217, %s218
      %p230 = scmp.eq.s32.totalorder %s35, 1
      %p231 = por %p229, %p230
      %p233 = scmp.ne.s32.totalorder %s218, %s232
      %p234 = scmp.eq.s32.totalorder %s35, 0
      %p235 = por %p233, %p234
      %s237 = sadd.s32 %s236, 1
      %p240 = scmp.eq.s32.totalorder %s29, 1
      %p241 = scmp.ne.s32.totalorder %s236, %s238
      %p242 = scmp.eq.s32.totalorder %s29, 0
      %p243 = por %p241, %p242
      %p244 = scmp.ne.s32.totalorder %s236, %s238
      %p245 = scmp.eq.s32.totalorder %s34, 1
      %p246 = por %p244, %p245
      %p247 = scmp.ne.s32.totalorder %s238, %s239
      %p248 = scmp.eq.s32.totalorder %s34, 0
      %p249 = por %p247, %p248
      %p250 = scmp.ne.s32.totalorder %s238, %s239
      %p251 = scmp.eq.s32.totalorder %s35, 1
      %p252 = por %p250, %p251
      %p254 = scmp.ne.s32.totalorder %s239, %s253
      %p255 = scmp.eq.s32.totalorder %s35, 0
      %p256 = por %p254, %p255
      %s258 = sadd.s32 %s257, 1
      %p261 = scmp.eq.s32.totalorder %s29, 1
      %p262 = scmp.ne.s32.totalorder %s257, %s259
      %p263 = scmp.eq.s32.totalorder %s29, 0
      %p264 = por %p262, %p263
      %p265 = scmp.ne.s32.totalorder %s257, %s259
      %p266 = scmp.eq.s32.totalorder %s34, 1
      %p267 = por %p265, %p266
      %p268 = scmp.ne.s32.totalorder %s259, %s260
      %p269 = scmp.eq.s32.totalorder %s34, 0
      %p270 = por %p268, %p269
      %p271 = scmp.ne.s32.totalorder %s259, %s260
      %p272 = scmp.eq.s32.totalorder %s35, 1
      %p273 = por %p271, %p272
      %p275 = scmp.ne.s32.totalorder %s260, %s274
      %p276 = scmp.eq.s32.totalorder %s35, 0
      %p277 = por %p275, %p276
      %s279 = sadd.s32 %s278, 1
      %p282 = scmp.eq.s32.totalorder %s29, 1
      %p283 = scmp.ne.s32.totalorder %s278, %s280
      %p284 = scmp.eq.s32.totalorder %s29, 0
      %p285 = por %p283, %p284
      %p286 = scmp.ne.s32.totalorder %s278, %s280
      %p287 = scmp.eq.s32.totalorder %s34, 1
      %p288 = por %p286, %p287
      %p289 = scmp.ne.s32.totalorder %s280, %s281
      %p290 = scmp.eq.s32.totalorder %s34, 0
      %p291 = por %p289, %p290
      %p292 = scmp.ne.s32.totalorder %s280, %s281
      %p293 = scmp.eq.s32.totalorder %s35, 1
      %p294 = por %p292, %p293
      %p296 = scmp.ne.s32.totalorder %s281, %s295
      %p297 = scmp.eq.s32.totalorder %s35, 0
      %p298 = por %p296, %p297
      %s299 = ssub.s32 %s29, %s36
      %p300 = scmp.eq.s32.totalorder %s299, 0
      %s302 = sadd.s32 %s301, 1
      %s303 = scalar_select %p300, %s301, %s302
      %p306 = pneg %p300
      %p307 = scmp.eq.s32.totalorder %s29, 1
      %p308 = por %p306, %p307
      %p309 = scmp.ne.s32.totalorder %s301, %s304
      %p310 = scmp.eq.s32.totalorder %s29, 0
      %p311 = por %p309, %p310
      %p312 = scmp.ne.s32.totalorder %s301, %s304
      %p313 = scmp.eq.s32.totalorder %s34, 1
      %p314 = por %p312, %p313
      %p315 = scmp.ne.s32.totalorder %s304, %s305
      %p316 = scmp.eq.s32.totalorder %s34, 0
      %p317 = por %p315, %p316
      %p318 = scmp.ne.s32.totalorder %s304, %s305
      %p319 = scmp.eq.s32.totalorder %s35, 1
      %p320 = por %p318, %p319
      %p322 = scmp.ne.s32.totalorder %s305, %s321
      %p323 = scmp.eq.s32.totalorder %s35, 0
      %p324 = por %p322, %p323
      %p325 = scmp.le.s32.totalorder 1, %s29
      %p326 = scmp.lt.s32.totalorder %s29, 3
      %p327 = pnand %p325, %p326
      %p328 = pneg %p327
      // Predicated region
      $region9: #{tpu_custom_call.1} parent=5 // pred_check
        _
      $region10: #{tpu_custom_call.1} parent=5 // pred_check_branch
        %330 = sbr.rel (%p327) target = $region12
      $region11: #{tpu_custom_call.1} parent=5 // pred_region
        %s331 = ssub.s32 %s29, 1
        // Predicated region
        $region13: #{tpu_custom_call.1} parent=11 // pred_check
          %p332 = pneg %p102
        $region14: #{tpu_custom_call.1} parent=11 // pred_check_branch
          %334 = sbr.rel (%p332) target = $region16
        $region15: #{tpu_custom_call.1} parent=11 // pred_region
          %s336 = ssub.s32 6144, 6144
          %337 = vsyncadd [#allocation7], %s336
          %s338 = sshll.u32 [#allocation8], 4
          %s339 = int_to_ptr.vmem [resolvable:$true] %s338
          %344 = dma.hbm_to_vmem [thread:$0]  %s2, 6144, %s339, [#allocation7], 384, 384, 24
        $region16: #{tpu_custom_call.1} parent=11 // pred_fallthru
          _
        // Predicated region
        $region17: #{tpu_custom_call.1} parent=11 // pred_check
          %p345 = pneg %p123
        $region18: #{tpu_custom_call.1} parent=11 // pred_check_branch
          %347 = sbr.rel (%p345) target = $region20
        $region19: #{tpu_custom_call.1} parent=11 // pred_region
          %s349 = ssub.s32 2048, 2048
          %350 = vsyncadd [#allocation10], %s349
          %s351 = sshll.u32 [#allocation9], 4
          %s352 = int_to_ptr.vmem [resolvable:$true] %s351
          %357 = dma.hbm_to_vmem [thread:$0]  %s3, 2048, %s352, [#allocation10], 128, 128, 8
        $region20: #{tpu_custom_call.1} parent=11 // pred_fallthru
          _
        // Predicated region
        $region21: #{tpu_custom_call.1} parent=11 // pred_check
          %p358 = pneg %p144
        $region22: #{tpu_custom_call.1} parent=11 // pred_check_branch
          %360 = sbr.rel (%p358) target = $region24
        $region23: #{tpu_custom_call.1} parent=11 // pred_region
          _
        $region24: #{tpu_custom_call.1} parent=11 // pred_fallthru
          _
        // Predicated region
        $region25: #{tpu_custom_call.1} parent=11 // pred_check
          %p361 = pneg %p165
        $region26: #{tpu_custom_call.1} parent=11 // pred_check_branch
          %363 = sbr.rel (%p361) target = $region28
        $region27: #{tpu_custom_call.1} parent=11 // pred_region
          _
        $region28: #{tpu_custom_call.1} parent=11 // pred_fallthru
          _
        // Predicated region
        $region29: #{tpu_custom_call.1} parent=11 // pred_check
          %p364 = pneg %p186
        $region30: #{tpu_custom_call.1} parent=11 // pred_check_branch
          %366 = sbr.rel (%p364) target = $region32
        $region31: #{tpu_custom_call.1} parent=11 // pred_region
          _
        $region32: #{tpu_custom_call.1} parent=11 // pred_fallthru
          _
        // Predicated region
        $region33: #{tpu_custom_call.1} parent=11 // pred_check
          %p367 = pneg %p207
        $region34: #{tpu_custom_call.1} parent=11 // pred_check_branch
          %369 = sbr.rel (%p367) target = $region36
        $region35: #{tpu_custom_call.1} parent=11 // pred_region
          _
        $region36: #{tpu_custom_call.1} parent=11 // pred_fallthru
          _
        // Predicated region
        $region37: #{tpu_custom_call.1} parent=11 // pred_check
          %p370 = pneg %p228
        $region38: #{tpu_custom_call.1} parent=11 // pred_check_branch
          %372 = sbr.rel (%p370) target = $region40
        $region39: #{tpu_custom_call.1} parent=11 // pred_region
          %s374 = ssub.s32 8192, 8192
          %375 = vsyncadd [#allocation10], %s374
          %s376 = sshll.u32 [#allocation11], 4
          %s377 = int_to_ptr.vmem [resolvable:$true] %s376
          %382 = dma.hbm_to_vmem [thread:$0]  %s8, 8192, %s377, [#allocation10], 512, 512, 32
        $region40: #{tpu_custom_call.1} parent=11 // pred_fallthru
          _
        // Predicated region
        $region41: #{tpu_custom_call.1} parent=11 // pred_check
          %p383 = pneg %p249
        $region42: #{tpu_custom_call.1} parent=11 // pred_check_branch
          %385 = sbr.rel (%p383) target = $region44
        $region43: #{tpu_custom_call.1} parent=11 // pred_region
          _
        $region44: #{tpu_custom_call.1} parent=11 // pred_fallthru
          _
        // Predicated region
        $region45: #{tpu_custom_call.1} parent=11 // pred_check
          %p386 = pneg %p270
        $region46: #{tpu_custom_call.1} parent=11 // pred_check_branch
          %388 = sbr.rel (%p386) target = $region48
        $region47: #{tpu_custom_call.1} parent=11 // pred_region
          %s390 = ssub.s32 8192, 8192
          %391 = vsyncadd [#allocation13], %s390
          %s392 = sshll.u32 [#allocation12], 4
          %s393 = int_to_ptr.vmem [resolvable:$true] %s392
          %398 = dma.hbm_to_vmem [thread:$0]  %s10, 8192, %s393, [#allocation13], 128, 128, 8
        $region48: #{tpu_custom_call.1} parent=11 // pred_fallthru
          _
        // Predicated region
        $region49: #{tpu_custom_call.1} parent=11 // pred_check
          %p399 = pneg %p291
        $region50: #{tpu_custom_call.1} parent=11 // pred_check_branch
          %401 = sbr.rel (%p399) target = $region52
        $region51: #{tpu_custom_call.1} parent=11 // pred_region
          _
        $region52: #{tpu_custom_call.1} parent=11 // pred_fallthru
          _
      $region12: #{tpu_custom_call.1} parent=5 // pred_fallthru
        _
      %p402 = scmp.lt.s32.totalorder %s29, 2
      // Predicated region
      $region53: #{tpu_custom_call.1} parent=5 // pred_check
        %p403 = pneg %p402
      $region54: #{tpu_custom_call.1} parent=5 // pred_check_branch
        %405 = sbr.rel (%p403) target = $region56
      $region55: #{tpu_custom_call.1} parent=5 // pred_region
        // Predicated region
        $region57: #{tpu_custom_call.1} parent=55 // pred_check
          %p406 = pneg %p49
        $region58: #{tpu_custom_call.1} parent=55 // pred_check_branch
          %408 = sbr.rel (%p406) target = $region60
        $region59: #{tpu_custom_call.1} parent=55 // pred_region
          %s409 = sand.u32 %s39, 1
          %s410 = scalar_lea.sflag [#allocation4], %s409
          %s411 = sand.u32 %s39, 1
          %s412 = smul.addr %s411, 8
          %s413 = scalar_lea.vmem [#allocation3], %s412
          %s415 = ssub.s32 128, 128
          %416 = vsyncadd %s410, %s415
          %s417 = smul.addr %s29, 128
          %s418 = scalar_lea.hbm %s0, %s417
          %s420 = sshll.u32 %s413, 4
          %s421 = int_to_ptr.vmem [resolvable:$true] %s420
          %423 = dma.hbm_to_vmem [thread:$0]  %s418, 128, %s421, %s410
        $region60: #{tpu_custom_call.1} parent=55 // pred_fallthru
          _
        // Predicated region
        $region61: #{tpu_custom_call.1} parent=55 // pred_check
          %p424 = pneg %p75
        $region62: #{tpu_custom_call.1} parent=55 // pred_check_branch
          %426 = sbr.rel (%p424) target = $region64
        $region63: #{tpu_custom_call.1} parent=55 // pred_region
          %s427 = sand.u32 %s29, 1
          %s428 = scalar_lea.sflag [#allocation7], %s427
          %s429 = sand.u32 %s65, 1
          %s430 = smul.addr %s429, 8
          %s431 = scalar_lea.vmem [#allocation6], %s430
          %s433 = ssub.s32 128, 128
          %434 = vsyncadd %s428, %s433
          %s435 = smul.addr %s29, 128
          %s436 = scalar_lea.hbm %s1, %s435
          %s438 = sshll.u32 %s431, 4
          %s439 = int_to_ptr.vmem [resolvable:$true] %s438
          %441 = dma.hbm_to_vmem [thread:$0]  %s436, 128, %s439, %s428
        $region64: #{tpu_custom_call.1} parent=55 // pred_fallthru
          _
      $region56: #{tpu_custom_call.1} parent=5 // pred_fallthru
        _
      %p442 = scmp.le.s32.totalorder 1, %s29
      %p443 = scmp.lt.s32.totalorder %s29, 3
      %p444 = pnand %p442, %p443
      %p445 = pneg %p444
      // Predicated region
      $region65: #{tpu_custom_call.1} parent=5 // pred_check
        _
      $region66: #{tpu_custom_call.1} parent=5 // pred_check_branch
        %447 = sbr.rel (%p444) target = $region68
      $region67: #{tpu_custom_call.1} parent=5 // pred_region
        %s448 = ssub.s32 %s29, 1
        %s449 = sand.u32 %s42, 1
        %s450 = scalar_lea.sflag [#allocation4], %s449
        %s451 = sand.u32 %s42, 1
        %s452 = smul.addr %s451, 8
        %s453 = scalar_lea.vmem [#allocation3], %s452
        // Predicated region
        $region69: #{tpu_custom_call.1} parent=67 // pred_check
          %p454 = pneg %p55
        $region70: #{tpu_custom_call.1} parent=67 // pred_check_branch
          %456 = sbr.rel (%p454) target = $region72
        $region71: #{tpu_custom_call.1} parent=67 // pred_region
          %457 = dma.done %s450, 128
        $region72: #{tpu_custom_call.1} parent=67 // pred_fallthru
          _
        %s458 = sand.u32 %s34, 1
        %s459 = scalar_lea.sflag [#allocation7], %s458
        %s460 = sand.u32 %s68, 1
        %s461 = smul.addr %s460, 8
        %s462 = scalar_lea.vmem [#allocation6], %s461
        // Predicated region
        $region73: #{tpu_custom_call.1} parent=67 // pred_check
          %p463 = pneg %p81
        $region74: #{tpu_custom_call.1} parent=67 // pred_check_branch
          %465 = sbr.rel (%p463) target = $region76
        $region75: #{tpu_custom_call.1} parent=67 // pred_region
          %466 = dma.done %s459, 128
        $region76: #{tpu_custom_call.1} parent=67 // pred_fallthru
          _
        // Predicated region
        $region77: #{tpu_custom_call.1} parent=67 // pred_check
          %p467 = pneg %p102
        $region78: #{tpu_custom_call.1} parent=67 // pred_check_branch
          %469 = sbr.rel (%p467) target = $region80
        $region79: #{tpu_custom_call.1} parent=67 // pred_region
          %470 = dma.done [#allocation7], 6144
        $region80: #{tpu_custom_call.1} parent=67 // pred_fallthru
          _
        // Predicated region
        $region81: #{tpu_custom_call.1} parent=67 // pred_check
          %p471 = pneg %p123
        $region82: #{tpu_custom_call.1} parent=67 // pred_check_branch
          %473 = sbr.rel (%p471) target = $region84
        $region83: #{tpu_custom_call.1} parent=67 // pred_region
          %474 = dma.done [#allocation10], 2048
        $region84: #{tpu_custom_call.1} parent=67 // pred_fallthru
          _
        // Predicated region
        $region85: #{tpu_custom_call.1} parent=67 // pred_check
          %p475 = pneg %p228
        $region86: #{tpu_custom_call.1} parent=67 // pred_check_branch
          %477 = sbr.rel (%p475) target = $region88
        $region87: #{tpu_custom_call.1} parent=67 // pred_region
          %478 = dma.done [#allocation10], 8192
        $region88: #{tpu_custom_call.1} parent=67 // pred_fallthru
          _
        // Predicated region
        $region89: #{tpu_custom_call.1} parent=67 // pred_check
          %p479 = pneg %p270
        $region90: #{tpu_custom_call.1} parent=67 // pred_check_branch
          %481 = sbr.rel (%p479) target = $region92
        $region91: #{tpu_custom_call.1} parent=67 // pred_region
          %482 = dma.done [#allocation13], 8192
        $region92: #{tpu_custom_call.1} parent=67 // pred_fallthru
          _
        %s483 = sand.u32 %s42, 1
        %s484 = scalar_lea.sflag [#allocation4], %s483
        %s485 = sand.u32 %s42, 1
        %s486 = smul.addr %s485, 8
        %s487 = scalar_lea.vmem [#allocation3], %s486
        %p488 = pneg %p55
        %p489 = pneg %p52
        %s490 = sand.u32 %s34, 1
        %s491 = scalar_lea.sflag [#allocation7], %s490
        %s492 = sand.u32 %s68, 1
        %s493 = smul.addr %s492, 8
        %s494 = scalar_lea.vmem [#allocation6], %s493
        %p495 = pneg %p81
        %p496 = pneg %p78
        %p497 = pneg %p102
        %p498 = pneg %p99
        %p499 = pneg %p123
        %p500 = pneg %p120
        %p501 = pneg %p144
        %p502 = pneg %p141
        %p503 = pneg %p165
        %p504 = pneg %p162
        %p505 = pneg %p186
        %p506 = pneg %p183
        %p507 = pneg %p207
        %p508 = pneg %p204
        %p509 = pneg %p228
        %p510 = pneg %p225
        %p511 = pneg %p249
        %p512 = pneg %p246
        %p513 = pneg %p270
        %p514 = pneg %p267
        %p515 = pneg %p291
        %p516 = pneg %p288
        %p517 = pneg %p317
        %p518 = pneg %p314
        %s519 = sand.u32 %s304, 1
        %s520 = scalar_lea.sflag [#allocation5], %s519
        %s521 = sand.u32 %s304, 1
        %s522 = smul.addr %s521, 8
        %s523 = scalar_lea.vmem [#allocation14], %s522
        %v524 = vld [vmem:[%s453] sm:$0xff]
        %v525 = vld [vmem:[#allocation8] sm:$0xff]
        %v526 = vld [vmem:[#allocation8 + $0x8] sm:$0xff]
        %v527 = vld [vmem:[#allocation8 + $0x10] sm:$0xff]
        %v528 = vld [vmem:[#allocation8 + $0x18] sm:$0xff]
        %v529 = vld [vmem:[#allocation8 + $0x20] sm:$0xff]
        %v530 = vld [vmem:[#allocation8 + $0x28] sm:$0xff]
        %v531 = vld [vmem:[#allocation8 + $0x30] sm:$0xff]
        %v532 = vld [vmem:[#allocation8 + $0x38] sm:$0xff]
        %v533 = vld [vmem:[#allocation8 + $0x40] sm:$0xff]
        %v534 = vld [vmem:[#allocation8 + $0x48] sm:$0xff]
        %v535 = vld [vmem:[#allocation8 + $0x50] sm:$0xff]
        %v536 = vld [vmem:[#allocation8 + $0x58] sm:$0xff]
        %v537 = vld [vmem:[#allocation8 + $0x60] sm:$0xff]
        %v538 = vld [vmem:[#allocation8 + $0x68] sm:$0xff]
        %v539 = vld [vmem:[#allocation8 + $0x70] sm:$0xff]
        %v540 = vld [vmem:[#allocation8 + $0x78] sm:$0xff]
        %v541 = vld [vmem:[#allocation8 + $0x80] sm:$0xff]
        %v542 = vld [vmem:[#allocation8 + $0x88] sm:$0xff]
        %v543 = vld [vmem:[#allocation8 + $0x90] sm:$0xff]
        %v544 = vld [vmem:[#allocation8 + $0x98] sm:$0xff]
        %v545 = vld [vmem:[#allocation8 + $0xa0] sm:$0xff]
        %v546 = vld [vmem:[#allocation8 + $0xa8] sm:$0xff]
        %v547 = vld [vmem:[#allocation8 + $0xb0] sm:$0xff]
        %v548 = vld [vmem:[#allocation8 + $0xb8] sm:$0xff]
        %v549 = vld [vmem:[#allocation8 + $0xc0] sm:$0xff]
        %v550 = vld [vmem:[#allocation8 + $0xc8] sm:$0xff]
        %v551 = vld [vmem:[#allocation8 + $0xd0] sm:$0xff]
        %v552 = vld [vmem:[#allocation8 + $0xd8] sm:$0xff]
        %v553 = vld [vmem:[#allocation8 + $0xe0] sm:$0xff]
        %v554 = vld [vmem:[#allocation8 + $0xe8] sm:$0xff]
        %v555 = vld [vmem:[#allocation8 + $0xf0] sm:$0xff]
        %v556 = vld [vmem:[#allocation8 + $0xf8] sm:$0xff]
        %v557 = vld [vmem:[#allocation8 + $0x100] sm:$0xff]
        %v558 = vld [vmem:[#allocation8 + $0x108] sm:$0xff]
        %v559 = vld [vmem:[#allocation8 + $0x110] sm:$0xff]
        %v560 = vld [vmem:[#allocation8 + $0x118] sm:$0xff]
        %v561 = vld [vmem:[#allocation8 + $0x120] sm:$0xff]
        %v562 = vld [vmem:[#allocation8 + $0x128] sm:$0xff]
        %v563 = vld [vmem:[#allocation8 + $0x130] sm:$0xff]
        %v564 = vld [vmem:[#allocation8 + $0x138] sm:$0xff]
        %v565 = vld [vmem:[#allocation8 + $0x140] sm:$0xff]
        %v566 = vld [vmem:[#allocation8 + $0x148] sm:$0xff]
        %v567 = vld [vmem:[#allocation8 + $0x150] sm:$0xff]
        %v568 = vld [vmem:[#allocation8 + $0x158] sm:$0xff]
        %v569 = vld [vmem:[#allocation8 + $0x160] sm:$0xff]
        %v570 = vld [vmem:[#allocation8 + $0x168] sm:$0xff]
        %v571 = vld [vmem:[#allocation8 + $0x170] sm:$0xff]
        %v572 = vld [vmem:[#allocation8 + $0x178] sm:$0xff]
        %573 = vmatprep.subr.mxu0 %v526
        %574 = vmatpush1.msra.mxu0 %v525
        %575 = vmatprep.subr.mxu0 %v529
        %576 = vmatpush1.msra.mxu0 %v528
        %577 = vmatprep.subr.mxu0 %v532
        %578 = vmatpush1.msra.mxu0 %v531
        %579 = vmatprep.subr.mxu0 %v535
        %580 = vmatpush1.msra.mxu0 %v534
        %581 = vmatprep.subr.mxu0 %v538
        %582 = vmatpush1.msra.mxu0 %v537
        %583 = vmatprep.subr.mxu0 %v541
        %584 = vmatpush1.msra.mxu0 %v540
        %585 = vmatprep.subr.mxu0 %v544
        %586 = vmatpush1.msra.mxu0 %v543
        %587 = vmatprep.subr.mxu0 %v547
        %588 = vmatpush1.msra.mxu0 %v546
        %589 = vmatprep.subr.mxu0 %v550
        %590 = vmatpush1.msra.mxu0 %v549
        %591 = vmatprep.subr.mxu0 %v553
        %592 = vmatpush1.msra.mxu0 %v552
        %593 = vmatprep.subr.mxu0 %v556
        %594 = vmatpush1.msra.mxu0 %v555
        %595 = vmatprep.subr.mxu0 %v559
        %596 = vmatpush1.msra.mxu0 %v558
        %597 = vmatprep.subr.mxu0 %v562
        %598 = vmatpush1.msra.mxu0 %v561
        %599 = vmatprep.subr.mxu0 %v565
        %600 = vmatpush1.msra.mxu0 %v564
        %601 = vmatprep.subr.mxu0 %v568
        %602 = vmatpush1.msra.mxu0 %v567
        %603 = vmatprep.subr.mxu0 %v571
        %604 = vmatpush1.msra.mxu0 %v570
        %605 = vmatprep.subr.mxu0 0.0
        %606 = vmatpush1.msra.mxu0 0.0
        %607 = vmatprep.subr.mxu0 0.0
        %608 = vmatpush1.msra.mxu0 0.0
        %609 = vmatprep.subr.mxu0 0.0
        %610 = vmatpush1.msra.mxu0 0.0
        %611 = vmatprep.subr.mxu0 0.0
        %612 = vmatpush1.msra.mxu0 0.0
        %613 = vmatprep.subr.mxu0 0.0
        %614 = vmatpush1.msra.mxu0 0.0
        %615 = vmatprep.subr.mxu0 0.0
        %616 = vmatpush1.msra.mxu0 0.0
        %617 = vmatprep.subr.mxu0 0.0
        %618 = vmatpush1.msra.mxu0 0.0
        %619 = vmatprep.subr.mxu0 0.0
        %620 = vmatpush1.msra.mxu0 0.0
        %621 = vmatprep.subr.mxu0 0.0
        %622 = vmatpush1.msra.mxu0 0.0
        %623 = vmatprep.subr.mxu0 0.0
        %624 = vmatpush1.msra.mxu0 0.0
        %625 = vmatprep.subr.mxu0 0.0
        %626 = vmatpush1.msra.mxu0 0.0
        %627 = vmatprep.subr.mxu0 0.0
        %628 = vmatpush1.msra.mxu0 0.0
        %629 = vmatprep.subr.mxu0 0.0
        %630 = vmatpush1.msra.mxu0 0.0
        %631 = vmatprep.subr.mxu0 0.0
        %632 = vmatpush1.msra.mxu0 0.0
        %633 = vmatprep.subr.mxu0 0.0
        %634 = vmatpush1.msra.mxu0 0.0
        %635 = vmatprep.subr.mxu0 0.0
        %636 = vmatpush1.msra.mxu0 0.0
        %637 = vmatprep.mubr.f32.mxu0 0.0
        %638 = vmatmul.mubr.f32.gmra.mrb[0].mxu0 %v524
        %v639 = vpop.f32.mrb[0].mxu0
        %v640 = vadd.f32 0.0, %v639
        %v641 = vpop.f32.mrb[0].mxu0
        %v642 = vadd.f32 0.0, %v641
        %643 = vdwg.mxu0
        %644 = vmatprep.subr.mxu0 0.0
        %645 = vmatpush1.msra.mxu0 %v527
        %646 = vmatprep.subr.mxu0 0.0
        %647 = vmatpush1.msra.mxu0 %v530
        %648 = vmatprep.subr.mxu0 0.0
        %649 = vmatpush1.msra.mxu0 %v533
        %650 = vmatprep.subr.mxu0 0.0
        %651 = vmatpush1.msra.mxu0 %v536
        %652 = vmatprep.subr.mxu0 0.0
        %653 = vmatpush1.msra.mxu0 %v539
        %654 = vmatprep.subr.mxu0 0.0
        %655 = vmatpush1.msra.mxu0 %v542
        %656 = vmatprep.subr.mxu0 0.0
        %657 = vmatpush1.msra.mxu0 %v545
        %658 = vmatprep.subr.mxu0 0.0
        %659 = vmatpush1.msra.mxu0 %v548
        %660 = vmatprep.subr.mxu0 0.0
        %661 = vmatpush1.msra.mxu0 %v551
        %662 = vmatprep.subr.mxu0 0.0
        %663 = vmatpush1.msra.mxu0 %v554
        %664 = vmatprep.subr.mxu0 0.0
        %665 = vmatpush1.msra.mxu0 %v557
        %666 = vmatprep.subr.mxu0 0.0
        %667 = vmatpush1.msra.mxu0 %v560
        %668 = vmatprep.subr.mxu0 0.0
        %669 = vmatpush1.msra.mxu0 %v563
        %670 = vmatprep.subr.mxu0 0.0
        %671 = vmatpush1.msra.mxu0 %v566
        %672 = vmatprep.subr.mxu0 0.0
        %673 = vmatpush1.msra.mxu0 %v569
        %674 = vmatprep.subr.mxu0 0.0
        %675 = vmatpush1.msra.mxu0 %v572
        %676 = vmatprep.subr.mxu0 0.0
        %677 = vmatpush1.msra.mxu0 0.0
        %678 = vmatprep.subr.mxu0 0.0
        %679 = vmatpush1.msra.mxu0 0.0
        %680 = vmatprep.subr.mxu0 0.0
        %681 = vmatpush1.msra.mxu0 0.0
        %682 = vmatprep.subr.mxu0 0.0
        %683 = vmatpush1.msra.mxu0 0.0
        %684 = vmatprep.subr.mxu0 0.0
        %685 = vmatpush1.msra.mxu0 0.0
        %686 = vmatprep.subr.mxu0 0.0
        %687 = vmatpush1.msra.mxu0 0.0
        %688 = vmatprep.subr.mxu0 0.0
        %689 = vmatpush1.msra.mxu0 0.0
        %690 = vmatprep.subr.mxu0 0.0
        %691 = vmatpush1.msra.mxu0 0.0
        %692 = vmatprep.subr.mxu0 0.0
        %693 = vmatpush1.msra.mxu0 0.0
        %694 = vmatprep.subr.mxu0 0.0
        %695 = vmatpush1.msra.mxu0 0.0
        %696 = vmatprep.subr.mxu0 0.0
        %697 = vmatpush1.msra.mxu0 0.0
        %698 = vmatprep.subr.mxu0 0.0
        %699 = vmatpush1.msra.mxu0 0.0
        %700 = vmatprep.subr.mxu0 0.0
        %701 = vmatpush1.msra.mxu0 0.0
        %702 = vmatprep.subr.mxu0 0.0
        %703 = vmatpush1.msra.mxu0 0.0
        %704 = vmatprep.subr.mxu0 0.0
        %705 = vmatpush1.msra.mxu0 0.0
        %706 = vmatprep.subr.mxu0 0.0
        %707 = vmatpush1.msra.mxu0 0.0
        %708 = vmatprep.mubr.f32.mxu0 0.0
        %709 = vmatmul.mubr.f32.gmra.mrb[0].mxu0 %v524
        %v710 = vpop.f32.mrb[0].mxu0
        %v711 = vadd.f32 0.0, %v710
        %v712 = vpop.f32.mrb[0].mxu0
        %713 = vdwg.mxu0
        %v714 = vld [vmem:[%s462] sm:$0xff]
        %vm715 = vcmask 261120
        %v717 = vsel %vm715, %v640, 0
        %v720 = vsel %vm715, %v642, 0
        %722 = vmatprep.subr.mxu0 0.0
        %723 = vmatpush1.xpose.msra.mxu0 %v720
        %724 = vmatprep.subr.mxu0 0.0
        %725 = vmatpush1.xpose.msra.mxu0 0.0
        %726 = vmatprep.subr.mxu0 0.0
        %727 = vmatpush1.xpose.msra.mxu0 0.0
        %728 = vmatprep.subr.mxu0 0.0
        %729 = vmatpush1.xpose.msra.mxu0 0.0
        %730 = vmatprep.subr.mxu0 0.0
        %731 = vmatpush1.xpose.msra.mxu0 0.0
        %732 = vmatprep.subr.mxu0 0.0
        %733 = vmatpush1.xpose.msra.mxu0 0.0
        %734 = vmatprep.subr.mxu0 0.0
        %735 = vmatpush1.xpose.msra.mxu0 0.0
        %736 = vmatprep.subr.mxu0 0.0
        %737 = vmatpush1.xpose.msra.mxu0 0.0
        %738 = vmatprep.subr.mxu0 0.0
        %739 = vmatpush1.xpose.msra.mxu0 0.0
        %740 = vmatprep.subr.mxu0 0.0
        %741 = vmatpush1.xpose.msra.mxu0 0.0
        %742 = vmatprep.subr.mxu0 0.0
        %743 = vmatpush1.xpose.msra.mxu0 0.0
        %744 = vmatprep.subr.mxu0 0.0
        %745 = vmatpush1.xpose.msra.mxu0 0.0
        %746 = vmatprep.subr.mxu0 0.0
        %747 = vmatpush1.xpose.msra.mxu0 0.0
        %748 = vmatprep.subr.mxu0 0.0
        %749 = vmatpush1.xpose.msra.mxu0 0.0
        %750 = vmatprep.subr.mxu0 0.0
        %751 = vmatpush1.xpose.msra.mxu0 0.0
        %752 = vmatprep.subr.mxu0 0.0
        %753 = vmatpush1.xpose.msra.mxu0 0.0
        %754 = vmatprep.subr.mxu0 0.0
        %755 = vmatpush1.xpose.msra.mxu0 0.0
        %756 = vmatprep.subr.mxu0 0.0
        %757 = vmatpush1.xpose.msra.mxu0 0.0
        %758 = vmatprep.subr.mxu0 0.0
        %759 = vmatpush1.xpose.msra.mxu0 0.0
        %760 = vmatprep.subr.mxu0 0.0
        %761 = vmatpush1.xpose.msra.mxu0 0.0
        %762 = vmatprep.subr.mxu0 0.0
        %763 = vmatpush1.xpose.msra.mxu0 0.0
        %764 = vmatprep.subr.mxu0 0.0
        %765 = vmatpush1.xpose.msra.mxu0 0.0
        %766 = vmatprep.subr.mxu0 0.0
        %767 = vmatpush1.xpose.msra.mxu0 0.0
        %768 = vmatprep.subr.mxu0 0.0
        %769 = vmatpush1.xpose.msra.mxu0 0.0
        %770 = vmatprep.subr.mxu0 0.0
        %771 = vmatpush1.xpose.msra.mxu0 0.0
        %772 = vmatprep.subr.mxu0 0.0
        %773 = vmatpush1.xpose.msra.mxu0 0.0
        %774 = vmatprep.subr.mxu0 0.0
        %775 = vmatpush1.xpose.msra.mxu0 0.0
        %776 = vmatprep.subr.mxu0 0.0
        %777 = vmatpush1.xpose.msra.mxu0 0.0
        %778 = vmatprep.subr.mxu0 0.0
        %779 = vmatpush1.xpose.msra.mxu0 0.0
        %780 = vmatprep.subr.mxu0 0.0
        %781 = vmatpush1.xpose.msra.mxu0 0.0
        %782 = vmatprep.subr.mxu0 0.0
        %783 = vmatpush1.xpose.msra.mxu0 0.0
        %784 = vmatprep.subr.mxu0 0.0
        %785 = vmatpush1.xpose.msra.mxu0 0.0
        %786 = vmatprep.mubr.f32.mxu0 0.0
        %787 = vmatmul.mubr.f32.gmra.mrb[0].mxu0 %v717
        %v788 = vpop.f32.mrb[0].mxu0
        %v789 = vadd.f32 0.0, %v788
        %v790 = vpop.f32.mrb[0].mxu0
        %791 = vdwg.mxu0
        %v792 = vmul.f32 %v789, 0.088388346
        %v793 = vadd.f32 %v792, %v714
        %vm794 = vcmask 64512
        %v795 = vsel %vm794, %v793, -inf
        %796 = vmax.xlane.f32.xlu0 %v795
        %v797 = vpop.xlane.xlu0 %796
        %v798 = vsub.f32 %v793, %v797
        %v799 = vmul.f32 %v798, 1.442695
        %v800 = vpow.pop %v799
        %v801 = vsel %vm794, %v800, 0.0
        %802 = vadd.xlane.f32.xlu0 %v801
        %v803 = vpop.xlane.xlu0 %802
        %v804 = vrcp.pop %v803
        %v805 = vmul.f32 %v803, %v804
        %v806 = vsub.f32 2.0, %v805
        %v807 = vmul.f32 %v804, %v806
        %v808 = vmul.f32 %v800, %v807
        %v810 = vsel %vm794, %v808, 0
        %812 = vmatprep.subr.mxu0 0.0
        %813 = vmatpush1.msra.mxu0 %v711
        %814 = vmatprep.subr.mxu0 0.0
        %815 = vmatpush1.msra.mxu0 0.0
        %816 = vmatprep.subr.mxu0 0.0
        %817 = vmatpush1.msra.mxu0 0.0
        %818 = vmatprep.subr.mxu0 0.0
        %819 = vmatpush1.msra.mxu0 0.0
        %820 = vmatprep.subr.mxu0 0.0
        %821 = vmatpush1.msra.mxu0 0.0
        %822 = vmatprep.subr.mxu0 0.0
        %823 = vmatpush1.msra.mxu0 0.0
        %824 = vmatprep.subr.mxu0 0.0
        %825 = vmatpush1.msra.mxu0 0.0
        %826 = vmatprep.subr.mxu0 0.0
        %827 = vmatpush1.msra.mxu0 0.0
        %828 = vmatprep.subr.mxu0 0.0
        %829 = vmatpush1.msra.mxu0 0.0
        %830 = vmatprep.subr.mxu0 0.0
        %831 = vmatpush1.msra.mxu0 0.0
        %832 = vmatprep.subr.mxu0 0.0
        %833 = vmatpush1.msra.mxu0 0.0
        %834 = vmatprep.subr.mxu0 0.0
        %835 = vmatpush1.msra.mxu0 0.0
        %836 = vmatprep.subr.mxu0 0.0
        %837 = vmatpush1.msra.mxu0 0.0
        %838 = vmatprep.subr.mxu0 0.0
        %839 = vmatpush1.msra.mxu0 0.0
        %840 = vmatprep.subr.mxu0 0.0
        %841 = vmatpush1.msra.mxu0 0.0
        %842 = vmatprep.subr.mxu0 0.0
        %843 = vmatpush1.msra.mxu0 0.0
        %844 = vmatprep.subr.mxu0 0.0
        %845 = vmatpush1.msra.mxu0 0.0
        %846 = vmatprep.subr.mxu0 0.0
        %847 = vmatpush1.msra.mxu0 0.0
        %848 = vmatprep.subr.mxu0 0.0
        %849 = vmatpush1.msra.mxu0 0.0
        %850 = vmatprep.subr.mxu0 0.0
        %851 = vmatpush1.msra.mxu0 0.0
        %852 = vmatprep.subr.mxu0 0.0
        %853 = vmatpush1.msra.mxu0 0.0
        %854 = vmatprep.subr.mxu0 0.0
        %855 = vmatpush1.msra.mxu0 0.0
        %856 = vmatprep.subr.mxu0 0.0
        %857 = vmatpush1.msra.mxu0 0.0
        %858 = vmatprep.subr.mxu0 0.0
        %859 = vmatpush1.msra.mxu0 0.0
        %860 = vmatprep.subr.mxu0 0.0
        %861 = vmatpush1.msra.mxu0 0.0
        %862 = vmatprep.subr.mxu0 0.0
        %863 = vmatpush1.msra.mxu0 0.0
        %864 = vmatprep.subr.mxu0 0.0
        %865 = vmatpush1.msra.mxu0 0.0
        %866 = vmatprep.subr.mxu0 0.0
        %867 = vmatpush1.msra.mxu0 0.0
        %868 = vmatprep.subr.mxu0 0.0
        %869 = vmatpush1.msra.mxu0 0.0
        %870 = vmatprep.subr.mxu0 0.0
        %871 = vmatpush1.msra.mxu0 0.0
        %872 = vmatprep.subr.mxu0 0.0
        %873 = vmatpush1.msra.mxu0 0.0
        %874 = vmatprep.subr.mxu0 0.0
        %875 = vmatpush1.msra.mxu0 0.0
        %876 = vmatprep.mubr.f32.mxu0 0.0
        %877 = vmatmul.mubr.f32.gmra.mrb[0].mxu0 %v810
        %v878 = vpop.f32.mrb[0].mxu0
        %v879 = vadd.f32 0.0, %v878
        %v880 = vpop.f32.mrb[0].mxu0
        %881 = vdwg.mxu0
        %882 = vrot.lane.b32.xlu0 %v640, 96
        %v883 = vpop.permute.xlu0 %882
        %884 = vrot.lane.b32.xlu0 %v642, 96
        %v885 = vpop.permute.xlu0 %884
        %v886 = vsel %vm715, %v883, 0
        %v888 = vsel %vm715, %v885, 0
        %890 = vmatprep.subr.mxu0 0.0
        %891 = vmatpush1.xpose.msra.mxu0 %v888
        %892 = vmatprep.subr.mxu0 0.0
        %893 = vmatpush1.xpose.msra.mxu0 0.0
        %894 = vmatprep.subr.mxu0 0.0
        %895 = vmatpush1.xpose.msra.mxu0 0.0
        %896 = vmatprep.subr.mxu0 0.0
        %897 = vmatpush1.xpose.msra.mxu0 0.0
        %898 = vmatprep.subr.mxu0 0.0
        %899 = vmatpush1.xpose.msra.mxu0 0.0
        %900 = vmatprep.subr.mxu0 0.0
        %901 = vmatpush1.xpose.msra.mxu0 0.0
        %902 = vmatprep.subr.mxu0 0.0
        %903 = vmatpush1.xpose.msra.mxu0 0.0
        %904 = vmatprep.subr.mxu0 0.0
        %905 = vmatpush1.xpose.msra.mxu0 0.0
        %906 = vmatprep.subr.mxu0 0.0
        %907 = vmatpush1.xpose.msra.mxu0 0.0
        %908 = vmatprep.subr.mxu0 0.0
        %909 = vmatpush1.xpose.msra.mxu0 0.0
        %910 = vmatprep.subr.mxu0 0.0
        %911 = vmatpush1.xpose.msra.mxu0 0.0
        %912 = vmatprep.subr.mxu0 0.0
        %913 = vmatpush1.xpose.msra.mxu0 0.0
        %914 = vmatprep.subr.mxu0 0.0
        %915 = vmatpush1.xpose.msra.mxu0 0.0
        %916 = vmatprep.subr.mxu0 0.0
        %917 = vmatpush1.xpose.msra.mxu0 0.0
        %918 = vmatprep.subr.mxu0 0.0
        %919 = vmatpush1.xpose.msra.mxu0 0.0
        %920 = vmatprep.subr.mxu0 0.0
        %921 = vmatpush1.xpose.msra.mxu0 0.0
        %922 = vmatprep.subr.mxu0 0.0
        %923 = vmatpush1.xpose.msra.mxu0 0.0
        %924 = vmatprep.subr.mxu0 0.0
        %925 = vmatpush1.xpose.msra.mxu0 0.0
        %926 = vmatprep.subr.mxu0 0.0
        %927 = vmatpush1.xpose.msra.mxu0 0.0
        %928 = vmatprep.subr.mxu0 0.0
        %929 = vmatpush1.xpose.msra.mxu0 0.0
        %930 = vmatprep.subr.mxu0 0.0
        %931 = vmatpush1.xpose.msra.mxu0 0.0
        %932 = vmatprep.subr.mxu0 0.0
        %933 = vmatpush1.xpose.msra.mxu0 0.0
        %934 = vmatprep.subr.mxu0 0.0
        %935 = vmatpush1.xpose.msra.mxu0 0.0
        %936 = vmatprep.subr.mxu0 0.0
        %937 = vmatpush1.xpose.msra.mxu0 0.0
        %938 = vmatprep.subr.mxu0 0.0
        %939 = vmatpush1.xpose.msra.mxu0 0.0
        %940 = vmatprep.subr.mxu0 0.0
        %941 = vmatpush1.xpose.msra.mxu0 0.0
        %942 = vmatprep.subr.mxu0 0.0
        %943 = vmatpush1.xpose.msra.mxu0 0.0
        %944 = vmatprep.subr.mxu0 0.0
        %945 = vmatpush1.xpose.msra.mxu0 0.0
        %946 = vmatprep.subr.mxu0 0.0
        %947 = vmatpush1.xpose.msra.mxu0 0.0
        %948 = vmatprep.subr.mxu0 0.0
        %949 = vmatpush1.xpose.msra.mxu0 0.0
        %950 = vmatprep.subr.mxu0 0.0
        %951 = vmatpush1.xpose.msra.mxu0 0.0
        %952 = vmatprep.subr.mxu0 0.0
        %953 = vmatpush1.xpose.msra.mxu0 0.0
        %954 = vmatprep.mubr.f32.mxu0 0.0
        %955 = vmatmul.mubr.f32.gmra.mrb[0].mxu0 %v886
        %v956 = vpop.f32.mrb[0].mxu0
        %v957 = vadd.f32 0.0, %v956
        %v958 = vpop.f32.mrb[0].mxu0
        %959 = vdwg.mxu0
        %v960 = vmul.f32 %v957, 0.088388346
        %v961 = vadd.f32 %v960, %v714
        %v962 = vsel %vm794, %v961, -inf
        %963 = vmax.xlane.f32.xlu0 %v962
        %v964 = vpop.xlane.xlu0 %963
        %v965 = vsub.f32 %v961, %v964
        %v966 = vmul.f32 %v965, 1.442695
        %v967 = vpow.pop %v966
        %v968 = vsel %vm794, %v967, 0.0
        %969 = vadd.xlane.f32.xlu0 %v968
        %v970 = vpop.xlane.xlu0 %969
        %v971 = vrcp.pop %v970
        %v972 = vmul.f32 %v970, %v971
        %v973 = vsub.f32 2.0, %v972
        %v974 = vmul.f32 %v971, %v973
        %v975 = vmul.f32 %v967, %v974
        %977 = vrot.lane.b32.xlu0 %v711, 96
        %v978 = vpop.permute.xlu0 %977
        %v981 = vsel %vm794, %v975, 0
        %983 = vmatprep.subr.mxu0 0.0
        %984 = vmatpush1.msra.mxu0 %v978
        %985 = vmatprep.subr.mxu0 0.0
        %986 = vmatpush1.msra.mxu0 0.0
        %987 = vmatprep.subr.mxu0 0.0
        %988 = vmatpush1.msra.mxu0 0.0
        %989 = vmatprep.subr.mxu0 0.0
        %990 = vmatpush1.msra.mxu0 0.0
        %991 = vmatprep.subr.mxu0 0.0
        %992 = vmatpush1.msra.mxu0 0.0
        %993 = vmatprep.subr.mxu0 0.0
        %994 = vmatpush1.msra.mxu0 0.0
        %995 = vmatprep.subr.mxu0 0.0
        %996 = vmatpush1.msra.mxu0 0.0
        %997 = vmatprep.subr.mxu0 0.0
        %998 = vmatpush1.msra.mxu0 0.0
        %999 = vmatprep.subr.mxu0 0.0
        %1000 = vmatpush1.msra.mxu0 0.0
        %1001 = vmatprep.subr.mxu0 0.0
        %1002 = vmatpush1.msra.mxu0 0.0
        %1003 = vmatprep.subr.mxu0 0.0
        %1004 = vmatpush1.msra.mxu0 0.0
        %1005 = vmatprep.subr.mxu0 0.0
        %1006 = vmatpush1.msra.mxu0 0.0
        %1007 = vmatprep.subr.mxu0 0.0
        %1008 = vmatpush1.msra.mxu0 0.0
        %1009 = vmatprep.subr.mxu0 0.0
        %1010 = vmatpush1.msra.mxu0 0.0
        %1011 = vmatprep.subr.mxu0 0.0
        %1012 = vmatpush1.msra.mxu0 0.0
        %1013 = vmatprep.subr.mxu0 0.0
        %1014 = vmatpush1.msra.mxu0 0.0
        %1015 = vmatprep.subr.mxu0 0.0
        %1016 = vmatpush1.msra.mxu0 0.0
        %1017 = vmatprep.subr.mxu0 0.0
        %1018 = vmatpush1.msra.mxu0 0.0
        %1019 = vmatprep.subr.mxu0 0.0
        %1020 = vmatpush1.msra.mxu0 0.0
        %1021 = vmatprep.subr.mxu0 0.0
        %1022 = vmatpush1.msra.mxu0 0.0
        %1023 = vmatprep.subr.mxu0 0.0
        %1024 = vmatpush1.msra.mxu0 0.0
        %1025 = vmatprep.subr.mxu0 0.0
        %1026 = vmatpush1.msra.mxu0 0.0
        %1027 = vmatprep.subr.mxu0 0.0
        %1028 = vmatpush1.msra.mxu0 0.0
        %1029 = vmatprep.subr.mxu0 0.0
        %1030 = vmatpush1.msra.mxu0 0.0
        %1031 = vmatprep.subr.mxu0 0.0
        %1032 = vmatpush1.msra.mxu0 0.0
        %1033 = vmatprep.subr.mxu0 0.0
        %1034 = vmatpush1.msra.mxu0 0.0
        %1035 = vmatprep.subr.mxu0 0.0
        %1036 = vmatpush1.msra.mxu0 0.0
        %1037 = vmatprep.subr.mxu0 0.0
        %1038 = vmatpush1.msra.mxu0 0.0
        %1039 = vmatprep.subr.mxu0 0.0
        %1040 = vmatpush1.msra.mxu0 0.0
        %1041 = vmatprep.subr.mxu0 0.0
        %1042 = vmatpush1.msra.mxu0 0.0
        %1043 = vmatprep.subr.mxu0 0.0
        %1044 = vmatpush1.msra.mxu0 0.0
        %1045 = vmatprep.subr.mxu0 0.0
        %1046 = vmatpush1.msra.mxu0 0.0
        %1047 = vmatprep.mubr.f32.mxu0 0.0
        %1048 = vmatmul.mubr.f32.gmra.mrb[0].mxu0 %v981
        %v1049 = vpop.f32.mrb[0].mxu0
        %v1050 = vadd.f32 0.0, %v1049
        %v1051 = vpop.f32.mrb[0].mxu0
        %1052 = vdwg.mxu0
        %1053 = vrot.lane.b32.xlu0 %v640, 64
        %v1054 = vpop.permute.xlu0 %1053
        %1055 = vrot.lane.b32.xlu0 %v642, 64
        %v1056 = vpop.permute.xlu0 %1055
        %v1057 = vsel %vm715, %v1054, 0
        %v1059 = vsel %vm715, %v1056, 0
        %1061 = vmatprep.subr.mxu0 0.0
        %1062 = vmatpush1.xpose.msra.mxu0 %v1059
        %1063 = vmatprep.subr.mxu0 0.0
        %1064 = vmatpush1.xpose.msra.mxu0 0.0
        %1065 = vmatprep.subr.mxu0 0.0
        %1066 = vmatpush1.xpose.msra.mxu0 0.0
        %1067 = vmatprep.subr.mxu0 0.0
        %1068 = vmatpush1.xpose.msra.mxu0 0.0
        %1069 = vmatprep.subr.mxu0 0.0
        %1070 = vmatpush1.xpose.msra.mxu0 0.0
        %1071 = vmatprep.subr.mxu0 0.0
        %1072 = vmatpush1.xpose.msra.mxu0 0.0
        %1073 = vmatprep.subr.mxu0 0.0
        %1074 = vmatpush1.xpose.msra.mxu0 0.0
        %1075 = vmatprep.subr.mxu0 0.0
        %1076 = vmatpush1.xpose.msra.mxu0 0.0
        %1077 = vmatprep.subr.mxu0 0.0
        %1078 = vmatpush1.xpose.msra.mxu0 0.0
        %1079 = vmatprep.subr.mxu0 0.0
        %1080 = vmatpush1.xpose.msra.mxu0 0.0
        %1081 = vmatprep.subr.mxu0 0.0
        %1082 = vmatpush1.xpose.msra.mxu0 0.0
        %1083 = vmatprep.subr.mxu0 0.0
        %1084 = vmatpush1.xpose.msra.mxu0 0.0
        %1085 = vmatprep.subr.mxu0 0.0
        %1086 = vmatpush1.xpose.msra.mxu0 0.0
        %1087 = vmatprep.subr.mxu0 0.0
        %1088 = vmatpush1.xpose.msra.mxu0 0.0
        %1089 = vmatprep.subr.mxu0 0.0
        %1090 = vmatpush1.xpose.msra.mxu0 0.0
        %1091 = vmatprep.subr.mxu0 0.0
        %1092 = vmatpush1.xpose.msra.mxu0 0.0
        %1093 = vmatprep.subr.mxu0 0.0
        %1094 = vmatpush1.xpose.msra.mxu0 0.0
        %1095 = vmatprep.subr.mxu0 0.0
        %1096 = vmatpush1.xpose.msra.mxu0 0.0
        %1097 = vmatprep.subr.mxu0 0.0
        %1098 = vmatpush1.xpose.msra.mxu0 0.0
        %1099 = vmatprep.subr.mxu0 0.0
        %1100 = vmatpush1.xpose.msra.mxu0 0.0
        %1101 = vmatprep.subr.mxu0 0.0
        %1102 = vmatpush1.xpose.msra.mxu0 0.0
        %1103 = vmatprep.subr.mxu0 0.0
        %1104 = vmatpush1.xpose.msra.mxu0 0.0
        %1105 = vmatprep.subr.mxu0 0.0
        %1106 = vmatpush1.xpose.msra.mxu0 0.0
        %1107 = vmatprep.subr.mxu0 0.0
        %1108 = vmatpush1.xpose.msra.mxu0 0.0
        %1109 = vmatprep.subr.mxu0 0.0
        %1110 = vmatpush1.xpose.msra.mxu0 0.0
        %1111 = vmatprep.subr.mxu0 0.0
        %1112 = vmatpush1.xpose.msra.mxu0 0.0
        %1113 = vmatprep.subr.mxu0 0.0
        %1114 = vmatpush1.xpose.msra.mxu0 0.0
        %1115 = vmatprep.subr.mxu0 0.0
        %1116 = vmatpush1.xpose.msra.mxu0 0.0
        %1117 = vmatprep.subr.mxu0 0.0
        %1118 = vmatpush1.xpose.msra.mxu0 0.0
        %1119 = vmatprep.subr.mxu0 0.0
        %1120 = vmatpush1.xpose.msra.mxu0 0.0
        %1121 = vmatprep.subr.mxu0 0.0
        %1122 = vmatpush1.xpose.msra.mxu0 0.0
        %1123 = vmatprep.subr.mxu0 0.0
        %1124 = vmatpush1.xpose.msra.mxu0 0.0
        %1125 = vmatprep.mubr.f32.mxu0 0.0
        %1126 = vmatmul.mubr.f32.gmra.mrb[0].mxu0 %v1057
        %v1127 = vpop.f32.mrb[0].mxu0
        %v1128 = vadd.f32 0.0, %v1127
        %v1129 = vpop.f32.mrb[0].mxu0
        %1130 = vdwg.mxu0
        %v1131 = vmul.f32 %v1128, 0.088388346
        %v1132 = vadd.f32 %v1131, %v714
        %v1133 = vsel %vm794, %v1132, -inf
        %1134 = vmax.xlane.f32.xlu0 %v1133
        %v1135 = vpop.xlane.xlu0 %1134
        %v1136 = vsub.f32 %v1132, %v1135
        %v1137 = vmul.f32 %v1136, 1.442695
        %v1138 = vpow.pop %v1137
        %v1139 = vsel %vm794, %v1138, 0.0
        %1140 = vadd.xlane.f32.xlu0 %v1139
        %v1141 = vpop.xlane.xlu0 %1140
        %v1142 = vrcp.pop %v1141
        %v1143 = vmul.f32 %v1141, %v1142
        %v1144 = vsub.f32 2.0, %v1143
        %v1145 = vmul.f32 %v1142, %v1144
        %v1146 = vmul.f32 %v1138, %v1145
        %1147 = vrot.lane.b32.xlu0 %v711, 64
        %v1148 = vpop.permute.xlu0 %1147
        %v1151 = vsel %vm794, %v1146, 0
        %1153 = vmatprep.subr.mxu0 0.0
        %1154 = vmatpush1.msra.mxu0 %v1148
        %1155 = vmatprep.subr.mxu0 0.0
        %1156 = vmatpush1.msra.mxu0 0.0
        %1157 = vmatprep.subr.mxu0 0.0
        %1158 = vmatpush1.msra.mxu0 0.0
        %1159 = vmatprep.subr.mxu0 0.0
        %1160 = vmatpush1.msra.mxu0 0.0
        %1161 = vmatprep.subr.mxu0 0.0
        %1162 = vmatpush1.msra.mxu0 0.0
        %1163 = vmatprep.subr.mxu0 0.0
        %1164 = vmatpush1.msra.mxu0 0.0
        %1165 = vmatprep.subr.mxu0 0.0
        %1166 = vmatpush1.msra.mxu0 0.0
        %1167 = vmatprep.subr.mxu0 0.0
        %1168 = vmatpush1.msra.mxu0 0.0
        %1169 = vmatprep.subr.mxu0 0.0
        %1170 = vmatpush1.msra.mxu0 0.0
        %1171 = vmatprep.subr.mxu0 0.0
        %1172 = vmatpush1.msra.mxu0 0.0
        %1173 = vmatprep.subr.mxu0 0.0
        %1174 = vmatpush1.msra.mxu0 0.0
        %1175 = vmatprep.subr.mxu0 0.0
        %1176 = vmatpush1.msra.mxu0 0.0
        %1177 = vmatprep.subr.mxu0 0.0
        %1178 = vmatpush1.msra.mxu0 0.0
        %1179 = vmatprep.subr.mxu0 0.0
        %1180 = vmatpush1.msra.mxu0 0.0
        %1181 = vmatprep.subr.mxu0 0.0
        %1182 = vmatpush1.msra.mxu0 0.0
        %1183 = vmatprep.subr.mxu0 0.0
        %1184 = vmatpush1.msra.mxu0 0.0
        %1185 = vmatprep.subr.mxu0 0.0
        %1186 = vmatpush1.msra.mxu0 0.0
        %1187 = vmatprep.subr.mxu0 0.0
        %1188 = vmatpush1.msra.mxu0 0.0
        %1189 = vmatprep.subr.mxu0 0.0
        %1190 = vmatpush1.msra.mxu0 0.0
        %1191 = vmatprep.subr.mxu0 0.0
        %1192 = vmatpush1.msra.mxu0 0.0
        %1193 = vmatprep.subr.mxu0 0.0
        %1194 = vmatpush1.msra.mxu0 0.0
        %1195 = vmatprep.subr.mxu0 0.0
        %1196 = vmatpush1.msra.mxu0 0.0
        %1197 = vmatprep.subr.mxu0 0.0
        %1198 = vmatpush1.msra.mxu0 0.0
        %1199 = vmatprep.subr.mxu0 0.0
        %1200 = vmatpush1.msra.mxu0 0.0
        %1201 = vmatprep.subr.mxu0 0.0
        %1202 = vmatpush1.msra.mxu0 0.0
        %1203 = vmatprep.subr.mxu0 0.0
        %1204 = vmatpush1.msra.mxu0 0.0
        %1205 = vmatprep.subr.mxu0 0.0
        %1206 = vmatpush1.msra.mxu0 0.0
        %1207 = vmatprep.subr.mxu0 0.0
        %1208 = vmatpush1.msra.mxu0 0.0
        %1209 = vmatprep.subr.mxu0 0.0
        %1210 = vmatpush1.msra.mxu0 0.0
        %1211 = vmatprep.subr.mxu0 0.0
        %1212 = vmatpush1.msra.mxu0 0.0
        %1213 = vmatprep.subr.mxu0 0.0
        %1214 = vmatpush1.msra.mxu0 0.0
        %1215 = vmatprep.subr.mxu0 0.0
        %1216 = vmatpush1.msra.mxu0 0.0
        %1217 = vmatprep.mubr.f32.mxu0 0.0
        %1218 = vmatmul.mubr.f32.gmra.mrb[0].mxu0 %v1151
        %v1219 = vpop.f32.mrb[0].mxu0
        %v1220 = vadd.f32 0.0, %v1219
        %v1221 = vpop.f32.mrb[0].mxu0
        %1222 = vdwg.mxu0
        %1223 = vrot.lane.b32.xlu0 %v640, 32
        %v1224 = vpop.permute.xlu0 %1223
        %1225 = vrot.lane.b32.xlu0 %v642, 32
        %v1226 = vpop.permute.xlu0 %1225
        %v1227 = vsel %vm715, %v1224, 0
        %v1229 = vsel %vm715, %v1226, 0
        %1231 = vmatprep.subr.mxu0 0.0
        %1232 = vmatpush1.xpose.msra.mxu0 %v1229
        %1233 = vmatprep.subr.mxu0 0.0
        %1234 = vmatpush1.xpose.msra.mxu0 0.0
        %1235 = vmatprep.subr.mxu0 0.0
        %1236 = vmatpush1.xpose.msra.mxu0 0.0
        %1237 = vmatprep.subr.mxu0 0.0
        %1238 = vmatpush1.xpose.msra.mxu0 0.0
        %1239 = vmatprep.subr.mxu0 0.0
        %1240 = vmatpush1.xpose.msra.mxu0 0.0
        %1241 = vmatprep.subr.mxu0 0.0
        %1242 = vmatpush1.xpose.msra.mxu0 0.0
        %1243 = vmatprep.subr.mxu0 0.0
        %1244 = vmatpush1.xpose.msra.mxu0 0.0
        %1245 = vmatprep.subr.mxu0 0.0
        %1246 = vmatpush1.xpose.msra.mxu0 0.0
        %1247 = vmatprep.subr.mxu0 0.0
        %1248 = vmatpush1.xpose.msra.mxu0 0.0
        %1249 = vmatprep.subr.mxu0 0.0
        %1250 = vmatpush1.xpose.msra.mxu0 0.0
        %1251 = vmatprep.subr.mxu0 0.0
        %1252 = vmatpush1.xpose.msra.mxu0 0.0
        %1253 = vmatprep.subr.mxu0 0.0
        %1254 = vmatpush1.xpose.msra.mxu0 0.0
        %1255 = vmatprep.subr.mxu0 0.0
        %1256 = vmatpush1.xpose.msra.mxu0 0.0
        %1257 = vmatprep.subr.mxu0 0.0
        %1258 = vmatpush1.xpose.msra.mxu0 0.0
        %1259 = vmatprep.subr.mxu0 0.0
        %1260 = vmatpush1.xpose.msra.mxu0 0.0
        %1261 = vmatprep.subr.mxu0 0.0
        %1262 = vmatpush1.xpose.msra.mxu0 0.0
        %1263 = vmatprep.subr.mxu0 0.0
        %1264 = vmatpush1.xpose.msra.mxu0 0.0
        %1265 = vmatprep.subr.mxu0 0.0
        %1266 = vmatpush1.xpose.msra.mxu0 0.0
        %1267 = vmatprep.subr.mxu0 0.0
        %1268 = vmatpush1.xpose.msra.mxu0 0.0
        %1269 = vmatprep.subr.mxu0 0.0
        %1270 = vmatpush1.xpose.msra.mxu0 0.0
        %1271 = vmatprep.subr.mxu0 0.0
        %1272 = vmatpush1.xpose.msra.mxu0 0.0
        %1273 = vmatprep.subr.mxu0 0.0
        %1274 = vmatpush1.xpose.msra.mxu0 0.0
        %1275 = vmatprep.subr.mxu0 0.0
        %1276 = vmatpush1.xpose.msra.mxu0 0.0
        %1277 = vmatprep.subr.mxu0 0.0
        %1278 = vmatpush1.xpose.msra.mxu0 0.0
        %1279 = vmatprep.subr.mxu0 0.0
        %1280 = vmatpush1.xpose.msra.mxu0 0.0
        %1281 = vmatprep.subr.mxu0 0.0
        %1282 = vmatpush1.xpose.msra.mxu0 0.0
        %1283 = vmatprep.subr.mxu0 0.0
        %1284 = vmatpush1.xpose.msra.mxu0 0.0
        %1285 = vmatprep.subr.mxu0 0.0
        %1286 = vmatpush1.xpose.msra.mxu0 0.0
        %1287 = vmatprep.subr.mxu0 0.0
        %1288 = vmatpush1.xpose.msra.mxu0 0.0
        %1289 = vmatprep.subr.mxu0 0.0
        %1290 = vmatpush1.xpose.msra.mxu0 0.0
        %1291 = vmatprep.subr.mxu0 0.0
        %1292 = vmatpush1.xpose.msra.mxu0 0.0
        %1293 = vmatprep.subr.mxu0 0.0
        %1294 = vmatpush1.xpose.msra.mxu0 0.0
        %1295 = vmatprep.mubr.f32.mxu0 0.0
        %1296 = vmatmul.mubr.f32.gmra.mrb[0].mxu0 %v1227
        %v1297 = vpop.f32.mrb[0].mxu0
        %v1298 = vadd.f32 0.0, %v1297
        %v1299 = vpop.f32.mrb[0].mxu0
        %1300 = vdwg.mxu0
        %v1301 = vmul.f32 %v1298, 0.088388346
        %v1302 = vadd.f32 %v1301, %v714
        %v1303 = vsel %vm794, %v1302, -inf
        %1304 = vmax.xlane.f32.xlu0 %v1303
        %v1305 = vpop.xlane.xlu0 %1304
        %v1306 = vsub.f32 %v1302, %v1305
        %v1307 = vmul.f32 %v1306, 1.442695
        %v1308 = vpow.pop %v1307
        %v1309 = vsel %vm794, %v1308, 0.0
        %1310 = vadd.xlane.f32.xlu0 %v1309
        %v1311 = vpop.xlane.xlu0 %1310
        %v1312 = vrcp.pop %v1311
        %v1313 = vmul.f32 %v1311, %v1312
        %v1314 = vsub.f32 2.0, %v1313
        %v1315 = vmul.f32 %v1312, %v1314
        %v1316 = vmul.f32 %v1308, %v1315
        %1317 = vrot.lane.b32.xlu0 %v711, 32
        %v1318 = vpop.permute.xlu0 %1317
        %v1321 = vsel %vm794, %v1316, 0
        %1323 = vmatprep.subr.mxu0 0.0
        %1324 = vmatpush1.msra.mxu0 %v1318
        %1325 = vmatprep.subr.mxu0 0.0
        %1326 = vmatpush1.msra.mxu0 0.0
        %1327 = vmatprep.subr.mxu0 0.0
        %1328 = vmatpush1.msra.mxu0 0.0
        %1329 = vmatprep.subr.mxu0 0.0
        %1330 = vmatpush1.msra.mxu0 0.0
        %1331 = vmatprep.subr.mxu0 0.0
        %1332 = vmatpush1.msra.mxu0 0.0
        %1333 = vmatprep.subr.mxu0 0.0
        %1334 = vmatpush1.msra.mxu0 0.0
        %1335 = vmatprep.subr.mxu0 0.0
        %1336 = vmatpush1.msra.mxu0 0.0
        %1337 = vmatprep.subr.mxu0 0.0
        %1338 = vmatpush1.msra.mxu0 0.0
        %1339 = vmatprep.subr.mxu0 0.0
        %1340 = vmatpush1.msra.mxu0 0.0
        %1341 = vmatprep.subr.mxu0 0.0
        %1342 = vmatpush1.msra.mxu0 0.0
        %1343 = vmatprep.subr.mxu0 0.0
        %1344 = vmatpush1.msra.mxu0 0.0
        %1345 = vmatprep.subr.mxu0 0.0
        %1346 = vmatpush1.msra.mxu0 0.0
        %1347 = vmatprep.subr.mxu0 0.0
        %1348 = vmatpush1.msra.mxu0 0.0
        %1349 = vmatprep.subr.mxu0 0.0
        %1350 = vmatpush1.msra.mxu0 0.0
        %1351 = vmatprep.subr.mxu0 0.0
        %1352 = vmatpush1.msra.mxu0 0.0
        %1353 = vmatprep.subr.mxu0 0.0
        %1354 = vmatpush1.msra.mxu0 0.0
        %1355 = vmatprep.subr.mxu0 0.0
        %1356 = vmatpush1.msra.mxu0 0.0
        %1357 = vmatprep.subr.mxu0 0.0
        %1358 = vmatpush1.msra.mxu0 0.0
        %1359 = vmatprep.subr.mxu0 0.0
        %1360 = vmatpush1.msra.mxu0 0.0
        %1361 = vmatprep.subr.mxu0 0.0
        %1362 = vmatpush1.msra.mxu0 0.0
        %1363 = vmatprep.subr.mxu0 0.0
        %1364 = vmatpush1.msra.mxu0 0.0
        %1365 = vmatprep.subr.mxu0 0.0
        %1366 = vmatpush1.msra.mxu0 0.0
        %1367 = vmatprep.subr.mxu0 0.0
        %1368 = vmatpush1.msra.mxu0 0.0
        %1369 = vmatprep.subr.mxu0 0.0
        %1370 = vmatpush1.msra.mxu0 0.0
        %1371 = vmatprep.subr.mxu0 0.0
        %1372 = vmatpush1.msra.mxu0 0.0
        %1373 = vmatprep.subr.mxu0 0.0
        %1374 = vmatpush1.msra.mxu0 0.0
        %1375 = vmatprep.subr.mxu0 0.0
        %1376 = vmatpush1.msra.mxu0 0.0
        %1377 = vmatprep.subr.mxu0 0.0
        %1378 = vmatpush1.msra.mxu0 0.0
        %1379 = vmatprep.subr.mxu0 0.0
        %1380 = vmatpush1.msra.mxu0 0.0
        %1381 = vmatprep.subr.mxu0 0.0
        %1382 = vmatpush1.msra.mxu0 0.0
        %1383 = vmatprep.subr.mxu0 0.0
        %1384 = vmatpush1.msra.mxu0 0.0
        %1385 = vmatprep.subr.mxu0 0.0
        %1386 = vmatpush1.msra.mxu0 0.0
        %1387 = vmatprep.mubr.f32.mxu0 0.0
        %1388 = vmatmul.mubr.f32.gmra.mrb[0].mxu0 %v1321
        %v1389 = vpop.f32.mrb[0].mxu0
        %v1390 = vadd.f32 0.0, %v1389
        %v1391 = vpop.f32.mrb[0].mxu0
        %1392 = vdwg.mxu0
        %1394 = vrot.lane.b32.xlu0 %v1050, 32
        %v1395 = vpop.permute.xlu0 %1394
        %1398 = vrot.lane.b32.xlu0 %v1220, 64
        %v1399 = vpop.permute.xlu0 %1398
        %1402 = vrot.lane.b32.xlu0 %v1390, 96
        %v1403 = vpop.permute.xlu0 %1402
        %v1405 = vsel %vm715, %v879, %v1395
        %vm1406 = vcmask 523264
        %v1407 = vsel %vm1406, %v1405, %v1399
        %vm1408 = vcmask 785408
        %v1409 = vsel %vm1408, %v1407, %v1403
        %1410 = vst [vmem:[#allocation2] sm:$0xff] %v1409
        %v1411 = vld [vmem:[#allocation2] sm:$0xff]
        %v1412 = vld [vmem:[#allocation9] sm:$0xff]
        %v1413 = vld [vmem:[#allocation9 + $0x8] sm:$0xff]
        %v1414 = vld [vmem:[#allocation9 + $0x10] sm:$0xff]
        %v1415 = vld [vmem:[#allocation9 + $0x18] sm:$0xff]
        %v1416 = vld [vmem:[#allocation9 + $0x20] sm:$0xff]
        %v1417 = vld [vmem:[#allocation9 + $0x28] sm:$0xff]
        %v1418 = vld [vmem:[#allocation9 + $0x30] sm:$0xff]
        %v1419 = vld [vmem:[#allocation9 + $0x38] sm:$0xff]
        %v1420 = vld [vmem:[#allocation9 + $0x40] sm:$0xff]
        %v1421 = vld [vmem:[#allocation9 + $0x48] sm:$0xff]
        %v1422 = vld [vmem:[#allocation9 + $0x50] sm:$0xff]
        %v1423 = vld [vmem:[#allocation9 + $0x58] sm:$0xff]
        %v1424 = vld [vmem:[#allocation9 + $0x60] sm:$0xff]
        %v1425 = vld [vmem:[#allocation9 + $0x68] sm:$0xff]
        %v1426 = vld [vmem:[#allocation9 + $0x70] sm:$0xff]
        %v1427 = vld [vmem:[#allocation9 + $0x78] sm:$0xff]
        %1428 = vmatprep.subr.mxu0 0.0
        %1429 = vmatpush1.msra.mxu0 %v1412
        %1430 = vmatprep.subr.mxu0 0.0
        %1431 = vmatpush1.msra.mxu0 %v1413
        %1432 = vmatprep.subr.mxu0 0.0
        %1433 = vmatpush1.msra.mxu0 %v1414
        %1434 = vmatprep.subr.mxu0 0.0
        %1435 = vmatpush1.msra.mxu0 %v1415
        %1436 = vmatprep.subr.mxu0 0.0
        %1437 = vmatpush1.msra.mxu0 %v1416
        %1438 = vmatprep.subr.mxu0 0.0
        %1439 = vmatpush1.msra.mxu0 %v1417
        %1440 = vmatprep.subr.mxu0 0.0
        %1441 = vmatpush1.msra.mxu0 %v1418
        %1442 = vmatprep.subr.mxu0 0.0
        %1443 = vmatpush1.msra.mxu0 %v1419
        %1444 = vmatprep.subr.mxu0 0.0
        %1445 = vmatpush1.msra.mxu0 %v1420
        %1446 = vmatprep.subr.mxu0 0.0
        %1447 = vmatpush1.msra.mxu0 %v1421
        %1448 = vmatprep.subr.mxu0 0.0
        %1449 = vmatpush1.msra.mxu0 %v1422
        %1450 = vmatprep.subr.mxu0 0.0
        %1451 = vmatpush1.msra.mxu0 %v1423
        %1452 = vmatprep.subr.mxu0 0.0
        %1453 = vmatpush1.msra.mxu0 %v1424
        %1454 = vmatprep.subr.mxu0 0.0
        %1455 = vmatpush1.msra.mxu0 %v1425
        %1456 = vmatprep.subr.mxu0 0.0
        %1457 = vmatpush1.msra.mxu0 %v1426
        %1458 = vmatprep.subr.mxu0 0.0
        %1459 = vmatpush1.msra.mxu0 %v1427
        %1460 = vmatprep.subr.mxu0 0.0
        %1461 = vmatpush1.msra.mxu0 0.0
        %1462 = vmatprep.subr.mxu0 0.0
        %1463 = vmatpush1.msra.mxu0 0.0
        %1464 = vmatprep.subr.mxu0 0.0
        %1465 = vmatpush1.msra.mxu0 0.0
        %1466 = vmatprep.subr.mxu0 0.0
        %1467 = vmatpush1.msra.mxu0 0.0
        %1468 = vmatprep.subr.mxu0 0.0
        %1469 = vmatpush1.msra.mxu0 0.0
        %1470 = vmatprep.subr.mxu0 0.0
        %1471 = vmatpush1.msra.mxu0 0.0
        %1472 = vmatprep.subr.mxu0 0.0
        %1473 = vmatpush1.msra.mxu0 0.0
        %1474 = vmatprep.subr.mxu0 0.0
        %1475 = vmatpush1.msra.mxu0 0.0
        %1476 = vmatprep.subr.mxu0 0.0
        %1477 = vmatpush1.msra.mxu0 0.0
        %1478 = vmatprep.subr.mxu0 0.0
        %1479 = vmatpush1.msra.mxu0 0.0
        %1480 = vmatprep.subr.mxu0 0.0
        %1481 = vmatpush1.msra.mxu0 0.0
        %1482 = vmatprep.subr.mxu0 0.0
        %1483 = vmatpush1.msra.mxu0 0.0
        %1484 = vmatprep.subr.mxu0 0.0
        %1485 = vmatpush1.msra.mxu0 0.0
        %1486 = vmatprep.subr.mxu0 0.0
        %1487 = vmatpush1.msra.mxu0 0.0
        %1488 = vmatprep.subr.mxu0 0.0
        %1489 = vmatpush1.msra.mxu0 0.0
        %1490 = vmatprep.subr.mxu0 0.0
        %1491 = vmatpush1.msra.mxu0 0.0
        %1492 = vmatprep.mubr.f32.mxu0 0.0
        %1493 = vmatmul.mubr.f32.gmra.mrb[0].mxu0 %v1411
        %v1494 = vpop.f32.mrb[0].mxu0
        %v1495 = vadd.f32 %v524, %v1494
        %v1496 = vpop.f32.mrb[0].mxu0
        %1497 = vdwg.mxu0
        %v1498 = vld [vmem:[%s4] sm:$0x1]
        %v1499 = vld [vmem:[%s5] sm:$0x1]
        %1500 = vadd.xlane.f32.xlu0 %v1495
        %v1501 = vpop.xlane.xlu0 %1500
        %v1502 = vrcp.pop 128.0
        %v1503 = vmul.f32 %v1501, %v1502
        %v1504 = vmul.f32 %v1495, %v1495
        %1505 = vadd.xlane.f32.xlu0 %v1504
        %v1506 = vpop.xlane.xlu0 %1505
        %v1507 = vmul.f32 %v1506, %v1502
        %v1508 = vmul.f32 %v1503, %v1503
        %v1509 = vsub.f32 %v1507, %v1508
        %v1510 = vsub.f32 %v1495, %v1503
        %v1511 = vadd.f32 %v1509, 1e-05
        %v1512 = vrsqrt.pop %v1511
        %v1513 = vmul.f32 %v1510, %v1512
        %v1515 = vlaneseq
        %v1516 = vshrl.u32 %v1515, 7
        %v1517 = vsub.s32 0, %v1516
        %v1518 = vrot.slane %v1498, %v1517
        %v1520 = vmul.f32 %v1513, %v1518
        %v1522 = vlaneseq
        %v1523 = vshrl.u32 %v1522, 7
        %v1524 = vsub.s32 0, %v1523
        %v1525 = vrot.slane %v1499, %v1524
        %v1527 = vadd.f32 %v1520, %v1525
        %v1528 = vld [vmem:[#allocation11] sm:$0xff]
        %v1529 = vld [vmem:[#allocation11 + $0x8] sm:$0xff]
        %v1530 = vld [vmem:[#allocation11 + $0x10] sm:$0xff]
        %v1531 = vld [vmem:[#allocation11 + $0x18] sm:$0xff]
        %v1532 = vld [vmem:[#allocation11 + $0x20] sm:$0xff]
        %v1533 = vld [vmem:[#allocation11 + $0x28] sm:$0xff]
        %v1534 = vld [vmem:[#allocation11 + $0x30] sm:$0xff]
        %v1535 = vld [vmem:[#allocation11 + $0x38] sm:$0xff]
        %v1536 = vld [vmem:[#allocation11 + $0x40] sm:$0xff]
        %v1537 = vld [vmem:[#allocation11 + $0x48] sm:$0xff]
        %v1538 = vld [vmem:[#allocation11 + $0x50] sm:$0xff]
        %v1539 = vld [vmem:[#allocation11 + $0x58] sm:$0xff]
        %v1540 = vld [vmem:[#allocation11 + $0x60] sm:$0xff]
        %v1541 = vld [vmem:[#allocation11 + $0x68] sm:$0xff]
        %v1542 = vld [vmem:[#allocation11 + $0x70] sm:$0xff]
        %v1543 = vld [vmem:[#allocation11 + $0x78] sm:$0xff]
        %v1544 = vld [vmem:[#allocation11 + $0x80] sm:$0xff]
        %v1545 = vld [vmem:[#allocation11 + $0x88] sm:$0xff]
        %v1546 = vld [vmem:[#allocation11 + $0x90] sm:$0xff]
        %v1547 = vld [vmem:[#allocation11 + $0x98] sm:$0xff]
        %v1548 = vld [vmem:[#allocation11 + $0xa0] sm:$0xff]
        %v1549 = vld [vmem:[#allocation11 + $0xa8] sm:$0xff]
        %v1550 = vld [vmem:[#allocation11 + $0xb0] sm:$0xff]
        %v1551 = vld [vmem:[#allocation11 + $0xb8] sm:$0xff]
        %v1552 = vld [vmem:[#allocation11 + $0xc0] sm:$0xff]
        %v1553 = vld [vmem:[#allocation11 + $0xc8] sm:$0xff]
        %v1554 = vld [vmem:[#allocation11 + $0xd0] sm:$0xff]
        %v1555 = vld [vmem:[#allocation11 + $0xd8] sm:$0xff]
        %v1556 = vld [vmem:[#allocation11 + $0xe0] sm:$0xff]
        %v1557 = vld [vmem:[#allocation11 + $0xe8] sm:$0xff]
        %v1558 = vld [vmem:[#allocation11 + $0xf0] sm:$0xff]
        %v1559 = vld [vmem:[#allocation11 + $0xf8] sm:$0xff]
        %v1560 = vld [vmem:[#allocation11 + $0x100] sm:$0xff]
        %v1561 = vld [vmem:[#allocation11 + $0x108] sm:$0xff]
        %v1562 = vld [vmem:[#allocation11 + $0x110] sm:$0xff]
        %v1563 = vld [vmem:[#allocation11 + $0x118] sm:$0xff]
        %v1564 = vld [vmem:[#allocation11 + $0x120] sm:$0xff]
        %v1565 = vld [vmem:[#allocation11 + $0x128] sm:$0xff]
        %v1566 = vld [vmem:[#allocation11 + $0x130] sm:$0xff]
        %v1567 = vld [vmem:[#allocation11 + $0x138] sm:$0xff]
        %v1568 = vld [vmem:[#allocation11 + $0x140] sm:$0xff]
        %v1569 = vld [vmem:[#allocation11 + $0x148] sm:$0xff]
        %v1570 = vld [vmem:[#allocation11 + $0x150] sm:$0xff]
        %v1571 = vld [vmem:[#allocation11 + $0x158] sm:$0xff]
        %v1572 = vld [vmem:[#allocation11 + $0x160] sm:$0xff]
        %v1573 = vld [vmem:[#allocation11 + $0x168] sm:$0xff]
        %v1574 = vld [vmem:[#allocation11 + $0x170] sm:$0xff]
        %v1575 = vld [vmem:[#allocation11 + $0x178] sm:$0xff]
        %v1576 = vld [vmem:[#allocation11 + $0x180] sm:$0xff]
        %v1577 = vld [vmem:[#allocation11 + $0x188] sm:$0xff]
        %v1578 = vld [vmem:[#allocation11 + $0x190] sm:$0xff]
        %v1579 = vld [vmem:[#allocation11 + $0x198] sm:$0xff]
        %v1580 = vld [vmem:[#allocation11 + $0x1a0] sm:$0xff]
        %v1581 = vld [vmem:[#allocation11 + $0x1a8] sm:$0xff]
        %v1582 = vld [vmem:[#allocation11 + $0x1b0] sm:$0xff]
        %v1583 = vld [vmem:[#allocation11 + $0x1b8] sm:$0xff]
        %v1584 = vld [vmem:[#allocation11 + $0x1c0] sm:$0xff]
        %v1585 = vld [vmem:[#allocation11 + $0x1c8] sm:$0xff]
        %v1586 = vld [vmem:[#allocation11 + $0x1d0] sm:$0xff]
        %v1587 = vld [vmem:[#allocation11 + $0x1d8] sm:$0xff]
        %v1588 = vld [vmem:[#allocation11 + $0x1e0] sm:$0xff]
        %v1589 = vld [vmem:[#allocation11 + $0x1e8] sm:$0xff]
        %v1590 = vld [vmem:[#allocation11 + $0x1f0] sm:$0xff]
        %v1591 = vld [vmem:[#allocation11 + $0x1f8] sm:$0xff]
        %v1592 = vld [vmem:[%s9] sm:$0xf]
        %v1594 = vlaneseq
        %v1595 = vshrl.u32 %v1594, 7
        %v1596 = vsub.s32 0, %v1595
        %v1597 = vrot.slane %v1592, %v1596
        %v1598 = vlaneseq
        %v1599 = vshrl.u32 %v1598, 7
        %v1600 = vsub.s32 1, %v1599
        %v1601 = vrot.slane %v1592, %v1600
        %v1602 = vlaneseq
        %v1603 = vshrl.u32 %v1602, 7
        %v1604 = vsub.s32 2, %v1603
        %v1605 = vrot.slane %v1592, %v1604
        %v1606 = vlaneseq
        %v1607 = vshrl.u32 %v1606, 7
        %v1608 = vsub.s32 3, %v1607
        %v1609 = vrot.slane %v1592, %v1608
        %1614 = vmatprep.subr.mxu0 %v1529
        %1615 = vmatpush1.msra.mxu0 %v1528
        %1616 = vmatprep.subr.mxu0 %v1533
        %1617 = vmatpush1.msra.mxu0 %v1532
        %1618 = vmatprep.subr.mxu0 %v1537
        %1619 = vmatpush1.msra.mxu0 %v1536
        %1620 = vmatprep.subr.mxu0 %v1541
        %1621 = vmatpush1.msra.mxu0 %v1540
        %1622 = vmatprep.subr.mxu0 %v1545
        %1623 = vmatpush1.msra.mxu0 %v1544
        %1624 = vmatprep.subr.mxu0 %v1549
        %1625 = vmatpush1.msra.mxu0 %v1548
        %1626 = vmatprep.subr.mxu0 %v1553
        %1627 = vmatpush1.msra.mxu0 %v1552
        %1628 = vmatprep.subr.mxu0 %v1557
        %1629 = vmatpush1.msra.mxu0 %v1556
        %1630 = vmatprep.subr.mxu0 %v1561
        %1631 = vmatpush1.msra.mxu0 %v1560
        %1632 = vmatprep.subr.mxu0 %v1565
        %1633 = vmatpush1.msra.mxu0 %v1564
        %1634 = vmatprep.subr.mxu0 %v1569
        %1635 = vmatpush1.msra.mxu0 %v1568
        %1636 = vmatprep.subr.mxu0 %v1573
        %1637 = vmatpush1.msra.mxu0 %v1572
        %1638 = vmatprep.subr.mxu0 %v1577
        %1639 = vmatpush1.msra.mxu0 %v1576
        %1640 = vmatprep.subr.mxu0 %v1581
        %1641 = vmatpush1.msra.mxu0 %v1580
        %1642 = vmatprep.subr.mxu0 %v1585
        %1643 = vmatpush1.msra.mxu0 %v1584
        %1644 = vmatprep.subr.mxu0 %v1589
        %1645 = vmatpush1.msra.mxu0 %v1588
        %1646 = vmatprep.subr.mxu0 0.0
        %1647 = vmatpush1.msra.mxu0 0.0
        %1648 = vmatprep.subr.mxu0 0.0
        %1649 = vmatpush1.msra.mxu0 0.0
        %1650 = vmatprep.subr.mxu0 0.0
        %1651 = vmatpush1.msra.mxu0 0.0
        %1652 = vmatprep.subr.mxu0 0.0
        %1653 = vmatpush1.msra.mxu0 0.0
        %1654 = vmatprep.subr.mxu0 0.0
        %1655 = vmatpush1.msra.mxu0 0.0
        %1656 = vmatprep.subr.mxu0 0.0
        %1657 = vmatpush1.msra.mxu0 0.0
        %1658 = vmatprep.subr.mxu0 0.0
        %1659 = vmatpush1.msra.mxu0 0.0
        %1660 = vmatprep.subr.mxu0 0.0
        %1661 = vmatpush1.msra.mxu0 0.0
        %1662 = vmatprep.subr.mxu0 0.0
        %1663 = vmatpush1.msra.mxu0 0.0
        %1664 = vmatprep.subr.mxu0 0.0
        %1665 = vmatpush1.msra.mxu0 0.0
        %1666 = vmatprep.subr.mxu0 0.0
        %1667 = vmatpush1.msra.mxu0 0.0
        %1668 = vmatprep.subr.mxu0 0.0
        %1669 = vmatpush1.msra.mxu0 0.0
        %1670 = vmatprep.subr.mxu0 0.0
        %1671 = vmatpush1.msra.mxu0 0.0
        %1672 = vmatprep.subr.mxu0 0.0
        %1673 = vmatpush1.msra.mxu0 0.0
        %1674 = vmatprep.subr.mxu0 0.0
        %1675 = vmatpush1.msra.mxu0 0.0
        %1676 = vmatprep.subr.mxu0 0.0
        %1677 = vmatpush1.msra.mxu0 0.0
        %1678 = vmatprep.mubr.f32.mxu0 0.0
        %1679 = vmatmul.mubr.f32.gmra.mrb[0].mxu0 %v1527
        %v1680 = vpop.f32.mrb[0].mxu0
        %v1681 = vadd.f32 %v1597, %v1680
        %v1682 = vpop.f32.mrb[0].mxu0
        %v1683 = vadd.f32 %v1601, %v1682
        %1684 = vdwg.mxu0
        %1685 = vmatprep.subr.mxu0 %v1531
        %1686 = vmatpush1.msra.mxu0 %v1530
        %1687 = vmatprep.subr.mxu0 %v1535
        %1688 = vmatpush1.msra.mxu0 %v1534
        %1689 = vmatprep.subr.mxu0 %v1539
        %1690 = vmatpush1.msra.mxu0 %v1538
        %1691 = vmatprep.subr.mxu0 %v1543
        %1692 = vmatpush1.msra.mxu0 %v1542
        %1693 = vmatprep.subr.mxu0 %v1547
        %1694 = vmatpush1.msra.mxu0 %v1546
        %1695 = vmatprep.subr.mxu0 %v1551
        %1696 = vmatpush1.msra.mxu0 %v1550
        %1697 = vmatprep.subr.mxu0 %v1555
        %1698 = vmatpush1.msra.mxu0 %v1554
        %1699 = vmatprep.subr.mxu0 %v1559
        %1700 = vmatpush1.msra.mxu0 %v1558
        %1701 = vmatprep.subr.mxu0 %v1563
        %1702 = vmatpush1.msra.mxu0 %v1562
        %1703 = vmatprep.subr.mxu0 %v1567
        %1704 = vmatpush1.msra.mxu0 %v1566
        %1705 = vmatprep.subr.mxu0 %v1571
        %1706 = vmatpush1.msra.mxu0 %v1570
        %1707 = vmatprep.subr.mxu0 %v1575
        %1708 = vmatpush1.msra.mxu0 %v1574
        %1709 = vmatprep.subr.mxu0 %v1579
        %1710 = vmatpush1.msra.mxu0 %v1578
        %1711 = vmatprep.subr.mxu0 %v1583
        %1712 = vmatpush1.msra.mxu0 %v1582
        %1713 = vmatprep.subr.mxu0 %v1587
        %1714 = vmatpush1.msra.mxu0 %v1586
        %1715 = vmatprep.subr.mxu0 %v1591
        %1716 = vmatpush1.msra.mxu0 %v1590
        %1717 = vmatprep.subr.mxu0 0.0
        %1718 = vmatpush1.msra.mxu0 0.0
        %1719 = vmatprep.subr.mxu0 0.0
        %1720 = vmatpush1.msra.mxu0 0.0
        %1721 = vmatprep.subr.mxu0 0.0
        %1722 = vmatpush1.msra.mxu0 0.0
        %1723 = vmatprep.subr.mxu0 0.0
        %1724 = vmatpush1.msra.mxu0 0.0
        %1725 = vmatprep.subr.mxu0 0.0
        %1726 = vmatpush1.msra.mxu0 0.0
        %1727 = vmatprep.subr.mxu0 0.0
        %1728 = vmatpush1.msra.mxu0 0.0
        %1729 = vmatprep.subr.mxu0 0.0
        %1730 = vmatpush1.msra.mxu0 0.0
        %1731 = vmatprep.subr.mxu0 0.0
        %1732 = vmatpush1.msra.mxu0 0.0
        %1733 = vmatprep.subr.mxu0 0.0
        %1734 = vmatpush1.msra.mxu0 0.0
        %1735 = vmatprep.subr.mxu0 0.0
        %1736 = vmatpush1.msra.mxu0 0.0
        %1737 = vmatprep.subr.mxu0 0.0
        %1738 = vmatpush1.msra.mxu0 0.0
        %1739 = vmatprep.subr.mxu0 0.0
        %1740 = vmatpush1.msra.mxu0 0.0
        %1741 = vmatprep.subr.mxu0 0.0
        %1742 = vmatpush1.msra.mxu0 0.0
        %1743 = vmatprep.subr.mxu0 0.0
        %1744 = vmatpush1.msra.mxu0 0.0
        %1745 = vmatprep.subr.mxu0 0.0
        %1746 = vmatpush1.msra.mxu0 0.0
        %1747 = vmatprep.subr.mxu0 0.0
        %1748 = vmatpush1.msra.mxu0 0.0
        %1749 = vmatprep.mubr.f32.mxu0 0.0
        %1750 = vmatmul.mubr.f32.gmra.mrb[0].mxu0 %v1527
        %v1751 = vpop.f32.mrb[0].mxu0
        %v1752 = vadd.f32 %v1605, %v1751
        %v1753 = vpop.f32.mrb[0].mxu0
        %v1754 = vadd.f32 %v1609, %v1753
        %1755 = vdwg.mxu0
        %v1756 = vmax.f32 %v1681, 0.0
        %v1757 = vmax.f32 %v1683, 0.0
        %v1758 = vmax.f32 %v1752, 0.0
        %v1759 = vmax.f32 %v1754, 0.0
        %v1760 = vld [vmem:[#allocation12] sm:$0xff]
        %v1761 = vld [vmem:[#allocation12 + $0x8] sm:$0xff]
        %v1762 = vld [vmem:[#allocation12 + $0x10] sm:$0xff]
        %v1763 = vld [vmem:[#allocation12 + $0x18] sm:$0xff]
        %v1764 = vld [vmem:[#allocation12 + $0x20] sm:$0xff]
        %v1765 = vld [vmem:[#allocation12 + $0x28] sm:$0xff]
        %v1766 = vld [vmem:[#allocation12 + $0x30] sm:$0xff]
        %v1767 = vld [vmem:[#allocation12 + $0x38] sm:$0xff]
        %v1768 = vld [vmem:[#allocation12 + $0x40] sm:$0xff]
        %v1769 = vld [vmem:[#allocation12 + $0x48] sm:$0xff]
        %v1770 = vld [vmem:[#allocation12 + $0x50] sm:$0xff]
        %v1771 = vld [vmem:[#allocation12 + $0x58] sm:$0xff]
        %v1772 = vld [vmem:[#allocation12 + $0x60] sm:$0xff]
        %v1773 = vld [vmem:[#allocation12 + $0x68] sm:$0xff]
        %v1774 = vld [vmem:[#allocation12 + $0x70] sm:$0xff]
        %v1775 = vld [vmem:[#allocation12 + $0x78] sm:$0xff]
        %v1776 = vld [vmem:[#allocation12 + $0x80] sm:$0xff]
        %v1777 = vld [vmem:[#allocation12 + $0x88] sm:$0xff]
        %v1778 = vld [vmem:[#allocation12 + $0x90] sm:$0xff]
        %v1779 = vld [vmem:[#allocation12 + $0x98] sm:$0xff]
        %v1780 = vld [vmem:[#allocation12 + $0xa0] sm:$0xff]
        %v1781 = vld [vmem:[#allocation12 + $0xa8] sm:$0xff]
        %v1782 = vld [vmem:[#allocation12 + $0xb0] sm:$0xff]
        %v1783 = vld [vmem:[#allocation12 + $0xb8] sm:$0xff]
        %v1784 = vld [vmem:[#allocation12 + $0xc0] sm:$0xff]
        %v1785 = vld [vmem:[#allocation12 + $0xc8] sm:$0xff]
        %v1786 = vld [vmem:[#allocation12 + $0xd0] sm:$0xff]
        %v1787 = vld [vmem:[#allocation12 + $0xd8] sm:$0xff]
        %v1788 = vld [vmem:[#allocation12 + $0xe0] sm:$0xff]
        %v1789 = vld [vmem:[#allocation12 + $0xe8] sm:$0xff]
        %v1790 = vld [vmem:[#allocation12 + $0xf0] sm:$0xff]
        %v1791 = vld [vmem:[#allocation12 + $0xf8] sm:$0xff]
        %v1792 = vld [vmem:[#allocation12 + $0x100] sm:$0xff]
        %v1793 = vld [vmem:[#allocation12 + $0x108] sm:$0xff]
        %v1794 = vld [vmem:[#allocation12 + $0x110] sm:$0xff]
        %v1795 = vld [vmem:[#allocation12 + $0x118] sm:$0xff]
        %v1796 = vld [vmem:[#allocation12 + $0x120] sm:$0xff]
        %v1797 = vld [vmem:[#allocation12 + $0x128] sm:$0xff]
        %v1798 = vld [vmem:[#allocation12 + $0x130] sm:$0xff]
        %v1799 = vld [vmem:[#allocation12 + $0x138] sm:$0xff]
        %v1800 = vld [vmem:[#allocation12 + $0x140] sm:$0xff]
        %v1801 = vld [vmem:[#allocation12 + $0x148] sm:$0xff]
        %v1802 = vld [vmem:[#allocation12 + $0x150] sm:$0xff]
        %v1803 = vld [vmem:[#allocation12 + $0x158] sm:$0xff]
        %v1804 = vld [vmem:[#allocation12 + $0x160] sm:$0xff]
        %v1805 = vld [vmem:[#allocation12 + $0x168] sm:$0xff]
        %v1806 = vld [vmem:[#allocation12 + $0x170] sm:$0xff]
        %v1807 = vld [vmem:[#allocation12 + $0x178] sm:$0xff]
        %v1808 = vld [vmem:[#allocation12 + $0x180] sm:$0xff]
        %v1809 = vld [vmem:[#allocation12 + $0x188] sm:$0xff]
        %v1810 = vld [vmem:[#allocation12 + $0x190] sm:$0xff]
        %v1811 = vld [vmem:[#allocation12 + $0x198] sm:$0xff]
        %v1812 = vld [vmem:[#allocation12 + $0x1a0] sm:$0xff]
        %v1813 = vld [vmem:[#allocation12 + $0x1a8] sm:$0xff]
        %v1814 = vld [vmem:[#allocation12 + $0x1b0] sm:$0xff]
        %v1815 = vld [vmem:[#allocation12 + $0x1b8] sm:$0xff]
        %v1816 = vld [vmem:[#allocation12 + $0x1c0] sm:$0xff]
        %v1817 = vld [vmem:[#allocation12 + $0x1c8] sm:$0xff]
        %v1818 = vld [vmem:[#allocation12 + $0x1d0] sm:$0xff]
        %v1819 = vld [vmem:[#allocation12 + $0x1d8] sm:$0xff]
        %v1820 = vld [vmem:[#allocation12 + $0x1e0] sm:$0xff]
        %v1821 = vld [vmem:[#allocation12 + $0x1e8] sm:$0xff]
        %v1822 = vld [vmem:[#allocation12 + $0x1f0] sm:$0xff]
        %v1823 = vld [vmem:[#allocation12 + $0x1f8] sm:$0xff]
        %v1824 = vld [vmem:[%s11] sm:$0x1]
        %v1826 = vlaneseq
        %v1827 = vshrl.u32 %v1826, 7
        %v1828 = vsub.s32 0, %v1827
        %v1829 = vrot.slane %v1824, %v1828
        %1831 = vmatprep.subr.mxu0 0.0
        %1832 = vmatpush1.msra.mxu0 %v1760
        %1833 = vmatprep.subr.mxu0 0.0
        %1834 = vmatpush1.msra.mxu0 %v1761
        %1835 = vmatprep.subr.mxu0 0.0
        %1836 = vmatpush1.msra.mxu0 %v1762
        %1837 = vmatprep.subr.mxu0 0.0
        %1838 = vmatpush1.msra.mxu0 %v1763
        %1839 = vmatprep.subr.mxu0 0.0
        %1840 = vmatpush1.msra.mxu0 %v1764
        %1841 = vmatprep.subr.mxu0 0.0
        %1842 = vmatpush1.msra.mxu0 %v1765
        %1843 = vmatprep.subr.mxu0 0.0
        %1844 = vmatpush1.msra.mxu0 %v1766
        %1845 = vmatprep.subr.mxu0 0.0
        %1846 = vmatpush1.msra.mxu0 %v1767
        %1847 = vmatprep.subr.mxu0 0.0
        %1848 = vmatpush1.msra.mxu0 %v1768
        %1849 = vmatprep.subr.mxu0 0.0
        %1850 = vmatpush1.msra.mxu0 %v1769
        %1851 = vmatprep.subr.mxu0 0.0
        %1852 = vmatpush1.msra.mxu0 %v1770
        %1853 = vmatprep.subr.mxu0 0.0
        %1854 = vmatpush1.msra.mxu0 %v1771
        %1855 = vmatprep.subr.mxu0 0.0
        %1856 = vmatpush1.msra.mxu0 %v1772
        %1857 = vmatprep.subr.mxu0 0.0
        %1858 = vmatpush1.msra.mxu0 %v1773
        %1859 = vmatprep.subr.mxu0 0.0
        %1860 = vmatpush1.msra.mxu0 %v1774
        %1861 = vmatprep.subr.mxu0 0.0
        %1862 = vmatpush1.msra.mxu0 %v1775
        %1863 = vmatprep.subr.mxu0 0.0
        %1864 = vmatpush1.msra.mxu0 %v1776
        %1865 = vmatprep.subr.mxu0 0.0
        %1866 = vmatpush1.msra.mxu0 %v1777
        %1867 = vmatprep.subr.mxu0 0.0
        %1868 = vmatpush1.msra.mxu0 %v1778
        %1869 = vmatprep.subr.mxu0 0.0
        %1870 = vmatpush1.msra.mxu0 %v1779
        %1871 = vmatprep.subr.mxu0 0.0
        %1872 = vmatpush1.msra.mxu0 %v1780
        %1873 = vmatprep.subr.mxu0 0.0
        %1874 = vmatpush1.msra.mxu0 %v1781
        %1875 = vmatprep.subr.mxu0 0.0
        %1876 = vmatpush1.msra.mxu0 %v1782
        %1877 = vmatprep.subr.mxu0 0.0
        %1878 = vmatpush1.msra.mxu0 %v1783
        %1879 = vmatprep.subr.mxu0 0.0
        %1880 = vmatpush1.msra.mxu0 %v1784
        %1881 = vmatprep.subr.mxu0 0.0
        %1882 = vmatpush1.msra.mxu0 %v1785
        %1883 = vmatprep.subr.mxu0 0.0
        %1884 = vmatpush1.msra.mxu0 %v1786
        %1885 = vmatprep.subr.mxu0 0.0
        %1886 = vmatpush1.msra.mxu0 %v1787
        %1887 = vmatprep.subr.mxu0 0.0
        %1888 = vmatpush1.msra.mxu0 %v1788
        %1889 = vmatprep.subr.mxu0 0.0
        %1890 = vmatpush1.msra.mxu0 %v1789
        %1891 = vmatprep.subr.mxu0 0.0
        %1892 = vmatpush1.msra.mxu0 %v1790
        %1893 = vmatprep.subr.mxu0 0.0
        %1894 = vmatpush1.msra.mxu0 %v1791
        %1895 = vmatprep.mubr.f32.mxu0 %v1757
        %1896 = vmatmul.mubr.f32.gmra.mrb[0].mxu0 %v1756
        %v1897 = vpop.f32.mrb[0].mxu0
        %v1898 = vadd.f32 %v1829, %v1897
        %v1899 = vpop.f32.mrb[0].mxu0
        %1900 = vdwg.mxu0
        %1901 = vmatprep.subr.mxu0 0.0
        %1902 = vmatpush1.msra.mxu0 %v1792
        %1903 = vmatprep.subr.mxu0 0.0
        %1904 = vmatpush1.msra.mxu0 %v1793
        %1905 = vmatprep.subr.mxu0 0.0
        %1906 = vmatpush1.msra.mxu0 %v1794
        %1907 = vmatprep.subr.mxu0 0.0
        %1908 = vmatpush1.msra.mxu0 %v1795
        %1909 = vmatprep.subr.mxu0 0.0
        %1910 = vmatpush1.msra.mxu0 %v1796
        %1911 = vmatprep.subr.mxu0 0.0
        %1912 = vmatpush1.msra.mxu0 %v1797
        %1913 = vmatprep.subr.mxu0 0.0
        %1914 = vmatpush1.msra.mxu0 %v1798
        %1915 = vmatprep.subr.mxu0 0.0
        %1916 = vmatpush1.msra.mxu0 %v1799
        %1917 = vmatprep.subr.mxu0 0.0
        %1918 = vmatpush1.msra.mxu0 %v1800
        %1919 = vmatprep.subr.mxu0 0.0
        %1920 = vmatpush1.msra.mxu0 %v1801
        %1921 = vmatprep.subr.mxu0 0.0
        %1922 = vmatpush1.msra.mxu0 %v1802
        %1923 = vmatprep.subr.mxu0 0.0
        %1924 = vmatpush1.msra.mxu0 %v1803
        %1925 = vmatprep.subr.mxu0 0.0
        %1926 = vmatpush1.msra.mxu0 %v1804
        %1927 = vmatprep.subr.mxu0 0.0
        %1928 = vmatpush1.msra.mxu0 %v1805
        %1929 = vmatprep.subr.mxu0 0.0
        %1930 = vmatpush1.msra.mxu0 %v1806
        %1931 = vmatprep.subr.mxu0 0.0
        %1932 = vmatpush1.msra.mxu0 %v1807
        %1933 = vmatprep.subr.mxu0 0.0
        %1934 = vmatpush1.msra.mxu0 %v1808
        %1935 = vmatprep.subr.mxu0 0.0
        %1936 = vmatpush1.msra.mxu0 %v1809
        %1937 = vmatprep.subr.mxu0 0.0
        %1938 = vmatpush1.msra.mxu0 %v1810
        %1939 = vmatprep.subr.mxu0 0.0
        %1940 = vmatpush1.msra.mxu0 %v1811
        %1941 = vmatprep.subr.mxu0 0.0
        %1942 = vmatpush1.msra.mxu0 %v1812
        %1943 = vmatprep.subr.mxu0 0.0
        %1944 = vmatpush1.msra.mxu0 %v1813
        %1945 = vmatprep.subr.mxu0 0.0
        %1946 = vmatpush1.msra.mxu0 %v1814
        %1947 = vmatprep.subr.mxu0 0.0
        %1948 = vmatpush1.msra.mxu0 %v1815
        %1949 = vmatprep.subr.mxu0 0.0
        %1950 = vmatpush1.msra.mxu0 %v1816
        %1951 = vmatprep.subr.mxu0 0.0
        %1952 = vmatpush1.msra.mxu0 %v1817
        %1953 = vmatprep.subr.mxu0 0.0
        %1954 = vmatpush1.msra.mxu0 %v1818
        %1955 = vmatprep.subr.mxu0 0.0
        %1956 = vmatpush1.msra.mxu0 %v1819
        %1957 = vmatprep.subr.mxu0 0.0
        %1958 = vmatpush1.msra.mxu0 %v1820
        %1959 = vmatprep.subr.mxu0 0.0
        %1960 = vmatpush1.msra.mxu0 %v1821
        %1961 = vmatprep.subr.mxu0 0.0
        %1962 = vmatpush1.msra.mxu0 %v1822
        %1963 = vmatprep.subr.mxu0 0.0
        %1964 = vmatpush1.msra.mxu0 %v1823
        %1965 = vmatprep.mubr.f32.mxu0 %v1759
        %1966 = vmatmul.mubr.f32.gmra.mrb[0].mxu0 %v1758
        %v1967 = vpop.f32.mrb[0].mxu0
        %v1968 = vadd.f32 %v1898, %v1967
        %v1969 = vpop.f32.mrb[0].mxu0
        %1970 = vdwg.mxu0
        %v1971 = vadd.f32 %v1527, %v1968
        %v1972 = vld [vmem:[%s6] sm:$0x1]
        %v1973 = vld [vmem:[%s7] sm:$0x1]
        %1974 = vadd.xlane.f32.xlu0 %v1971
        %v1975 = vpop.xlane.xlu0 %1974
        %v1976 = vmul.f32 %v1975, %v1502
        %v1977 = vmul.f32 %v1971, %v1971
        %1978 = vadd.xlane.f32.xlu0 %v1977
        %v1979 = vpop.xlane.xlu0 %1978
        %v1980 = vmul.f32 %v1979, %v1502
        %v1981 = vmul.f32 %v1976, %v1976
        %v1982 = vsub.f32 %v1980, %v1981
        %v1983 = vsub.f32 %v1971, %v1976
        %v1984 = vadd.f32 %v1982, 1e-05
        %v1985 = vrsqrt.pop %v1984
        %v1986 = vmul.f32 %v1983, %v1985
        %v1988 = vlaneseq
        %v1989 = vshrl.u32 %v1988, 7
        %v1990 = vsub.s32 0, %v1989
        %v1991 = vrot.slane %v1972, %v1990
        %v1993 = vmul.f32 %v1986, %v1991
        %v1995 = vlaneseq
        %v1996 = vshrl.u32 %v1995, 7
        %v1997 = vsub.s32 0, %v1996
        %v1998 = vrot.slane %v1973, %v1997
        %v2000 = vadd.f32 %v1993, %v1998
        %2001 = vst [vmem:[%s523] sm:$0xff] %v2000
        %s2002 = sand.u32 %s304, 1
        %s2003 = scalar_lea.sflag [#allocation5], %s2002
        %s2004 = sand.u32 %s304, 1
        %s2005 = smul.addr %s2004, 8
        %s2006 = scalar_lea.vmem [#allocation14], %s2005
        // Predicated region
        $region93: #{tpu_custom_call.1} parent=67 // pred_check
          %p2007 = pneg %p314
        $region94: #{tpu_custom_call.1} parent=67 // pred_check_branch
          %2009 = sbr.rel (%p2007) target = $region96
        $region95: #{tpu_custom_call.1} parent=67 // pred_region
          %s2011 = ssub.s32 128, 128
          %2012 = vsyncadd %s2003, %s2011
          %s2013 = smul.addr %s34, 128
          %s2014 = scalar_lea.hbm %s12, %s2013
          %s2016 = sshll.u32 %s2006, 4
          %s2017 = int_to_ptr.vmem [resolvable:$true] %s2016
          %2019 = dma.vmem_to_hbm [thread:$0]  %s2017, 128, %s2014, %s2003
        $region96: #{tpu_custom_call.1} parent=67 // pred_fallthru
          _
      $region68: #{tpu_custom_call.1} parent=5 // pred_fallthru
        _
      %p2020 = scmp.le.s32.totalorder 2, %s29
      // Predicated region
      $region97: #{tpu_custom_call.1} parent=5 // pred_check
        %p2021 = pneg %p2020
      $region98: #{tpu_custom_call.1} parent=5 // pred_check_branch
        %2023 = sbr.rel (%p2021) target = $region100
      $region99: #{tpu_custom_call.1} parent=5 // pred_region
        %s2024 = ssub.s32 %s29, 2
        // Predicated region
        $region101: #{tpu_custom_call.1} parent=99 // pred_check
          %p2025 = pneg %p320
        $region102: #{tpu_custom_call.1} parent=99 // pred_check_branch
          %2027 = sbr.rel (%p2025) target = $region104
        $region103: #{tpu_custom_call.1} parent=99 // pred_region
          %s2028 = sand.u32 %s305, 1
          %s2029 = scalar_lea.sflag [#allocation5], %s2028
          %s2030 = sand.u32 %s305, 1
          %s2031 = smul.addr %s2030, 8
          %s2032 = scalar_lea.vmem [#allocation14], %s2031
          %2033 = dma.done %s2029, 128
        $region104: #{tpu_custom_call.1} parent=99 // pred_fallthru
          _
      $region100: #{tpu_custom_call.1} parent=5 // pred_fallthru
        _
    $region6: #{tpu_custom_call.1} parent=1 // loop_footer
      %s33 = sadd.s32 1, %s29
    $region7: #{tpu_custom_call.1} parent=1 // loop_footer_branch
      %28 = sbr.rel target = $region3
    $region8: #{tpu_custom_call.1} parent=1 // loop_exit
      _
    %2034 = vsyncpa [#allocation4], 1
    %s2035 = scalar_lea.sflag [#allocation4], 1
    %2036 = vsyncpa %s2035, 1
    %2037 = vsyncpa [#allocation7], 1
    %s2038 = scalar_lea.sflag [#allocation7], 1
    %2039 = vsyncpa %s2038, 1
    %2040 = vsyncpa [#allocation10], 1
    %2041 = vsyncpa [#allocation13], 1
    %2042 = vsyncpa [#allocation5], 1
    %s2043 = scalar_lea.sflag [#allocation5], 1
    %2044 = vsyncpa %s2043, 1

// kernel: tpu_custom_call.1
$region0: #{tpu_custom_call.1}
  #allocation0 [shape = 'u32[]', space=smem, size = 0x4, offset = 0x4, fixed_abs, tag = 'smem constant byte address 0x4 - core index']
  #allocation1 [shape = 'u32[144,128]{1,0:T(1,128)}', space=vmem, size = 0x12000, scoped, tag = 'internal scratch']
  #allocation2 [shape = 'f32[8,128]{1,0:T(8,128)}', space=vmem, size = 0x1000, scoped, tag = 'scratch operand']
  %s0 = inlined_call_operand.hbm [shape: f32[2,8,128], index: 0, kind: input, shape index: {}]
  %s1 = inlined_call_operand.hbm [shape: f32[2,8,8], index: 1, kind: input, shape index: {}]
  %s2 = inlined_call_operand.hbm [shape: f32[128,384], index: 2, kind: input, shape index: {}]
  %s3 = inlined_call_operand.hbm [shape: f32[128,128], index: 3, kind: input, shape index: {}]
  %s4 = inlined_call_operand.vmem [shape: f32[1,128], index: 4, kind: input, shape index: {}]
  %s5 = inlined_call_operand.vmem [shape: f32[1,128], index: 5, kind: input, shape index: {}]
  %s6 = inlined_call_operand.vmem [shape: f32[1,128], index: 6, kind: input, shape index: {}]
  %s7 = inlined_call_operand.vmem [shape: f32[1,128], index: 7, kind: input, shape index: {}]
  %s8 = inlined_call_operand.hbm [shape: f32[128,512], index: 8, kind: input, shape index: {}]
  %s9 = inlined_call_operand.vmem [shape: f32[1,512], index: 9, kind: input, shape index: {}]
  %s10 = inlined_call_operand.hbm [shape: f32[512,128], index: 10, kind: input, shape index: {}]
  %s11 = inlined_call_operand.vmem [shape: f32[1,128], index: 11, kind: input, shape index: {}]
  %s12 = inlined_call_operand.hbm [shape: f32[2,8,128], index: 12, kind: output, shape index: {}]
  %s13 = sld [smem:[#allocation0]]
  $region105: #{tpu_custom_call.1} parent=0
    _
  %s15 = ssub.s32 1, %s13
  %s16 = scalar_select 0, %s15, %s13
  $region1: #{tpu_custom_call.1} parent=0
    #allocation3 [shape = 'u8[8192]{0}', space=vmem, size = 0x2000, scoped, tag = 'input window, operand 0']
    #allocation4 [shape = 's32[2]{0}', space=sflag, size = 0x8, scoped, tag = 'scoped memory for tpu_custom_call.1']
    #allocation5 [shape = 's32[2]{0}', space=sflag, size = 0x8, scoped, tag = 'scoped memory for tpu_custom_call.1']
    #allocation6 [shape = 'u8[8192]{0}', space=vmem, size = 0x2000, scoped, tag = 'input window, operand 1']
    #allocation7 [shape = 's32[2]{0}', space=sflag, size = 0x8, scoped, tag = 'scoped memory for tpu_custom_call.1']
    #allocation8 [shape = 'u8[196608]{0}', space=vmem, size = 0x30000, scoped, tag = 'input window, operand 2, single buffered']
    #allocation9 [shape = 'u8[65536]{0}', space=vmem, size = 0x10000, scoped, tag = 'input window, operand 3, single buffered']
    #allocation10 [shape = 's32[1]{0}', space=sflag, size = 0x4, scoped, tag = 'scoped memory for tpu_custom_call.1']
    #allocation11 [shape = 'u8[262144]{0}', space=vmem, size = 0x40000, scoped, tag = 'input window, operand 8, single buffered']
    #allocation12 [shape = 'u8[262144]{0}', space=vmem, size = 0x40000, scoped, tag = 'input window, operand 10, single buffered']
    #allocation13 [shape = 's32[1]{0}', space=sflag, size = 0x4, scoped, tag = 'scoped memory for tpu_custom_call.1']
    #allocation14 [shape = 'u8[8192]{0}', space=vmem, size = 0x2000, scoped, tag = 'output window, operand 0']
    %17 = vsyncpa [#allocation4], 0
    %s18 = scalar_lea.sflag [#allocation4], 1
    %19 = vsyncpa %s18, 0
    %20 = vsyncpa [#allocation7], 0
    %s21 = scalar_lea.sflag [#allocation7], 1
    %22 = vsyncpa %s21, 0
    %23 = vsyncpa [#allocation10], 0
    %24 = vsyncpa [#allocation13], 0
    %25 = vsyncpa [#allocation5], 0
    %s26 = scalar_lea.sflag [#allocation5], 1
    %27 = vsyncpa %s26, 0
    loop: start=0, step=1, limit=4
    $region2: #{tpu_custom_call.1} parent=1 // loop_pre_header
      _
    $region3: #{tpu_custom_call.1} parent=1 // loop_header
      %s29 = sphi 0, %s33
      %p30 = scmp.ge.s32.totalorder %s29, 4
      %s39 = sphi 0, %s41
      %s42 = sphi 0, %s39
      %s43 = sphi 0, %s42
      %s59 = sphi 0, %s43
      %s65 = sphi 0, %s67
      %s68 = sphi 0, %s65
      %s69 = sphi 0, %s68
      %s85 = sphi 0, %s69
      %s89 = sphi 0, %s89
      %s91 = sphi 0, %s89
      %s92 = sphi 0, %s91
      %s106 = sphi 0, %s92
      %s110 = sphi 0, %s110
      %s112 = sphi 0, %s110
      %s113 = sphi 0, %s112
      %s127 = sphi 0, %s113
      %s131 = sphi 0, %s131
      %s133 = sphi 0, %s131
      %s134 = sphi 0, %s133
      %s148 = sphi 0, %s134
      %s152 = sphi 0, %s152
      %s154 = sphi 0, %s152
      %s155 = sphi 0, %s154
      %s169 = sphi 0, %s155
      %s173 = sphi 0, %s173
      %s175 = sphi 0, %s173
      %s176 = sphi 0, %s175
      %s190 = sphi 0, %s176
      %s194 = sphi 0, %s194
      %s196 = sphi 0, %s194
      %s197 = sphi 0, %s196
      %s211 = sphi 0, %s197
      %s215 = sphi 0, %s215
      %s217 = sphi 0, %s215
      %s218 = sphi 0, %s217
      %s232 = sphi 0, %s218
      %s236 = sphi 0, %s236
      %s238 = sphi 0, %s236
      %s239 = sphi 0, %s238
      %s253 = sphi 0, %s239
      %s257 = sphi 0, %s257
      %s259 = sphi 0, %s257
      %s260 = sphi 0, %s259
      %s274 = sphi 0, %s260
      %s278 = sphi 0, %s278
      %s280 = sphi 0, %s278
      %s281 = sphi 0, %s280
      %s295 = sphi 0, %s281
      %s301 = sphi 0, %s303
      %s304 = sphi 0, %s301
      %s305 = sphi 0, %s304
      %s321 = sphi 0, %s305
    $region4: #{tpu_custom_call.1} parent=1 // loop_header_branch
      %32 = sbr.rel (%p30) target = $region8
    $region5: #{tpu_custom_call.1} parent=1 // loop_body
      %s34 = ssub.s32 %s29, 1
      %s35 = ssub.s32 %s29, 2
      %s36 = sadd.s32 %s29, 1
      %s37 = ssub.s32 %s29, %s36
      %p38 = scmp.eq.s32.totalorder %s37, 0
      %s40 = sadd.s32 %s39, 1
      %s41 = scalar_select %p38, %s39, %s40
      %p44 = pneg %p38
      %p45 = scmp.eq.s32.totalorder %s29, 1
      %p46 = por %p44, %p45
      %p47 = scmp.ne.s32.totalorder %s39, %s42
      %p48 = scmp.eq.s32.totalorder %s29, 0
      %p49 = por %p47, %p48
      %p50 = scmp.ne.s32.totalorder %s39, %s42
      %p51 = scmp.eq.s32.totalorder %s34, 1
      %p52 = por %p50, %p51
      %p53 = scmp.ne.s32.totalorder %s42, %s43
      %p54 = scmp.eq.s32.totalorder %s34, 0
      %p55 = por %p53, %p54
      %p56 = scmp.ne.s32.totalorder %s42, %s43
      %p57 = scmp.eq.s32.totalorder %s35, 1
      %p58 = por %p56, %p57
      %p60 = scmp.ne.s32.totalorder %s43, %s59
      %p61 = scmp.eq.s32.totalorder %s35, 0
      %p62 = por %p60, %p61
      %s63 = ssub.s32 %s29, %s36
      %p64 = scmp.eq.s32.totalorder %s63, 0
      %s66 = sadd.s32 %s65, 1
      %s67 = scalar_select %p64, %s65, %s66
      %p70 = pneg %p64
      %p71 = scmp.eq.s32.totalorder %s29, 1
      %p72 = por %p70, %p71
      %p73 = scmp.ne.s32.totalorder %s65, %s68
      %p74 = scmp.eq.s32.totalorder %s29, 0
      %p75 = por %p73, %p74
      %p76 = scmp.ne.s32.totalorder %s65, %s68
      %p77 = scmp.eq.s32.totalorder %s34, 1
      %p78 = por %p76, %p77
      %p79 = scmp.ne.s32.totalorder %s68, %s69
      %p80 = scmp.eq.s32.totalorder %s34, 0
      %p81 = por %p79, %p80
      %p82 = scmp.ne.s32.totalorder %s68, %s69
      %p83 = scmp.eq.s32.totalorder %s35, 1
      %p84 = por %p82, %p83
      %p86 = scmp.ne.s32.totalorder %s69, %s85
      %p87 = scmp.eq.s32.totalorder %s35, 0
      %p88 = por %p86, %p87
      %s90 = sadd.s32 %s89, 1
      %p93 = scmp.eq.s32.totalorder %s29, 1
      %p94 = scmp.ne.s32.totalorder %s89, %s91
      %p95 = scmp.eq.s32.totalorder %s29, 0
      %p96 = por %p94, %p95
      %p97 = scmp.ne.s32.totalorder %s89, %s91
      %p98 = scmp.eq.s32.totalorder %s34, 1
      %p99 = por %p97, %p98
      %p100 = scmp.ne.s32.totalorder %s91, %s92
      %p101 = scmp.eq.s32.totalorder %s34, 0
      %p102 = por %p100, %p101
      %p103 = scmp.ne.s32.totalorder %s91, %s92
      %p104 = scmp.eq.s32.totalorder %s35, 1
      %p105 = por %p103, %p104
      %p107 = scmp.ne.s32.totalorder %s92, %s106
      %p108 = scmp.eq.s32.totalorder %s35, 0
      %p109 = por %p107, %p108
      %s111 = sadd.s32 %s110, 1
      %p114 = scmp.eq.s32.totalorder %s29, 1
      %p115 = scmp.ne.s32.totalorder %s110, %s112
      %p116 = scmp.eq.s32.totalorder %s29, 0
      %p117 = por %p115, %p116
      %p118 = scmp.ne.s32.totalorder %s110, %s112
      %p119 = scmp.eq.s32.totalorder %s34, 1
      %p120 = por %p118, %p119
      %p121 = scmp.ne.s32.totalorder %s112, %s113
      %p122 = scmp.eq.s32.totalorder %s34, 0
      %p123 = por %p121, %p122
      %p124 = scmp.ne.s32.totalorder %s112, %s113
      %p125 = scmp.eq.s32.totalorder %s35, 1
      %p126 = por %p124, %p125
      %p128 = scmp.ne.s32.totalorder %s113, %s127
      %p129 = scmp.eq.s32.totalorder %s35, 0
      %p130 = por %p128, %p129
      %s132 = sadd.s32 %s131, 1
      %p135 = scmp.eq.s32.totalorder %s29, 1
      %p136 = scmp.ne.s32.totalorder %s131, %s133
      %p137 = scmp.eq.s32.totalorder %s29, 0
      %p138 = por %p136, %p137
      %p139 = scmp.ne.s32.totalorder %s131, %s133
      %p140 = scmp.eq.s32.totalorder %s34, 1
      %p141 = por %p139, %p140
      %p142 = scmp.ne.s32.totalorder %s133, %s134
      %p143 = scmp.eq.s32.totalorder %s34, 0
      %p144 = por %p142, %p143
      %p145 = scmp.ne.s32.totalorder %s133, %s134
      %p146 = scmp.eq.s32.totalorder %s35, 1
      %p147 = por %p145, %p146
      %p149 = scmp.ne.s32.totalorder %s134, %s148
      %p150 = scmp.eq.s32.totalorder %s35, 0
      %p151 = por %p149, %p150
      %s153 = sadd.s32 %s152, 1
      %p156 = scmp.eq.s32.totalorder %s29, 1
      %p157 = scmp.ne.s32.totalorder %s152, %s154
      %p158 = scmp.eq.s32.totalorder %s29, 0
      %p159 = por %p157, %p158
      %p160 = scmp.ne.s32.totalorder %s152, %s154
      %p161 = scmp.eq.s32.totalorder %s34, 1
      %p162 = por %p160, %p161
      %p163 = scmp.ne.s32.totalorder %s154, %s155
      %p164 = scmp.eq.s32.totalorder %s34, 0
      %p165 = por %p163, %p164
      %p166 = scmp.ne.s32.totalorder %s154, %s155
      %p167 = scmp.eq.s32.totalorder %s35, 1
      %p168 = por %p166, %p167
      %p170 = scmp.ne.s32.totalorder %s155, %s169
      %p171 = scmp.eq.s32.totalorder %s35, 0
      %p172 = por %p170, %p171
      %s174 = sadd.s32 %s173, 1
      %p177 = scmp.eq.s32.totalorder %s29, 1
      %p178 = scmp.ne.s32.totalorder %s173, %s175
      %p179 = scmp.eq.s32.totalorder %s29, 0
      %p180 = por %p178, %p179
      %p181 = scmp.ne.s32.totalorder %s173, %s175
      %p182 = scmp.eq.s32.totalorder %s34, 1
      %p183 = por %p181, %p182
      %p184 = scmp.ne.s32.totalorder %s175, %s176
      %p185 = scmp.eq.s32.totalorder %s34, 0
      %p186 = por %p184, %p185
      %p187 = scmp.ne.s32.totalorder %s175, %s176
      %p188 = scmp.eq.s32.totalorder %s35, 1
      %p189 = por %p187, %p188
      %p191 = scmp.ne.s32.totalorder %s176, %s190
      %p192 = scmp.eq.s32.totalorder %s35, 0
      %p193 = por %p191, %p192
      %s195 = sadd.s32 %s194, 1
      %p198 = scmp.eq.s32.totalorder %s29, 1
      %p199 = scmp.ne.s32.totalorder %s194, %s196
      %p200 = scmp.eq.s32.totalorder %s29, 0
      %p201 = por %p199, %p200
      %p202 = scmp.ne.s32.totalorder %s194, %s196
      %p203 = scmp.eq.s32.totalorder %s34, 1
      %p204 = por %p202, %p203
      %p205 = scmp.ne.s32.totalorder %s196, %s197
      %p206 = scmp.eq.s32.totalorder %s34, 0
      %p207 = por %p205, %p206
      %p208 = scmp.ne.s32.totalorder %s196, %s197
      %p209 = scmp.eq.s32.totalorder %s35, 1
      %p210 = por %p208, %p209
      %p212 = scmp.ne.s32.totalorder %s197, %s211
      %p213 = scmp.eq.s32.totalorder %s35, 0
      %p214 = por %p212, %p213
      %s216 = sadd.s32 %s215, 1
      %p219 = scmp.eq.s32.totalorder %s29, 1
      %p220 = scmp.ne.s32.totalorder %s215, %s217
      %p221 = scmp.eq.s32.totalorder %s29, 0
      %p222 = por %p220, %p221
      %p223 = scmp.ne.s32.totalorder %s215, %s217
      %p224 = scmp.eq.s32.totalorder %s34, 1
      %p225 = por %p223, %p224
      %p226 = scmp.ne.s32.totalorder %s217, %s218
      %p227 = scmp.eq.s32.totalorder %s34, 0
      %p228 = por %p226, %p227
      %p229 = scmp.ne.s32.totalorder %s217, %s218
      %p230 = scmp.eq.s32.totalorder %s35, 1
      %p231 = por %p229, %p230
      %p233 = scmp.ne.s32.totalorder %s218, %s232
      %p234 = scmp.eq.s32.totalorder %s35, 0
      %p235 = por %p233, %p234
      %s237 = sadd.s32 %s236, 1
      %p240 = scmp.eq.s32.totalorder %s29, 1
      %p241 = scmp.ne.s32.totalorder %s236, %s238
      %p242 = scmp.eq.s32.totalorder %s29, 0
      %p243 = por %p241, %p242
      %p244 = scmp.ne.s32.totalorder %s236, %s238
      %p245 = scmp.eq.s32.totalorder %s34, 1
      %p246 = por %p244, %p245
      %p247 = scmp.ne.s32.totalorder %s238, %s239
      %p248 = scmp.eq.s32.totalorder %s34, 0
      %p249 = por %p247, %p248
      %p250 = scmp.ne.s32.totalorder %s238, %s239
      %p251 = scmp.eq.s32.totalorder %s35, 1
      %p252 = por %p250, %p251
      %p254 = scmp.ne.s32.totalorder %s239, %s253
      %p255 = scmp.eq.s32.totalorder %s35, 0
      %p256 = por %p254, %p255
      %s258 = sadd.s32 %s257, 1
      %p261 = scmp.eq.s32.totalorder %s29, 1
      %p262 = scmp.ne.s32.totalorder %s257, %s259
      %p263 = scmp.eq.s32.totalorder %s29, 0
      %p264 = por %p262, %p263
      %p265 = scmp.ne.s32.totalorder %s257, %s259
      %p266 = scmp.eq.s32.totalorder %s34, 1
      %p267 = por %p265, %p266
      %p268 = scmp.ne.s32.totalorder %s259, %s260
      %p269 = scmp.eq.s32.totalorder %s34, 0
      %p270 = por %p268, %p269
      %p271 = scmp.ne.s32.totalorder %s259, %s260
      %p272 = scmp.eq.s32.totalorder %s35, 1
      %p273 = por %p271, %p272
      %p275 = scmp.ne.s32.totalorder %s260, %s274
      %p276 = scmp.eq.s32.totalorder %s35, 0
      %p277 = por %p275, %p276
      %s279 = sadd.s32 %s278, 1
      %p282 = scmp.eq.s32.totalorder %s29, 1
      %p283 = scmp.ne.s32.totalorder %s278, %s280
      %p284 = scmp.eq.s32.totalorder %s29, 0
      %p285 = por %p283, %p284
      %p286 = scmp.ne.s32.totalorder %s278, %s280
      %p287 = scmp.eq.s32.totalorder %s34, 1
      %p288 = por %p286, %p287
      %p289 = scmp.ne.s32.totalorder %s280, %s281
      %p290 = scmp.eq.s32.totalorder %s34, 0
      %p291 = por %p289, %p290
      %p292 = scmp.ne.s32.totalorder %s280, %s281
      %p293 = scmp.eq.s32.totalorder %s35, 1
      %p294 = por %p292, %p293
      %p296 = scmp.ne.s32.totalorder %s281, %s295
      %p297 = scmp.eq.s32.totalorder %s35, 0
      %p298 = por %p296, %p297
      %s299 = ssub.s32 %s29, %s36
      %p300 = scmp.eq.s32.totalorder %s299, 0
      %s302 = sadd.s32 %s301, 1
      %s303 = scalar_select %p300, %s301, %s302
      %p306 = pneg %p300
      %p307 = scmp.eq.s32.totalorder %s29, 1
      %p308 = por %p306, %p307
      %p309 = scmp.ne.s32.totalorder %s301, %s304
      %p310 = scmp.eq.s32.totalorder %s29, 0
      %p311 = por %p309, %p310
      %p312 = scmp.ne.s32.totalorder %s301, %s304
      %p313 = scmp.eq.s32.totalorder %s34, 1
      %p314 = por %p312, %p313
      %p315 = scmp.ne.s32.totalorder %s304, %s305
      %p316 = scmp.eq.s32.totalorder %s34, 0
      %p317 = por %p315, %p316
      %p318 = scmp.ne.s32.totalorder %s304, %s305
      %p319 = scmp.eq.s32.totalorder %s35, 1
      %p320 = por %p318, %p319
      %p322 = scmp.ne.s32.totalorder %s305, %s321
      %p323 = scmp.eq.s32.totalorder %s35, 0
      %p324 = por %p322, %p323
      %p325 = scmp.le.s32.totalorder 1, %s29
      %p326 = scmp.lt.s32.totalorder %s29, 3
      %p327 = pnand %p325, %p326
      %p328 = pneg %p327
      // Predicated region
      $region9: #{tpu_custom_call.1} parent=5 // pred_check
        _
      $region10: #{tpu_custom_call.1} parent=5 // pred_check_branch
        %330 = sbr.rel (%p327) target = $region12
      $region11: #{tpu_custom_call.1} parent=5 // pred_region
        %s331 = ssub.s32 %s29, 1
        // Predicated region
        $region13: #{tpu_custom_call.1} parent=11 // pred_check
          %p332 = pneg %p102
        $region14: #{tpu_custom_call.1} parent=11 // pred_check_branch
          %334 = sbr.rel (%p332) target = $region16
        $region15: #{tpu_custom_call.1} parent=11 // pred_region
          %s336 = ssub.s32 6144, 6144
          %337 = vsyncadd [#allocation7], %s336
          %s338 = sshll.u32 [#allocation8], 4
          %s339 = int_to_ptr.vmem [resolvable:$true] %s338
          %344 = dma.hbm_to_vmem [thread:$0]  %s2, 6144, %s339, [#allocation7], 384, 384, 24
        $region16: #{tpu_custom_call.1} parent=11 // pred_fallthru
          _
        // Predicated region
        $region17: #{tpu_custom_call.1} parent=11 // pred_check
          %p345 = pneg %p123
        $region18: #{tpu_custom_call.1} parent=11 // pred_check_branch
          %347 = sbr.rel (%p345) target = $region20
        $region19: #{tpu_custom_call.1} parent=11 // pred_region
          %s349 = ssub.s32 2048, 2048
          %350 = vsyncadd [#allocation10], %s349
          %s351 = sshll.u32 [#allocation9], 4
          %s352 = int_to_ptr.vmem [resolvable:$true] %s351
          %357 = dma.hbm_to_vmem [thread:$0]  %s3, 2048, %s352, [#allocation10], 128, 128, 8
        $region20: #{tpu_custom_call.1} parent=11 // pred_fallthru
          _
        // Predicated region
        $region21: #{tpu_custom_call.1} parent=11 // pred_check
          %p358 = pneg %p144
        $region22: #{tpu_custom_call.1} parent=11 // pred_check_branch
          %360 = sbr.rel (%p358) target = $region24
        $region23: #{tpu_custom_call.1} parent=11 // pred_region
          _
        $region24: #{tpu_custom_call.1} parent=11 // pred_fallthru
          _
        // Predicated region
        $region25: #{tpu_custom_call.1} parent=11 // pred_check
          %p361 = pneg %p165
        $region26: #{tpu_custom_call.1} parent=11 // pred_check_branch
          %363 = sbr.rel (%p361) target = $region28
        $region27: #{tpu_custom_call.1} parent=11 // pred_region
          _
        $region28: #{tpu_custom_call.1} parent=11 // pred_fallthru
          _
        // Predicated region
        $region29: #{tpu_custom_call.1} parent=11 // pred_check
          %p364 = pneg %p186
        $region30: #{tpu_custom_call.1} parent=11 // pred_check_branch
          %366 = sbr.rel (%p364) target = $region32
        $region31: #{tpu_custom_call.1} parent=11 // pred_region
          _
        $region32: #{tpu_custom_call.1} parent=11 // pred_fallthru
          _
        // Predicated region
        $region33: #{tpu_custom_call.1} parent=11 // pred_check
          %p367 = pneg %p207
        $region34: #{tpu_custom_call.1} parent=11 // pred_check_branch
          %369 = sbr.rel (%p367) target = $region36
        $region35: #{tpu_custom_call.1} parent=11 // pred_region
          _
        $region36: #{tpu_custom_call.1} parent=11 // pred_fallthru
          _
        // Predicated region
        $region37: #{tpu_custom_call.1} parent=11 // pred_check
          %p370 = pneg %p228
        $region38: #{tpu_custom_call.1} parent=11 // pred_check_branch
          %372 = sbr.rel (%p370) target = $region40
        $region39: #{tpu_custom_call.1} parent=11 // pred_region
          %s374 = ssub.s32 8192, 8192
          %375 = vsyncadd [#allocation10], %s374
          %s376 = sshll.u32 [#allocation11], 4
          %s377 = int_to_ptr.vmem [resolvable:$true] %s376
          %382 = dma.hbm_to_vmem [thread:$0]  %s8, 8192, %s377, [#allocation10], 512, 512, 32
        $region40: #{tpu_custom_call.1} parent=11 // pred_fallthru
          _
        // Predicated region
        $region41: #{tpu_custom_call.1} parent=11 // pred_check
          %p383 = pneg %p249
        $region42: #{tpu_custom_call.1} parent=11 // pred_check_branch
          %385 = sbr.rel (%p383) target = $region44
        $region43: #{tpu_custom_call.1} parent=11 // pred_region
          _
        $region44: #{tpu_custom_call.1} parent=11 // pred_fallthru
          _
        // Predicated region
        $region45: #{tpu_custom_call.1} parent=11 // pred_check
          %p386 = pneg %p270
        $region46: #{tpu_custom_call.1} parent=11 // pred_check_branch
          %388 = sbr.rel (%p386) target = $region48
        $region47: #{tpu_custom_call.1} parent=11 // pred_region
          %s390 = ssub.s32 8192, 8192
          %391 = vsyncadd [#allocation13], %s390
          %s392 = sshll.u32 [#allocation12], 4
          %s393 = int_to_ptr.vmem [resolvable:$true] %s392
          %398 = dma.hbm_to_vmem [thread:$0]  %s10, 8192, %s393, [#allocation13], 128, 128, 8
        $region48: #{tpu_custom_call.1} parent=11 // pred_fallthru
          _
        // Predicated region
        $region49: #{tpu_custom_call.1} parent=11 // pred_check
          %p399 = pneg %p291
        $region50: #{tpu_custom_call.1} parent=11 // pred_check_branch
          %401 = sbr.rel (%p399) target = $region52
        $region51: #{tpu_custom_call.1} parent=11 // pred_region
          _
        $region52: #{tpu_custom_call.1} parent=11 // pred_fallthru
          _
      $region12: #{tpu_custom_call.1} parent=5 // pred_fallthru
        _
      %p402 = scmp.lt.s32.totalorder %s29, 2
      // Predicated region
      $region53: #{tpu_custom_call.1} parent=5 // pred_check
        %p403 = pneg %p402
      $region54: #{tpu_custom_call.1} parent=5 // pred_check_branch
        %405 = sbr.rel (%p403) target = $region56
      $region55: #{tpu_custom_call.1} parent=5 // pred_region
        // Predicated region
        $region57: #{tpu_custom_call.1} parent=55 // pred_check
          %p406 = pneg %p49
        $region58: #{tpu_custom_call.1} parent=55 // pred_check_branch
          %408 = sbr.rel (%p406) target = $region60
        $region59: #{tpu_custom_call.1} parent=55 // pred_region
          %s409 = sand.u32 %s39, 1
          %s410 = scalar_lea.sflag [#allocation4], %s409
          %s411 = sand.u32 %s39, 1
          %s412 = smul.addr %s411, 8
          %s413 = scalar_lea.vmem [#allocation3], %s412
          %s415 = ssub.s32 128, 128
          %416 = vsyncadd %s410, %s415
          %s417 = smul.addr %s29, 128
          %s418 = scalar_lea.hbm %s0, %s417
          %s420 = sshll.u32 %s413, 4
          %s421 = int_to_ptr.vmem [resolvable:$true] %s420
          %423 = dma.hbm_to_vmem [thread:$0]  %s418, 128, %s421, %s410
        $region60: #{tpu_custom_call.1} parent=55 // pred_fallthru
          _
        // Predicated region
        $region61: #{tpu_custom_call.1} parent=55 // pred_check
          %p424 = pneg %p75
        $region62: #{tpu_custom_call.1} parent=55 // pred_check_branch
          %426 = sbr.rel (%p424) target = $region64
        $region63: #{tpu_custom_call.1} parent=55 // pred_region
          %s427 = sand.u32 %s29, 1
          %s428 = scalar_lea.sflag [#allocation7], %s427
          %s429 = sand.u32 %s65, 1
          %s430 = smul.addr %s429, 8
          %s431 = scalar_lea.vmem [#allocation6], %s430
          %s433 = ssub.s32 128, 128
          %434 = vsyncadd %s428, %s433
          %s435 = smul.addr %s29, 128
          %s436 = scalar_lea.hbm %s1, %s435
          %s438 = sshll.u32 %s431, 4
          %s439 = int_to_ptr.vmem [resolvable:$true] %s438
          %441 = dma.hbm_to_vmem [thread:$0]  %s436, 128, %s439, %s428
        $region64: #{tpu_custom_call.1} parent=55 // pred_fallthru
          _
      $region56: #{tpu_custom_call.1} parent=5 // pred_fallthru
        _
      %p442 = scmp.le.s32.totalorder 1, %s29
      %p443 = scmp.lt.s32.totalorder %s29, 3
      %p444 = pnand %p442, %p443
      %p445 = pneg %p444
      // Predicated region
      $region65: #{tpu_custom_call.1} parent=5 // pred_check
        _
      $region66: #{tpu_custom_call.1} parent=5 // pred_check_branch
        %447 = sbr.rel (%p444) target = $region68
      $region67: #{tpu_custom_call.1} parent=5 // pred_region
        %s448 = ssub.s32 %s29, 1
        %s449 = sand.u32 %s42, 1
        %s450 = scalar_lea.sflag [#allocation4], %s449
        %s451 = sand.u32 %s42, 1
        %s452 = smul.addr %s451, 8
        %s453 = scalar_lea.vmem [#allocation3], %s452
        // Predicated region
        $region69: #{tpu_custom_call.1} parent=67 // pred_check
          %p454 = pneg %p55
        $region70: #{tpu_custom_call.1} parent=67 // pred_check_branch
          %456 = sbr.rel (%p454) target = $region72
        $region71: #{tpu_custom_call.1} parent=67 // pred_region
          %457 = dma.done %s450, 128
        $region72: #{tpu_custom_call.1} parent=67 // pred_fallthru
          _
        %s458 = sand.u32 %s34, 1
        %s459 = scalar_lea.sflag [#allocation7], %s458
        %s460 = sand.u32 %s68, 1
        %s461 = smul.addr %s460, 8
        %s462 = scalar_lea.vmem [#allocation6], %s461
        // Predicated region
        $region73: #{tpu_custom_call.1} parent=67 // pred_check
          %p463 = pneg %p81
        $region74: #{tpu_custom_call.1} parent=67 // pred_check_branch
          %465 = sbr.rel (%p463) target = $region76
        $region75: #{tpu_custom_call.1} parent=67 // pred_region
          %466 = dma.done %s459, 128
        $region76: #{tpu_custom_call.1} parent=67 // pred_fallthru
          _
        // Predicated region
        $region77: #{tpu_custom_call.1} parent=67 // pred_check
          %p467 = pneg %p102
        $region78: #{tpu_custom_call.1} parent=67 // pred_check_branch
          %469 = sbr.rel (%p467) target = $region80
        $region79: #{tpu_custom_call.1} parent=67 // pred_region
          %470 = dma.done [#allocation7], 6144
        $region80: #{tpu_custom_call.1} parent=67 // pred_fallthru
          _
        // Predicated region
        $region81: #{tpu_custom_call.1} parent=67 // pred_check
          %p471 = pneg %p123
        $region82: #{tpu_custom_call.1} parent=67 // pred_check_branch
          %473 = sbr.rel (%p471) target = $region84
        $region83: #{tpu_custom_call.1} parent=67 // pred_region
          %474 = dma.done [#allocation10], 2048
        $region84: #{tpu_custom_call.1} parent=67 // pred_fallthru
          _
        // Predicated region
        $region85: #{tpu_custom_call.1} parent=67 // pred_check
          %p475 = pneg %p228
        $region86: #{tpu_custom_call.1} parent=67 // pred_check_branch
          %477 = sbr.rel (%p475) target = $region88
        $region87: #{tpu_custom_call.1} parent=67 // pred_region
          %478 = dma.done [#allocation10], 8192
        $region88: #{tpu_custom_call.1} parent=67 // pred_fallthru
          _
        // Predicated region
        $region89: #{tpu_custom_call.1} parent=67 // pred_check
          %p479 = pneg %p270
        $region90: #{tpu_custom_call.1} parent=67 // pred_check_branch
          %481 = sbr.rel (%p479) target = $region92
        $region91: #{tpu_custom_call.1} parent=67 // pred_region
          %482 = dma.done [#allocation13], 8192
        $region92: #{tpu_custom_call.1} parent=67 // pred_fallthru
          _
        %s483 = sand.u32 %s42, 1
        %s484 = scalar_lea.sflag [#allocation4], %s483
        %s485 = sand.u32 %s42, 1
        %s486 = smul.addr %s485, 8
        %s487 = scalar_lea.vmem [#allocation3], %s486
        %p488 = pneg %p55
        %p489 = pneg %p52
        %s490 = sand.u32 %s34, 1
        %s491 = scalar_lea.sflag [#allocation7], %s490
        %s492 = sand.u32 %s68, 1
        %s493 = smul.addr %s492, 8
        %s494 = scalar_lea.vmem [#allocation6], %s493
        %p495 = pneg %p81
        %p496 = pneg %p78
        %p497 = pneg %p102
        %p498 = pneg %p99
        %p499 = pneg %p123
        %p500 = pneg %p120
        %p501 = pneg %p144
        %p502 = pneg %p141
        %p503 = pneg %p165
        %p504 = pneg %p162
        %p505 = pneg %p186
        %p506 = pneg %p183
        %p507 = pneg %p207
        %p508 = pneg %p204
        %p509 = pneg %p228
        %p510 = pneg %p225
        %p511 = pneg %p249
        %p512 = pneg %p246
        %p513 = pneg %p270
        %p514 = pneg %p267
        %p515 = pneg %p291
        %p516 = pneg %p288
        %p517 = pneg %p317
        %p518 = pneg %p314
        %s519 = sand.u32 %s304, 1
        %s520 = scalar_lea.sflag [#allocation5], %s519
        %s521 = sand.u32 %s304, 1
        %s522 = smul.addr %s521, 8
        %s523 = scalar_lea.vmem [#allocation14], %s522
        %v524 = vld [vmem:[%s453] sm:$0xff]
        %v525 = vld [vmem:[#allocation8] sm:$0xff]
        %v526 = vld [vmem:[#allocation8 + $0x8] sm:$0xff]
        %v527 = vld [vmem:[#allocation8 + $0x10] sm:$0xff]
        %v528 = vld [vmem:[#allocation8 + $0x18] sm:$0xff]
        %v529 = vld [vmem:[#allocation8 + $0x20] sm:$0xff]
        %v530 = vld [vmem:[#allocation8 + $0x28] sm:$0xff]
        %v531 = vld [vmem:[#allocation8 + $0x30] sm:$0xff]
        %v532 = vld [vmem:[#allocation8 + $0x38] sm:$0xff]
        %v533 = vld [vmem:[#allocation8 + $0x40] sm:$0xff]
        %v534 = vld [vmem:[#allocation8 + $0x48] sm:$0xff]
        %v535 = vld [vmem:[#allocation8 + $0x50] sm:$0xff]
        %v536 = vld [vmem:[#allocation8 + $0x58] sm:$0xff]
        %v537 = vld [vmem:[#allocation8 + $0x60] sm:$0xff]
        %v538 = vld [vmem:[#allocation8 + $0x68] sm:$0xff]
        %v539 = vld [vmem:[#allocation8 + $0x70] sm:$0xff]
        %v540 = vld [vmem:[#allocation8 + $0x78] sm:$0xff]
        %v541 = vld [vmem:[#allocation8 + $0x80] sm:$0xff]
        %v542 = vld [vmem:[#allocation8 + $0x88] sm:$0xff]
        %v543 = vld [vmem:[#allocation8 + $0x90] sm:$0xff]
        %v544 = vld [vmem:[#allocation8 + $0x98] sm:$0xff]
        %v545 = vld [vmem:[#allocation8 + $0xa0] sm:$0xff]
        %v546 = vld [vmem:[#allocation8 + $0xa8] sm:$0xff]
        %v547 = vld [vmem:[#allocation8 + $0xb0] sm:$0xff]
        %v548 = vld [vmem:[#allocation8 + $0xb8] sm:$0xff]
        %v549 = vld [vmem:[#allocation8 + $0xc0] sm:$0xff]
        %v550 = vld [vmem:[#allocation8 + $0xc8] sm:$0xff]
        %v551 = vld [vmem:[#allocation8 + $0xd0] sm:$0xff]
        %v552 = vld [vmem:[#allocation8 + $0xd8] sm:$0xff]
        %v553 = vld [vmem:[#allocation8 + $0xe0] sm:$0xff]
        %v554 = vld [vmem:[#allocation8 + $0xe8] sm:$0xff]
        %v555 = vld [vmem:[#allocation8 + $0xf0] sm:$0xff]
        %v556 = vld [vmem:[#allocation8 + $0xf8] sm:$0xff]
        %v557 = vld [vmem:[#allocation8 + $0x100] sm:$0xff]
        %v558 = vld [vmem:[#allocation8 + $0x108] sm:$0xff]
        %v559 = vld [vmem:[#allocation8 + $0x110] sm:$0xff]
        %v560 = vld [vmem:[#allocation8 + $0x118] sm:$0xff]
        %v561 = vld [vmem:[#allocation8 + $0x120] sm:$0xff]
        %v562 = vld [vmem:[#allocation8 + $0x128] sm:$0xff]
        %v563 = vld [vmem:[#allocation8 + $0x130] sm:$0xff]
        %v564 = vld [vmem:[#allocation8 + $0x138] sm:$0xff]
        %v565 = vld [vmem:[#allocation8 + $0x140] sm:$0xff]
        %v566 = vld [vmem:[#allocation8 + $0x148] sm:$0xff]
        %v567 = vld [vmem:[#allocation8 + $0x150] sm:$0xff]
        %v568 = vld [vmem:[#allocation8 + $0x158] sm:$0xff]
        %v569 = vld [vmem:[#allocation8 + $0x160] sm:$0xff]
        %v570 = vld [vmem:[#allocation8 + $0x168] sm:$0xff]
        %v571 = vld [vmem:[#allocation8 + $0x170] sm:$0xff]
        %v572 = vld [vmem:[#allocation8 + $0x178] sm:$0xff]
        %573 = vmatprep.subr.mxu0 %v526
        %574 = vmatpush1.msra.mxu0 %v525
        %575 = vmatprep.subr.mxu0 %v529
        %576 = vmatpush1.msra.mxu0 %v528
        %577 = vmatprep.subr.mxu0 %v532
        %578 = vmatpush1.msra.mxu0 %v531
        %579 = vmatprep.subr.mxu0 %v535
        %580 = vmatpush1.msra.mxu0 %v534
        %581 = vmatprep.subr.mxu0 %v538
        %582 = vmatpush1.msra.mxu0 %v537
        %583 = vmatprep.subr.mxu0 %v541
        %584 = vmatpush1.msra.mxu0 %v540
        %585 = vmatprep.subr.mxu0 %v544
        %586 = vmatpush1.msra.mxu0 %v543
        %587 = vmatprep.subr.mxu0 %v547
        %588 = vmatpush1.msra.mxu0 %v546
        %589 = vmatprep.subr.mxu0 %v550
        %590 = vmatpush1.msra.mxu0 %v549
        %591 = vmatprep.subr.mxu0 %v553
        %592 = vmatpush1.msra.mxu0 %v552
        %593 = vmatprep.subr.mxu0 %v556
        %594 = vmatpush1.msra.mxu0 %v555
        %595 = vmatprep.subr.mxu0 %v559
        %596 = vmatpush1.msra.mxu0 %v558
        %597 = vmatprep.subr.mxu0 %v562
        %598 = vmatpush1.msra.mxu0 %v561
        %599 = vmatprep.subr.mxu0 %v565
        %600 = vmatpush1.msra.mxu0 %v564
        %601 = vmatprep.subr.mxu0 %v568
        %602 = vmatpush1.msra.mxu0 %v567
        %603 = vmatprep.subr.mxu0 %v571
        %604 = vmatpush1.msra.mxu0 %v570
        %605 = vmatprep.subr.mxu0 0.0
        %606 = vmatpush1.msra.mxu0 0.0
        %607 = vmatprep.subr.mxu0 0.0
        %608 = vmatpush1.msra.mxu0 0.0
        %609 = vmatprep.subr.mxu0 0.0
        %610 = vmatpush1.msra.mxu0 0.0
        %611 = vmatprep.subr.mxu0 0.0
        %612 = vmatpush1.msra.mxu0 0.0
        %613 = vmatprep.subr.mxu0 0.0
        %614 = vmatpush1.msra.mxu0 0.0
        %615 = vmatprep.subr.mxu0 0.0
        %616 = vmatpush1.msra.mxu0 0.0
        %617 = vmatprep.subr.mxu0 0.0
        %618 = vmatpush1.msra.mxu0 0.0
        %619 = vmatprep.subr.mxu0 0.0
        %620 = vmatpush1.msra.mxu0 0.0
        %621 = vmatprep.subr.mxu0 0.0
        %622 = vmatpush1.msra.mxu0 0.0
        %623 = vmatprep.subr.mxu0 0.0
        %624 = vmatpush1.msra.mxu0 0.0
        %625 = vmatprep.subr.mxu0 0.0
        %626 = vmatpush1.msra.mxu0 0.0
        %627 = vmatprep.subr.mxu0 0.0
        %628 = vmatpush1.msra.mxu0 0.0
        %629 = vmatprep.subr.mxu0 0.0
        %630 = vmatpush1.msra.mxu0 0.0
        %631 = vmatprep.subr.mxu0 0.0
        %632 = vmatpush1.msra.mxu0 0.0
        %633 = vmatprep.subr.mxu0 0.0
        %634 = vmatpush1.msra.mxu0 0.0
        %635 = vmatprep.subr.mxu0 0.0
        %636 = vmatpush1.msra.mxu0 0.0
        %637 = vmatprep.mubr.f32.mxu0 0.0
        %638 = vmatmul.mubr.f32.gmra.mrb[0].mxu0 %v524
        %v639 = vpop.f32.mrb[0].mxu0
        %v640 = vadd.f32 0.0, %v639
        %v641 = vpop.f32.mrb[0].mxu0
        %v642 = vadd.f32 0.0, %v641
        %643 = vdwg.mxu0
        %644 = vmatprep.subr.mxu0 0.0
        %645 = vmatpush1.msra.mxu0 %v527
        %646 = vmatprep.subr.mxu0 0.0
        %647 = vmatpush1.msra.mxu0 %v530
        %648 = vmatprep.subr.mxu0 0.0
        %649 = vmatpush1.msra.mxu0 %v533
        %650 = vmatprep.subr.mxu0 0.0
        %651 = vmatpush1.msra.mxu0 %v536
        %652 = vmatprep.subr.mxu0 0.0
        %653 = vmatpush1.msra.mxu0 %v539
        %654 = vmatprep.subr.mxu0 0.0
        %655 = vmatpush1.msra.mxu0 %v542
        %656 = vmatprep.subr.mxu0 0.0
        %657 = vmatpush1.msra.mxu0 %v545
        %658 = vmatprep.subr.mxu0 0.0
        %659 = vmatpush1.msra.mxu0 %v548
        %660 = vmatprep.subr.mxu0 0.0
        %661 = vmatpush1.msra.mxu0 %v551
        %662 = vmatprep.subr.mxu0 0.0
        %663 = vmatpush1.msra.mxu0 %v554
        %664 = vmatprep.subr.mxu0 0.0
        %665 = vmatpush1.msra.mxu0 %v557
        %666 = vmatprep.subr.mxu0 0.0
        %667 = vmatpush1.msra.mxu0 %v560
        %668 = vmatprep.subr.mxu0 0.0
        %669 = vmatpush1.msra.mxu0 %v563
        %670 = vmatprep.subr.mxu0 0.0
        %671 = vmatpush1.msra.mxu0 %v566
        %672 = vmatprep.subr.mxu0 0.0
        %673 = vmatpush1.msra.mxu0 %v569
        %674 = vmatprep.subr.mxu0 0.0
        %675 = vmatpush1.msra.mxu0 %v572
        %676 = vmatprep.subr.mxu0 0.0
        %677 = vmatpush1.msra.mxu0 0.0
        %678 = vmatprep.subr.mxu0 0.0
        %679 = vmatpush1.msra.mxu0 0.0
        %680 = vmatprep.subr.mxu0 0.0
        %681 = vmatpush1.msra.mxu0 0.0
        %682 = vmatprep.subr.mxu0 0.0
        %683 = vmatpush1.msra.mxu0 0.0
        %684 = vmatprep.subr.mxu0 0.0
        %685 = vmatpush1.msra.mxu0 0.0
        %686 = vmatprep.subr.mxu0 0.0
        %687 = vmatpush1.msra.mxu0 0.0
        %688 = vmatprep.subr.mxu0 0.0
        %689 = vmatpush1.msra.mxu0 0.0
        %690 = vmatprep.subr.mxu0 0.0
        %691 = vmatpush1.msra.mxu0 0.0
        %692 = vmatprep.subr.mxu0 0.0
        %693 = vmatpush1.msra.mxu0 0.0
        %694 = vmatprep.subr.mxu0 0.0
        %695 = vmatpush1.msra.mxu0 0.0
        %696 = vmatprep.subr.mxu0 0.0
        %697 = vmatpush1.msra.mxu0 0.0
        %698 = vmatprep.subr.mxu0 0.0
        %699 = vmatpush1.msra.mxu0 0.0
        %700 = vmatprep.subr.mxu0 0.0
        %701 = vmatpush1.msra.mxu0 0.0
        %702 = vmatprep.subr.mxu0 0.0
        %703 = vmatpush1.msra.mxu0 0.0
        %704 = vmatprep.subr.mxu0 0.0
        %705 = vmatpush1.msra.mxu0 0.0
        %706 = vmatprep.subr.mxu0 0.0
        %707 = vmatpush1.msra.mxu0 0.0
        %708 = vmatprep.mubr.f32.mxu0 0.0
        %709 = vmatmul.mubr.f32.gmra.mrb[0].mxu0 %v524
        %v710 = vpop.f32.mrb[0].mxu0
        %v711 = vadd.f32 0.0, %v710
        %v712 = vpop.f32.mrb[0].mxu0
        %713 = vdwg.mxu0
        %v714 = vld [vmem:[%s462] sm:$0xff]
        %vm715 = vcmask 261120
        %v717 = vsel %vm715, %v640, 0
        %v720 = vsel %vm715, %v642, 0
        %722 = vmatprep.subr.mxu0 0.0
        %723 = vmatpush1.xpose.msra.mxu0 %v720
        %724 = vmatprep.subr.mxu0 0.0
        %725 = vmatpush1.xpose.msra.mxu0 0.0
        %726 = vmatprep.subr.mxu0 0.0
        %727 = vmatpush1.xpose.msra.mxu0 0.0
        %728 = vmatprep.subr.mxu0 0.0
        %729 = vmatpush1.xpose.msra.mxu0 0.0
        %730 = vmatprep.subr.mxu0 0.0
        %731 = vmatpush1.xpose.msra.mxu0 0.0
        %732 = vmatprep.subr.mxu0 0.0
        %733 = vmatpush1.xpose.msra.mxu0 0.0
        %734 = vmatprep.subr.mxu0 0.0
        %735 = vmatpush1.xpose.msra.mxu0 0.0
        %736 = vmatprep.subr.mxu0 0.0
        %737 = vmatpush1.xpose.msra.mxu0 0.0
        %738 = vmatprep.subr.mxu0 0.0
        %739 = vmatpush1.xpose.msra.mxu0 0.0
        %740 = vmatprep.subr.mxu0 0.0
        %741 = vmatpush1.xpose.msra.mxu0 0.0
        %742 = vmatprep.subr.mxu0 0.0
        %743 = vmatpush1.xpose.msra.mxu0 0.0
        %744 = vmatprep.subr.mxu0 0.0
        %745 = vmatpush1.xpose.msra.mxu0 0.0
        %746 = vmatprep.subr.mxu0 0.0
        %747 = vmatpush1.xpose.msra.mxu0 0.0
        %748 = vmatprep.subr.mxu0 0.0
        %749 = vmatpush1.xpose.msra.mxu0 0.0
        %750 = vmatprep.subr.mxu0 0.0
        %751 = vmatpush1.xpose.msra.mxu0 0.0
        %752 = vmatprep.subr.mxu0 0.0
        %753 = vmatpush1.xpose.msra.mxu0 0.0
        %754 = vmatprep.subr.mxu0 0.0
        %755 = vmatpush1.xpose.msra.mxu0 0.0
        %756 = vmatprep.subr.mxu0 0.0
        %757 = vmatpush1.xpose.msra.mxu0 0.0
        %758 = vmatprep.subr.mxu0 0.0
        %759 = vmatpush1.xpose.msra.mxu0 0.0
        %760 = vmatprep.subr.mxu0 0.0
        %761 = vmatpush1.xpose.msra.mxu0 0.0
        %762 = vmatprep.subr.mxu0 0.0
        %763 = vmatpush1.xpose.msra.mxu0 0.0
        %764 = vmatprep.subr.mxu0 0.0
        %765 = vmatpush1.xpose.msra.mxu0 0.0
        %766 = vmatprep.subr.mxu0 0.0
        %767 = vmatpush1.xpose.msra.mxu0 0.0
        %768 = vmatprep.subr.mxu0 0.0
        %769 = vmatpush1.xpose.msra.mxu0 0.0
        %770 = vmatprep.subr.mxu0 0.0
        %771 = vmatpush1.xpose.msra.mxu0 0.0
        %772 = vmatprep.subr.mxu0 0.0
        %773 = vmatpush1.xpose.msra.mxu0 0.0
        %774 = vmatprep.subr.mxu0 0.0
        %775 = vmatpush1.xpose.msra.mxu0 0.0
        %776 = vmatprep.subr.mxu0 0.0
        %777 = vmatpush1.xpose.msra.mxu0 0.0
        %778 = vmatprep.subr.mxu0 0.0
        %779 = vmatpush1.xpose.msra.mxu0 0.0
        %780 = vmatprep.subr.mxu0 0.0
        %781 = vmatpush1.xpose.msra.mxu0 0.0
        %782 = vmatprep.subr.mxu0 0.0
        %783 = vmatpush1.xpose.msra.mxu0 0.0
        %784 = vmatprep.subr.mxu0 0.0
        %785 = vmatpush1.xpose.msra.mxu0 0.0
        %786 = vmatprep.mubr.f32.mxu0 0.0
        %787 = vmatmul.mubr.f32.gmra.mrb[0].mxu0 %v717
        %v788 = vpop.f32.mrb[0].mxu0
        %v789 = vadd.f32 0.0, %v788
        %v790 = vpop.f32.mrb[0].mxu0
        %791 = vdwg.mxu0
        %v792 = vmul.f32 %v789, 0.088388346
        %v793 = vadd.f32 %v792, %v714
        %vm794 = vcmask 64512
        %v795 = vsel %vm794, %v793, -inf
        %796 = vmax.xlane.f32.xlu0 %v795
        %v797 = vpop.xlane.xlu0 %796
        %v798 = vsub.f32 %v793, %v797
        %v799 = vmul.f32 %v798, 1.442695
        %v800 = vpow.pop %v799
        %v801 = vsel %vm794, %v800, 0.0
        %802 = vadd.xlane.f32.xlu0 %v801
        %v803 = vpop.xlane.xlu0 %802
        %v804 = vrcp.pop %v803
        %v805 = vmul.f32 %v803, %v804
        %v806 = vsub.f32 2.0, %v805
        %v807 = vmul.f32 %v804, %v806
        %v808 = vmul.f32 %v800, %v807
        %v810 = vsel %vm794, %v808, 0
        %812 = vmatprep.subr.mxu0 0.0
        %813 = vmatpush1.msra.mxu0 %v711
        %814 = vmatprep.subr.mxu0 0.0
        %815 = vmatpush1.msra.mxu0 0.0
        %816 = vmatprep.subr.mxu0 0.0
        %817 = vmatpush1.msra.mxu0 0.0
        %818 = vmatprep.subr.mxu0 0.0
        %819 = vmatpush1.msra.mxu0 0.0
        %820 = vmatprep.subr.mxu0 0.0
        %821 = vmatpush1.msra.mxu0 0.0
        %822 = vmatprep.subr.mxu0 0.0
        %823 = vmatpush1.msra.mxu0 0.0
        %824 = vmatprep.subr.mxu0 0.0
        %825 = vmatpush1.msra.mxu0 0.0
        %826 = vmatprep.subr.mxu0 0.0
        %827 = vmatpush1.msra.mxu0 0.0
        %828 = vmatprep.subr.mxu0 0.0
        %829 = vmatpush1.msra.mxu0 0.0
        %830 = vmatprep.subr.mxu0 0.0
        %831 = vmatpush1.msra.mxu0 0.0
        %832 = vmatprep.subr.mxu0 0.0
        %833 = vmatpush1.msra.mxu0 0.0
        %834 = vmatprep.subr.mxu0 0.0
        %835 = vmatpush1.msra.mxu0 0.0
        %836 = vmatprep.subr.mxu0 0.0
        %837 = vmatpush1.msra.mxu0 0.0
        %838 = vmatprep.subr.mxu0 0.0
        %839 = vmatpush1.msra.mxu0 0.0
        %840 = vmatprep.subr.mxu0 0.0
        %841 = vmatpush1.msra.mxu0 0.0
        %842 = vmatprep.subr.mxu0 0.0
        %843 = vmatpush1.msra.mxu0 0.0
        %844 = vmatprep.subr.mxu0 0.0
        %845 = vmatpush1.msra.mxu0 0.0
        %846 = vmatprep.subr.mxu0 0.0
        %847 = vmatpush1.msra.mxu0 0.0
        %848 = vmatprep.subr.mxu0 0.0
        %849 = vmatpush1.msra.mxu0 0.0
        %850 = vmatprep.subr.mxu0 0.0
        %851 = vmatpush1.msra.mxu0 0.0
        %852 = vmatprep.subr.mxu0 0.0
        %853 = vmatpush1.msra.mxu0 0.0
        %854 = vmatprep.subr.mxu0 0.0
        %855 = vmatpush1.msra.mxu0 0.0
        %856 = vmatprep.subr.mxu0 0.0
        %857 = vmatpush1.msra.mxu0 0.0
        %858 = vmatprep.subr.mxu0 0.0
        %859 = vmatpush1.msra.mxu0 0.0
        %860 = vmatprep.subr.mxu0 0.0
        %861 = vmatpush1.msra.mxu0 0.0
        %862 = vmatprep.subr.mxu0 0.0
        %863 = vmatpush1.msra.mxu0 0.0
        %864 = vmatprep.subr.mxu0 0.0
        %865 = vmatpush1.msra.mxu0 0.0
        %866 = vmatprep.subr.mxu0 0.0
        %867 = vmatpush1.msra.mxu0 0.0
        %868 = vmatprep.subr.mxu0 0.0
        %869 = vmatpush1.msra.mxu0 0.0
        %870 = vmatprep.subr.mxu0 0.0
        %871 = vmatpush1.msra.mxu0 0.0
        %872 = vmatprep.subr.mxu0 0.0
        %873 = vmatpush1.msra.mxu0 0.0
        %874 = vmatprep.subr.mxu0 0.0
        %875 = vmatpush1.msra.mxu0 0.0
        %876 = vmatprep.mubr.f32.mxu0 0.0
        %877 = vmatmul.mubr.f32.gmra.mrb[0].mxu0 %v810
        %v878 = vpop.f32.mrb[0].mxu0
        %v879 = vadd.f32 0.0, %v878
        %v880 = vpop.f32.mrb[0].mxu0
        %881 = vdwg.mxu0
        %882 = vrot.lane.b32.xlu0 %v640, 96
        %v883 = vpop.permute.xlu0 %882
        %884 = vrot.lane.b32.xlu0 %v642, 96
        %v885 = vpop.permute.xlu0 %884
        %v886 = vsel %vm715, %v883, 0
        %v888 = vsel %vm715, %v885, 0
        %890 = vmatprep.subr.mxu0 0.0
        %891 = vmatpush1.xpose.msra.mxu0 %v888
        %892 = vmatprep.subr.mxu0 0.0
        %893 = vmatpush1.xpose.msra.mxu0 0.0
        %894 = vmatprep.subr.mxu0 0.0
        %895 = vmatpush1.xpose.msra.mxu0 0.0
        %896 = vmatprep.subr.mxu0 0.0
        %897 = vmatpush1.xpose.msra.mxu0 0.0
        %898 = vmatprep.subr.mxu0 0.0
        %899 = vmatpush1.xpose.msra.mxu0 0.0
        %900 = vmatprep.subr.mxu0 0.0
        %901 = vmatpush1.xpose.msra.mxu0 0.0
        %902 = vmatprep.subr.mxu0 0.0
        %903 = vmatpush1.xpose.msra.mxu0 0.0
        %904 = vmatprep.subr.mxu0 0.0
        %905 = vmatpush1.xpose.msra.mxu0 0.0
        %906 = vmatprep.subr.mxu0 0.0
        %907 = vmatpush1.xpose.msra.mxu0 0.0
        %908 = vmatprep.subr.mxu0 0.0
        %909 = vmatpush1.xpose.msra.mxu0 0.0
        %910 = vmatprep.subr.mxu0 0.0
        %911 = vmatpush1.xpose.msra.mxu0 0.0
        %912 = vmatprep.subr.mxu0 0.0
        %913 = vmatpush1.xpose.msra.mxu0 0.0
        %914 = vmatprep.subr.mxu0 0.0
        %915 = vmatpush1.xpose.msra.mxu0 0.0
        %916 = vmatprep.subr.mxu0 0.0
        %917 = vmatpush1.xpose.msra.mxu0 0.0
        %918 = vmatprep.subr.mxu0 0.0
        %919 = vmatpush1.xpose.msra.mxu0 0.0
        %920 = vmatprep.subr.mxu0 0.0
        %921 = vmatpush1.xpose.msra.mxu0 0.0
        %922 = vmatprep.subr.mxu0 0.0
        %923 = vmatpush1.xpose.msra.mxu0 0.0
        %924 = vmatprep.subr.mxu0 0.0
        %925 = vmatpush1.xpose.msra.mxu0 0.0
        %926 = vmatprep.subr.mxu0 0.0
        %927 = vmatpush1.xpose.msra.mxu0 0.0
        %928 = vmatprep.subr.mxu0 0.0
        %929 = vmatpush1.xpose.msra.mxu0 0.0
        %930 = vmatprep.subr.mxu0 0.0
        %931 = vmatpush1.xpose.msra.mxu0 0.0
        %932 = vmatprep.subr.mxu0 0.0
        %933 = vmatpush1.xpose.msra.mxu0 0.0
        %934 = vmatprep.subr.mxu0 0.0
        %935 = vmatpush1.xpose.msra.mxu0 0.0
        %936 = vmatprep.subr.mxu0 0.0
        %937 = vmatpush1.xpose.msra.mxu0 0.0
        %938 = vmatprep.subr.mxu0 0.0
        %939 = vmatpush1.xpose.msra.mxu0 0.0
        %940 = vmatprep.subr.mxu0 0.0
        %941 = vmatpush1.xpose.msra.mxu0 0.0
        %942 = vmatprep.subr.mxu0 0.0
        %943 = vmatpush1.xpose.msra.mxu0 0.0
        %944 = vmatprep.subr.mxu0 0.0
        %945 = vmatpush1.xpose.msra.mxu0 0.0
        %946 = vmatprep.subr.mxu0 0.0
        %947 = vmatpush1.xpose.msra.mxu0 0.0
        %948 = vmatprep.subr.mxu0 0.0
        %949 = vmatpush1.xpose.msra.mxu0 0.0
        %950 = vmatprep.subr.mxu0 0.0
        %951 = vmatpush1.xpose.msra.mxu0 0.0
        %952 = vmatprep.subr.mxu0 0.0
        %953 = vmatpush1.xpose.msra.mxu0 0.0
        %954 = vmatprep.mubr.f32.mxu0 0.0
        %955 = vmatmul.mubr.f32.gmra.mrb[0].mxu0 %v886
        %v956 = vpop.f32.mrb[0].mxu0
        %v957 = vadd.f32 0.0, %v956
        %v958 = vpop.f32.mrb[0].mxu0
        %959 = vdwg.mxu0
        %v960 = vmul.f32 %v957, 0.088388346
        %v961 = vadd.f32 %v960, %v714
        %v962 = vsel %vm794, %v961, -inf
        %963 = vmax.xlane.f32.xlu0 %v962
        %v964 = vpop.xlane.xlu0 %963
        %v965 = vsub.f32 %v961, %v964
        %v966 = vmul.f32 %v965, 1.442695
        %v967 = vpow.pop %v966
        %v968 = vsel %vm794, %v967, 0.0
        %969 = vadd.xlane.f32.xlu0 %v968
        %v970 = vpop.xlane.xlu0 %969
        %v971 = vrcp.pop %v970
        %v972 = vmul.f32 %v970, %v971
        %v973 = vsub.f32 2.0, %v972
        %v974 = vmul.f32 %v971, %v973
        %v975 = vmul.f32 %v967, %v974
        %977 = vrot.lane.b32.xlu0 %v711, 96
        %v978 = vpop.permute.xlu0 %977
        %v981 = vsel %vm794, %v975, 0
        %983 = vmatprep.subr.mxu0 0.0
        %984 = vmatpush1.msra.mxu0 %v978
        %985 = vmatprep.subr.mxu0 0.0
        %986 = vmatpush1.msra.mxu0 0.0
        %987 = vmatprep.subr.mxu0 0.0
        %988 = vmatpush1.msra.mxu0 0.0
        %989 = vmatprep.subr.mxu0 0.0
        %990 = vmatpush1.msra.mxu0 0.0
        %991 = vmatprep.subr.mxu0 0.0
        %992 = vmatpush1.msra.mxu0 0.0
        %993 = vmatprep.subr.mxu0 0.0
        %994 = vmatpush1.msra.mxu0 0.0
        %995 = vmatprep.subr.mxu0 0.0
        %996 = vmatpush1.msra.mxu0 0.0
        %997 = vmatprep.subr.mxu0 0.0
        %998 = vmatpush1.msra.mxu0 0.0
        %999 = vmatprep.subr.mxu0 0.0
        %1000 = vmatpush1.msra.mxu0 0.0
        %1001 = vmatprep.subr.mxu0 0.0
        %1002 = vmatpush1.msra.mxu0 0.0
        %1003 = vmatprep.subr.mxu0 0.0
        %1004 = vmatpush1.msra.mxu0 0.0
        %1005 = vmatprep.subr.mxu0 0.0
        %1006 = vmatpush1.msra.mxu0 0.0
        %1007 = vmatprep.subr.mxu0 0.0
        %1008 = vmatpush1.msra.mxu0 0.0
        %1009 = vmatprep.subr.mxu0 0.0
        %1010 = vmatpush1.msra.mxu0 0.0
        %1011 = vmatprep.subr.mxu0 0.0
        %1012 = vmatpush1.msra.mxu0 0.0
        %1013 = vmatprep.subr.mxu0 0.0
        %1014 = vmatpush1.msra.mxu0 0.0
        %1015 = vmatprep.subr.mxu0 0.0
        %1016 = vmatpush1.msra.mxu0 0.0
        %1017 = vmatprep.subr.mxu0 0.0
        %1018 = vmatpush1.msra.mxu0 0.0
        %1019 = vmatprep.subr.mxu0 0.0
        %1020 = vmatpush1.msra.mxu0 0.0
        %1021 = vmatprep.subr.mxu0 0.0
        %1022 = vmatpush1.msra.mxu0 0.0
        %1023 = vmatprep.subr.mxu0 0.0
        %1024 = vmatpush1.msra.mxu0 0.0
        %1025 = vmatprep.subr.mxu0 0.0
        %1026 = vmatpush1.msra.mxu0 0.0
        %1027 = vmatprep.subr.mxu0 0.0
        %1028 = vmatpush1.msra.mxu0 0.0
        %1029 = vmatprep.subr.mxu0 0.0
        %1030 = vmatpush1.msra.mxu0 0.0
        %1031 = vmatprep.subr.mxu0 0.0
        %1032 = vmatpush1.msra.mxu0 0.0
        %1033 = vmatprep.subr.mxu0 0.0
        %1034 = vmatpush1.msra.mxu0 0.0
        %1035 = vmatprep.subr.mxu0 0.0
        %1036 = vmatpush1.msra.mxu0 0.0
        %1037 = vmatprep.subr.mxu0 0.0
        %1038 = vmatpush1.msra.mxu0 0.0
        %1039 = vmatprep.subr.mxu0 0.0
        %1040 = vmatpush1.msra.mxu0 0.0
        %1041 = vmatprep.subr.mxu0 0.0
        %1042 = vmatpush1.msra.mxu0 0.0
        %1043 = vmatprep.subr.mxu0 0.0
        %1044 = vmatpush1.msra.mxu0 0.0
        %1045 = vmatprep.subr.mxu0 0.0
        %1046 = vmatpush1.msra.mxu0 0.0
        %1047 = vmatprep.mubr.f32.mxu0 0.0
        %1048 = vmatmul.mubr.f32.gmra.mrb[0].mxu0 %v981
        %v1049 = vpop.f32.mrb[0].mxu0
        %v1050 = vadd.f32 0.0, %v1049
        %v1051 = vpop.f32.mrb[0].mxu0
        %1052 = vdwg.mxu0
        %1053 = vrot.lane.b32.xlu0 %v640, 64
        %v1054 = vpop.permute.xlu0 %1053
        %1055 = vrot.lane.b32.xlu0 %v642, 64
        %v1056 = vpop.permute.xlu0 %1055
        %v1057 = vsel %vm715, %v1054, 0
        %v1059 = vsel %vm715, %v1056, 0
        %1061 = vmatprep.subr.mxu0 0.0
        %1062 = vmatpush1.xpose.msra.mxu0 %v1059
        %1063 = vmatprep.subr.mxu0 0.0
        %1064 = vmatpush1.xpose.msra.mxu0 0.0
        %1065 = vmatprep.subr.mxu0 0.0
        %1066 = vmatpush1.xpose.msra.mxu0 0.0
        %1067 = vmatprep.subr.mxu0 0.0
        %1068 = vmatpush1.xpose.msra.mxu0 0.0
        %1069 = vmatprep.subr.mxu0 0.0
        %1070 = vmatpush1.xpose.msra.mxu0 0.0
        %1071 = vmatprep.subr.mxu0 0.0
        %1072 = vmatpush1.xpose.msra.mxu0 0.0
        %1073 = vmatprep.subr.mxu0 0.0
        %1074 = vmatpush1.xpose.msra.mxu0 0.0
        %1075 = vmatprep.subr.mxu0 0.0
        %1076 = vmatpush1.xpose.msra.mxu0 0.0
        %1077 = vmatprep.subr.mxu0 0.0
        %1078 = vmatpush1.xpose.msra.mxu0 0.0
        %1079 = vmatprep.subr.mxu0 0.0
        %1080 = vmatpush1.xpose.msra.mxu0 0.0
        %1081 = vmatprep.subr.mxu0 0.0
        %1082 = vmatpush1.xpose.msra.mxu0 0.0
        %1083 = vmatprep.subr.mxu0 0.0
        %1084 = vmatpush1.xpose.msra.mxu0 0.0
        %1085 = vmatprep.subr.mxu0 0.0
        %1086 = vmatpush1.xpose.msra.mxu0 0.0
        %1087 = vmatprep.subr.mxu0 0.0
        %1088 = vmatpush1.xpose.msra.mxu0 0.0
        %1089 = vmatprep.subr.mxu0 0.0
        %1090 = vmatpush1.xpose.msra.mxu0 0.0
        %1091 = vmatprep.subr.mxu0 0.0
        %1092 = vmatpush1.xpose.msra.mxu0 0.0
        %1093 = vmatprep.subr.mxu0 0.0
        %1094 = vmatpush1.xpose.msra.mxu0 0.0
        %1095 = vmatprep.subr.mxu0 0.0
        %1096 = vmatpush1.xpose.msra.mxu0 0.0
        %1097 = vmatprep.subr.mxu0 0.0
        %1098 = vmatpush1.xpose.msra.mxu0 0.0
        %1099 = vmatprep.subr.mxu0 0.0
        %1100 = vmatpush1.xpose.msra.mxu0 0.0
        %1101 = vmatprep.subr.mxu0 0.0
        %1102 = vmatpush1.xpose.msra.mxu0 0.0
        %1103 = vmatprep.subr.mxu0 0.0
        %1104 = vmatpush1.xpose.msra.mxu0 0.0
        %1105 = vmatprep.subr.mxu0 0.0
        %1106 = vmatpush1.xpose.msra.mxu0 0.0
        %1107 = vmatprep.subr.mxu0 0.0
        %1108 = vmatpush1.xpose.msra.mxu0 0.0
        %1109 = vmatprep.subr.mxu0 0.0
        %1110 = vmatpush1.xpose.msra.mxu0 0.0
        %1111 = vmatprep.subr.mxu0 0.0
        %1112 = vmatpush1.xpose.msra.mxu0 0.0
        %1113 = vmatprep.subr.mxu0 0.0
        %1114 = vmatpush1.xpose.msra.mxu0 0.0
        %1115 = vmatprep.subr.mxu0 0.0
        %1116 = vmatpush1.xpose.msra.mxu0 0.0
        %1117 = vmatprep.subr.mxu0 0.0
        %1118 = vmatpush1.xpose.msra.mxu0 0.0
        %1119 = vmatprep.subr.mxu0 0.0
        %1120 = vmatpush1.xpose.msra.mxu0 0.0
        %1121 = vmatprep.subr.mxu0 0.0
        %1122 = vmatpush1.xpose.msra.mxu0 0.0
        %1123 = vmatprep.subr.mxu0 0.0
        %1124 = vmatpush1.xpose.msra.mxu0 0.0
        %1125 = vmatprep.mubr.f32.mxu0 0.0
        %1126 = vmatmul.mubr.f32.gmra.mrb[0].mxu0 %v1057
        %v1127 = vpop.f32.mrb[0].mxu0
        %v1128 = vadd.f32 0.0, %v1127
        %v1129 = vpop.f32.mrb[0].mxu0
        %1130 = vdwg.mxu0
        %v1131 = vmul.f32 %v1128, 0.088388346
        %v1132 = vadd.f32 %v1131, %v714
        %v1133 = vsel %vm794, %v1132, -inf
        %1134 = vmax.xlane.f32.xlu0 %v1133
        %v1135 = vpop.xlane.xlu0 %1134
        %v1136 = vsub.f32 %v1132, %v1135
        %v1137 = vmul.f32 %v1136, 1.442695
        %v1138 = vpow.pop %v1137
        %v1139 = vsel %vm794, %v1138, 0.0
        %1140 = vadd.xlane.f32.xlu0 %v1139
        %v1141 = vpop.xlane.xlu0 %1140
        %v1142 = vrcp.pop %v1141
        %v1143 = vmul.f32 %v1141, %v1142
        %v1144 = vsub.f32 2.0, %v1143
        %v1145 = vmul.f32 %v1142, %v1144
        %v1146 = vmul.f32 %v1138, %v1145
        %1147 = vrot.lane.b32.xlu0 %v711, 64
        %v1148 = vpop.permute.xlu0 %1147
        %v1151 = vsel %vm794, %v1146, 0
        %1153 = vmatprep.subr.mxu0 0.0
        %1154 = vmatpush1.msra.mxu0 %v1148
        %1155 = vmatprep.subr.mxu0 0.0
        %1156 = vmatpush1.msra.mxu0 0.0
        %1157 = vmatprep.subr.mxu0 0.0
        %1158 = vmatpush1.msra.mxu0 0.0
        %1159 = vmatprep.subr.mxu0 0.0
        %1160 = vmatpush1.msra.mxu0 0.0
        %1161 = vmatprep.subr.mxu0 0.0
        %1162 = vmatpush1.msra.mxu0 0.0
        %1163 = vmatprep.subr.mxu0 0.0
        %1164 = vmatpush1.msra.mxu0 0.0
        %1165 = vmatprep.subr.mxu0 0.0
        %1166 = vmatpush1.msra.mxu0 0.0
        %1167 = vmatprep.subr.mxu0 0.0
        %1168 = vmatpush1.msra.mxu0 0.0
        %1169 = vmatprep.subr.mxu0 0.0
        %1170 = vmatpush1.msra.mxu0 0.0
        %1171 = vmatprep.subr.mxu0 0.0
        %1172 = vmatpush1.msra.mxu0 0.0
        %1173 = vmatprep.subr.mxu0 0.0
        %1174 = vmatpush1.msra.mxu0 0.0
        %1175 = vmatprep.subr.mxu0 0.0
        %1176 = vmatpush1.msra.mxu0 0.0
        %1177 = vmatprep.subr.mxu0 0.0
        %1178 = vmatpush1.msra.mxu0 0.0
        %1179 = vmatprep.subr.mxu0 0.0
        %1180 = vmatpush1.msra.mxu0 0.0
        %1181 = vmatprep.subr.mxu0 0.0
        %1182 = vmatpush1.msra.mxu0 0.0
        %1183 = vmatprep.subr.mxu0 0.0
        %1184 = vmatpush1.msra.mxu0 0.0
        %1185 = vmatprep.subr.mxu0 0.0
        %1186 = vmatpush1.msra.mxu0 0.0
        %1187 = vmatprep.subr.mxu0 0.0
        %1188 = vmatpush1.msra.mxu0 0.0
        %1189 = vmatprep.subr.mxu0 0.0
        %1190 = vmatpush1.msra.mxu0 0.0
        %1191 = vmatprep.subr.mxu0 0.0
        %1192 = vmatpush1.msra.mxu0 0.0
        %1193 = vmatprep.subr.mxu0 0.0
        %1194 = vmatpush1.msra.mxu0 0.0
        %1195 = vmatprep.subr.mxu0 0.0
        %1196 = vmatpush1.msra.mxu0 0.0
        %1197 = vmatprep.subr.mxu0 0.0
        %1198 = vmatpush1.msra.mxu0 0.0
        %1199 = vmatprep.subr.mxu0 0.0
        %1200 = vmatpush1.msra.mxu0 0.0
        %1201 = vmatprep.subr.mxu0 0.0
        %1202 = vmatpush1.msra.mxu0 0.0
        %1203 = vmatprep.subr.mxu0 0.0
        %1204 = vmatpush1.msra.mxu0 0.0
        %1205 = vmatprep.subr.mxu0 0.0
        %1206 = vmatpush1.msra.mxu0 0.0
        %1207 = vmatprep.subr.mxu0 0.0
        %1208 = vmatpush1.msra.mxu0 0.0
        %1209 = vmatprep.subr.mxu0 0.0
        %1210 = vmatpush1.msra.mxu0 0.0
        %1211 = vmatprep.subr.mxu0 0.0
        %1212 = vmatpush1.msra.mxu0 0.0
        %1213 = vmatprep.subr.mxu0 0.0
        %1214 = vmatpush1.msra.mxu0 0.0
        %1215 = vmatprep.subr.mxu0 0.0
        %1216 = vmatpush1.msra.mxu0 0.0
        %1217 = vmatprep.mubr.f32.mxu0 0.0
        %1218 = vmatmul.mubr.f32.gmra.mrb[0].mxu0 %v1151
        %v1219 = vpop.f32.mrb[0].mxu0
        %v1220 = vadd.f32 0.0, %v1219
        %v1221 = vpop.f32.mrb[0].mxu0
        %1222 = vdwg.mxu0
        %1223 = vrot.lane.b32.xlu0 %v640, 32
        %v1224 = vpop.permute.xlu0 %1223
        %1225 = vrot.lane.b32.xlu0 %v642, 32
        %v1226 = vpop.permute.xlu0 %1225
        %v1227 = vsel %vm715, %v1224, 0
        %v1229 = vsel %vm715, %v1226, 0
        %1231 = vmatprep.subr.mxu0 0.0
        %1232 = vmatpush1.xpose.msra.mxu0 %v1229
        %1233 = vmatprep.subr.mxu0 0.0
        %1234 = vmatpush1.xpose.msra.mxu0 0.0
        %1235 = vmatprep.subr.mxu0 0.0
        %1236 = vmatpush1.xpose.msra.mxu0 0.0
        %1237 = vmatprep.subr.mxu0 0.0
        %1238 = vmatpush1.xpose.msra.mxu0 0.0
        %1239 = vmatprep.subr.mxu0 0.0
        %1240 = vmatpush1.xpose.msra.mxu0 0.0
        %1241 = vmatprep.subr.mxu0 0.0
        %1242 = vmatpush1.xpose.msra.mxu0 0.0
        %1243 = vmatprep.subr.mxu0 0.0
        %1244 = vmatpush1.xpose.msra.mxu0 0.0
        %1245 = vmatprep.subr.mxu0 0.0
        %1246 = vmatpush1.xpose.msra.mxu0 0.0
        %1247 = vmatprep.subr.mxu0 0.0
        %1248 = vmatpush1.xpose.msra.mxu0 0.0
        %1249 = vmatprep.subr.mxu0 0.0
        %1250 = vmatpush1.xpose.msra.mxu0 0.0
        %1251 = vmatprep.subr.mxu0 0.0
        %1252 = vmatpush1.xpose.msra.mxu0 0.0
        %1253 = vmatprep.subr.mxu0 0.0
        %1254 = vmatpush1.xpose.msra.mxu0 0.0
        %1255 = vmatprep.subr.mxu0 0.0
        %1256 = vmatpush1.xpose.msra.mxu0 0.0
        %1257 = vmatprep.subr.mxu0 0.0
        %1258 = vmatpush1.xpose.msra.mxu0 0.0
        %1259 = vmatprep.subr.mxu0 0.0
        %1260 = vmatpush1.xpose.msra.mxu0 0.0
        %1261 = vmatprep.subr.mxu0 0.0
        %1262 = vmatpush1.xpose.msra.mxu0 0.0
        %1263 = vmatprep.subr.mxu0 0.0
        %1264 = vmatpush1.xpose.msra.mxu0 0.0
        %1265 = vmatprep.subr.mxu0 0.0
        %1266 = vmatpush1.xpose.msra.mxu0 0.0
        %1267 = vmatprep.subr.mxu0 0.0
        %1268 = vmatpush1.xpose.msra.mxu0 0.0
        %1269 = vmatprep.subr.mxu0 0.0
        %1270 = vmatpush1.xpose.msra.mxu0 0.0
        %1271 = vmatprep.subr.mxu0 0.0
        %1272 = vmatpush1.xpose.msra.mxu0 0.0
        %1273 = vmatprep.subr.mxu0 0.0
        %1274 = vmatpush1.xpose.msra.mxu0 0.0
        %1275 = vmatprep.subr.mxu0 0.0
        %1276 = vmatpush1.xpose.msra.mxu0 0.0
        %1277 = vmatprep.subr.mxu0 0.0
        %1278 = vmatpush1.xpose.msra.mxu0 0.0
        %1279 = vmatprep.subr.mxu0 0.0
        %1280 = vmatpush1.xpose.msra.mxu0 0.0
        %1281 = vmatprep.subr.mxu0 0.0
        %1282 = vmatpush1.xpose.msra.mxu0 0.0
        %1283 = vmatprep.subr.mxu0 0.0
        %1284 = vmatpush1.xpose.msra.mxu0 0.0
        %1285 = vmatprep.subr.mxu0 0.0
        %1286 = vmatpush1.xpose.msra.mxu0 0.0
        %1287 = vmatprep.subr.mxu0 0.0
        %1288 = vmatpush1.xpose.msra.mxu0 0.0
        %1289 = vmatprep.subr.mxu0 0.0
        %1290 = vmatpush1.xpose.msra.mxu0 0.0
        %1291 = vmatprep.subr.mxu0 0.0
        %1292 = vmatpush1.xpose.msra.mxu0 0.0
        %1293 = vmatprep.subr.mxu0 0.0
        %1294 = vmatpush1.xpose.msra.mxu0 0.0
        %1295 = vmatprep.mubr.f32.mxu0 0.0
        %1296 = vmatmul.mubr.f32.gmra.mrb[0].mxu0 %v1227
        %v1297 = vpop.f32.mrb[0].mxu0
        %v1298 = vadd.f32 0.0, %v1297
        %v1299 = vpop.f32.mrb[0].mxu0
        %1300 = vdwg.mxu0
        %v1301 = vmul.f32 %v1298, 0.088388346
        %v1302 = vadd.f32 %v1301, %v714
        %v1303 = vsel %vm794, %v1302, -inf
        %1304 = vmax.xlane.f32.xlu0 %v1303
        %v1305 = vpop.xlane.xlu0 %1304
        %v1306 = vsub.f32 %v1302, %v1305
        %v1307 = vmul.f32 %v1306, 1.442695
        %v1308 = vpow.pop %v1307
        %v1309 = vsel %vm794, %v1308, 0.0
        %1310 = vadd.xlane.f32.xlu0 %v1309
        %v1311 = vpop.xlane.xlu0 %1310
        %v1312 = vrcp.pop %v1311
        %v1313 = vmul.f32 %v1311, %v1312
        %v1314 = vsub.f32 2.0, %v1313
        %v1315 = vmul.f32 %v1312, %v1314
        %v1316 = vmul.f32 %v1308, %v1315
        %1317 = vrot.lane.b32.xlu0 %v711, 32
        %v1318 = vpop.permute.xlu0 %1317
        %v1321 = vsel %vm794, %v1316, 0
        %1323 = vmatprep.subr.mxu0 0.0
        %1324 = vmatpush1.msra.mxu0 %v1318
        %1325 = vmatprep.subr.mxu0 0.0
        %1326 = vmatpush1.msra.mxu0 0.0
        %1327 = vmatprep.subr.mxu0 0.0
        %1328 = vmatpush1.msra.mxu0 0.0
        %1329 = vmatprep.subr.mxu0 0.0
        %1330 = vmatpush1.msra.mxu0 0.0
        %1331 = vmatprep.subr.mxu0 0.0
        %1332 = vmatpush1.msra.mxu0 0.0
        %1333 = vmatprep.subr.mxu0 0.0
        %1334 = vmatpush1.msra.mxu0 0.0
        %1335 = vmatprep.subr.mxu0 0.0
        %1336 = vmatpush1.msra.mxu0 0.0
        %1337 = vmatprep.subr.mxu0 0.0
        %1338 = vmatpush1.msra.mxu0 0.0
        %1339 = vmatprep.subr.mxu0 0.0
        %1340 = vmatpush1.msra.mxu0 0.0
        %1341 = vmatprep.subr.mxu0 0.0
        %1342 = vmatpush1.msra.mxu0 0.0
        %1343 = vmatprep.subr.mxu0 0.0
        %1344 = vmatpush1.msra.mxu0 0.0
        %1345 = vmatprep.subr.mxu0 0.0
        %1346 = vmatpush1.msra.mxu0 0.0
        %1347 = vmatprep.subr.mxu0 0.0
        %1348 = vmatpush1.msra.mxu0 0.0
        %1349 = vmatprep.subr.mxu0 0.0
        %1350 = vmatpush1.msra.mxu0 0.0
        %1351 = vmatprep.subr.mxu0 0.0
        %1352 = vmatpush1.msra.mxu0 0.0
        %1353 = vmatprep.subr.mxu0 0.0
        %1354 = vmatpush1.msra.mxu0 0.0
        %1355 = vmatprep.subr.mxu0 0.0
        %1356 = vmatpush1.msra.mxu0 0.0
        %1357 = vmatprep.subr.mxu0 0.0
        %1358 = vmatpush1.msra.mxu0 0.0
        %1359 = vmatprep.subr.mxu0 0.0
        %1360 = vmatpush1.msra.mxu0 0.0
        %1361 = vmatprep.subr.mxu0 0.0
        %1362 = vmatpush1.msra.mxu0 0.0
        %1363 = vmatprep.subr.mxu0 0.0
        %1364 = vmatpush1.msra.mxu0 0.0
        %1365 = vmatprep.subr.mxu0 0.0
        %1366 = vmatpush1.msra.mxu0 0.0
        %1367 = vmatprep.subr.mxu0 0.0
        %1368 = vmatpush1.msra.mxu0 0.0
        %1369 = vmatprep.subr.mxu0 0.0
        %1370 = vmatpush1.msra.mxu0 0.0
        %1371 = vmatprep.subr.mxu0 0.0
        %1372 = vmatpush1.msra.mxu0 0.0
        %1373 = vmatprep.subr.mxu0 0.0
        %1374 = vmatpush1.msra.mxu0 0.0
        %1375 = vmatprep.subr.mxu0 0.0
        %1376 = vmatpush1.msra.mxu0 0.0
        %1377 = vmatprep.subr.mxu0 0.0
        %1378 = vmatpush1.msra.mxu0 0.0
        %1379 = vmatprep.subr.mxu0 0.0
        %1380 = vmatpush1.msra.mxu0 0.0
        %1381 = vmatprep.subr.mxu0 0.0
        %1382 = vmatpush1.msra.mxu0 0.0
        %1383 = vmatprep.subr.mxu0 0.0
        %1384 = vmatpush1.msra.mxu0 0.0
        %1385 = vmatprep.subr.mxu0 0.0
        %1386 = vmatpush1.msra.mxu0 0.0
        %1387 = vmatprep.mubr.f32.mxu0 0.0
        %1388 = vmatmul.mubr.f32.gmra.mrb[0].mxu0 %v1321
        %v1389 = vpop.f32.mrb[0].mxu0
        %v1390 = vadd.f32 0.0, %v1389
        %v1391 = vpop.f32.mrb[0].mxu0
        %1392 = vdwg.mxu0
        %1394 = vrot.lane.b32.xlu0 %v1050, 32
        %v1395 = vpop.permute.xlu0 %1394
        %1398 = vrot.lane.b32.xlu0 %v1220, 64
        %v1399 = vpop.permute.xlu0 %1398
        %1402 = vrot.lane.b32.xlu0 %v1390, 96
        %v1403 = vpop.permute.xlu0 %1402
        %v1405 = vsel %vm715, %v879, %v1395
        %vm1406 = vcmask 523264
        %v1407 = vsel %vm1406, %v1405, %v1399
        %vm1408 = vcmask 785408
        %v1409 = vsel %vm1408, %v1407, %v1403
        %1410 = vst [vmem:[#allocation2] sm:$0xff] %v1409
        %v1411 = vld [vmem:[#allocation2] sm:$0xff]
        %v1412 = vld [vmem:[#allocation9] sm:$0xff]
        %v1413 = vld [vmem:[#allocation9 + $0x8] sm:$0xff]
        %v1414 = vld [vmem:[#allocation9 + $0x10] sm:$0xff]
        %v1415 = vld [vmem:[#allocation9 + $0x18] sm:$0xff]
        %v1416 = vld [vmem:[#allocation9 + $0x20] sm:$0xff]
        %v1417 = vld [vmem:[#allocation9 + $0x28] sm:$0xff]
        %v1418 = vld [vmem:[#allocation9 + $0x30] sm:$0xff]
        %v1419 = vld [vmem:[#allocation9 + $0x38] sm:$0xff]
        %v1420 = vld [vmem:[#allocation9 + $0x40] sm:$0xff]
        %v1421 = vld [vmem:[#allocation9 + $0x48] sm:$0xff]
        %v1422 = vld [vmem:[#allocation9 + $0x50] sm:$0xff]
        %v1423 = vld [vmem:[#allocation9 + $0x58] sm:$0xff]
        %v1424 = vld [vmem:[#allocation9 + $0x60] sm:$0xff]
        %v1425 = vld [vmem:[#allocation9 + $0x68] sm:$0xff]
        %v1426 = vld [vmem:[#allocation9 + $0x70] sm:$0xff]
        %v1427 = vld [vmem:[#allocation9 + $0x78] sm:$0xff]
        %1428 = vmatprep.subr.mxu0 0.0
        %1429 = vmatpush1.msra.mxu0 %v1412
        %1430 = vmatprep.subr.mxu0 0.0
        %1431 = vmatpush1.msra.mxu0 %v1413
        %1432 = vmatprep.subr.mxu0 0.0
        %1433 = vmatpush1.msra.mxu0 %v1414
        %1434 = vmatprep.subr.mxu0 0.0
        %1435 = vmatpush1.msra.mxu0 %v1415
        %1436 = vmatprep.subr.mxu0 0.0
        %1437 = vmatpush1.msra.mxu0 %v1416
        %1438 = vmatprep.subr.mxu0 0.0
        %1439 = vmatpush1.msra.mxu0 %v1417
        %1440 = vmatprep.subr.mxu0 0.0
        %1441 = vmatpush1.msra.mxu0 %v1418
        %1442 = vmatprep.subr.mxu0 0.0
        %1443 = vmatpush1.msra.mxu0 %v1419
        %1444 = vmatprep.subr.mxu0 0.0
        %1445 = vmatpush1.msra.mxu0 %v1420
        %1446 = vmatprep.subr.mxu0 0.0
        %1447 = vmatpush1.msra.mxu0 %v1421
        %1448 = vmatprep.subr.mxu0 0.0
        %1449 = vmatpush1.msra.mxu0 %v1422
        %1450 = vmatprep.subr.mxu0 0.0
        %1451 = vmatpush1.msra.mxu0 %v1423
        %1452 = vmatprep.subr.mxu0 0.0
        %1453 = vmatpush1.msra.mxu0 %v1424
        %1454 = vmatprep.subr.mxu0 0.0
        %1455 = vmatpush1.msra.mxu0 %v1425
        %1456 = vmatprep.subr.mxu0 0.0
        %1457 = vmatpush1.msra.mxu0 %v1426
        %1458 = vmatprep.subr.mxu0 0.0
        %1459 = vmatpush1.msra.mxu0 %v1427
        %1460 = vmatprep.subr.mxu0 0.0
        %1461 = vmatpush1.msra.mxu0 0.0
        %1462 = vmatprep.subr.mxu0 0.0
        %1463 = vmatpush1.msra.mxu0 0.0
        %1464 = vmatprep.subr.mxu0 0.0
        %1465 = vmatpush1.msra.mxu0 0.0
        %1466 = vmatprep.subr.mxu0 0.0
        %1467 = vmatpush1.msra.mxu0 0.0
        %1468 = vmatprep.subr.mxu0 0.0
        %1469 = vmatpush1.msra.mxu0 0.0
        %1470 = vmatprep.subr.mxu0 0.0
        %1471 = vmatpush1.msra.mxu0 0.0
        %1472 = vmatprep.subr.mxu0 0.0
        %1473 = vmatpush1.msra.mxu0 0.0
        %1474 = vmatprep.subr.mxu0 0.0
        %1475 = vmatpush1.msra.mxu0 0.0
        %1476 = vmatprep.subr.mxu0 0.0
        %1477 = vmatpush1.msra.mxu0 0.0
        %1478 = vmatprep.subr.mxu0 0.0
        %1479 = vmatpush1.msra.mxu0 0.0
        %1480 = vmatprep.subr.mxu0 0.0
        %1481 = vmatpush1.msra.mxu0 0.0
        %1482 = vmatprep.subr.mxu0 0.0
        %1483 = vmatpush1.msra.mxu0 0.0
        %1484 = vmatprep.subr.mxu0 0.0
        %1485 = vmatpush1.msra.mxu0 0.0
        %1486 = vmatprep.subr.mxu0 0.0
        %1487 = vmatpush1.msra.mxu0 0.0
        %1488 = vmatprep.subr.mxu0 0.0
        %1489 = vmatpush1.msra.mxu0 0.0
        %1490 = vmatprep.subr.mxu0 0.0
        %1491 = vmatpush1.msra.mxu0 0.0
        %1492 = vmatprep.mubr.f32.mxu0 0.0
        %1493 = vmatmul.mubr.f32.gmra.mrb[0].mxu0 %v1411
        %v1494 = vpop.f32.mrb[0].mxu0
        %v1495 = vadd.f32 %v524, %v1494
        %v1496 = vpop.f32.mrb[0].mxu0
        %1497 = vdwg.mxu0
        %v1498 = vld [vmem:[%s4] sm:$0x1]
        %v1499 = vld [vmem:[%s5] sm:$0x1]
        %1500 = vadd.xlane.f32.xlu0 %v1495
        %v1501 = vpop.xlane.xlu0 %1500
        %v1502 = vrcp.pop 128.0
        %v1503 = vmul.f32 %v1501, %v1502
        %v1504 = vmul.f32 %v1495, %v1495
        %1505 = vadd.xlane.f32.xlu0 %v1504
        %v1506 = vpop.xlane.xlu0 %1505
        %v1507 = vmul.f32 %v1506, %v1502
        %v1508 = vmul.f32 %v1503, %v1503
        %v1509 = vsub.f32 %v1507, %v1508
        %v1510 = vsub.f32 %v1495, %v1503
        %v1511 = vadd.f32 %v1509, 1e-05
        %v1512 = vrsqrt.pop %v1511
        %v1513 = vmul.f32 %v1510, %v1512
        %v1515 = vlaneseq
        %v1516 = vshrl.u32 %v1515, 7
        %v1517 = vsub.s32 0, %v1516
        %v1518 = vrot.slane %v1498, %v1517
        %v1520 = vmul.f32 %v1513, %v1518
        %v1522 = vlaneseq
        %v1523 = vshrl.u32 %v1522, 7
        %v1524 = vsub.s32 0, %v1523
        %v1525 = vrot.slane %v1499, %v1524
        %v1527 = vadd.f32 %v1520, %v1525
        %v1528 = vld [vmem:[#allocation11] sm:$0xff]
        %v1529 = vld [vmem:[#allocation11 + $0x8] sm:$0xff]
        %v1530 = vld [vmem:[#allocation11 + $0x10] sm:$0xff]
        %v1531 = vld [vmem:[#allocation11 + $0x18] sm:$0xff]
        %v1532 = vld [vmem:[#allocation11 + $0x20] sm:$0xff]
        %v1533 = vld [vmem:[#allocation11 + $0x28] sm:$0xff]
        %v1534 = vld [vmem:[#allocation11 + $0x30] sm:$0xff]
        %v1535 = vld [vmem:[#allocation11 + $0x38] sm:$0xff]
        %v1536 = vld [vmem:[#allocation11 + $0x40] sm:$0xff]
        %v1537 = vld [vmem:[#allocation11 + $0x48] sm:$0xff]
        %v1538 = vld [vmem:[#allocation11 + $0x50] sm:$0xff]
        %v1539 = vld [vmem:[#allocation11 + $0x58] sm:$0xff]
        %v1540 = vld [vmem:[#allocation11 + $0x60] sm:$0xff]
        %v1541 = vld [vmem:[#allocation11 + $0x68] sm:$0xff]
        %v1542 = vld [vmem:[#allocation11 + $0x70] sm:$0xff]
        %v1543 = vld [vmem:[#allocation11 + $0x78] sm:$0xff]
        %v1544 = vld [vmem:[#allocation11 + $0x80] sm:$0xff]
        %v1545 = vld [vmem:[#allocation11 + $0x88] sm:$0xff]
        %v1546 = vld [vmem:[#allocation11 + $0x90] sm:$0xff]
        %v1547 = vld [vmem:[#allocation11 + $0x98] sm:$0xff]
        %v1548 = vld [vmem:[#allocation11 + $0xa0] sm:$0xff]
        %v1549 = vld [vmem:[#allocation11 + $0xa8] sm:$0xff]
        %v1550 = vld [vmem:[#allocation11 + $0xb0] sm:$0xff]
        %v1551 = vld [vmem:[#allocation11 + $0xb8] sm:$0xff]
        %v1552 = vld [vmem:[#allocation11 + $0xc0] sm:$0xff]
        %v1553 = vld [vmem:[#allocation11 + $0xc8] sm:$0xff]
        %v1554 = vld [vmem:[#allocation11 + $0xd0] sm:$0xff]
        %v1555 = vld [vmem:[#allocation11 + $0xd8] sm:$0xff]
        %v1556 = vld [vmem:[#allocation11 + $0xe0] sm:$0xff]
        %v1557 = vld [vmem:[#allocation11 + $0xe8] sm:$0xff]
        %v1558 = vld [vmem:[#allocation11 + $0xf0] sm:$0xff]
        %v1559 = vld [vmem:[#allocation11 + $0xf8] sm:$0xff]
        %v1560 = vld [vmem:[#allocation11 + $0x100] sm:$0xff]
        %v1561 = vld [vmem:[#allocation11 + $0x108] sm:$0xff]
        %v1562 = vld [vmem:[#allocation11 + $0x110] sm:$0xff]
        %v1563 = vld [vmem:[#allocation11 + $0x118] sm:$0xff]
        %v1564 = vld [vmem:[#allocation11 + $0x120] sm:$0xff]
        %v1565 = vld [vmem:[#allocation11 + $0x128] sm:$0xff]
        %v1566 = vld [vmem:[#allocation11 + $0x130] sm:$0xff]
        %v1567 = vld [vmem:[#allocation11 + $0x138] sm:$0xff]
        %v1568 = vld [vmem:[#allocation11 + $0x140] sm:$0xff]
        %v1569 = vld [vmem:[#allocation11 + $0x148] sm:$0xff]
        %v1570 = vld [vmem:[#allocation11 + $0x150] sm:$0xff]
        %v1571 = vld [vmem:[#allocation11 + $0x158] sm:$0xff]
        %v1572 = vld [vmem:[#allocation11 + $0x160] sm:$0xff]
        %v1573 = vld [vmem:[#allocation11 + $0x168] sm:$0xff]
        %v1574 = vld [vmem:[#allocation11 + $0x170] sm:$0xff]
        %v1575 = vld [vmem:[#allocation11 + $0x178] sm:$0xff]
        %v1576 = vld [vmem:[#allocation11 + $0x180] sm:$0xff]
        %v1577 = vld [vmem:[#allocation11 + $0x188] sm:$0xff]
        %v1578 = vld [vmem:[#allocation11 + $0x190] sm:$0xff]
        %v1579 = vld [vmem:[#allocation11 + $0x198] sm:$0xff]
        %v1580 = vld [vmem:[#allocation11 + $0x1a0] sm:$0xff]
        %v1581 = vld [vmem:[#allocation11 + $0x1a8] sm:$0xff]
        %v1582 = vld [vmem:[#allocation11 + $0x1b0] sm:$0xff]
        %v1583 = vld [vmem:[#allocation11 + $0x1b8] sm:$0xff]
        %v1584 = vld [vmem:[#allocation11 + $0x1c0] sm:$0xff]
        %v1585 = vld [vmem:[#allocation11 + $0x1c8] sm:$0xff]
        %v1586 = vld [vmem:[#allocation11 + $0x1d0] sm:$0xff]
        %v1587 = vld [vmem:[#allocation11 + $0x1d8] sm:$0xff]
        %v1588 = vld [vmem:[#allocation11 + $0x1e0] sm:$0xff]
        %v1589 = vld [vmem:[#allocation11 + $0x1e8] sm:$0xff]
        %v1590 = vld [vmem:[#allocation11 + $0x1f0] sm:$0xff]
        %v1591 = vld [vmem:[#allocation11 + $0x1f8] sm:$0xff]
        %v1592 = vld [vmem:[%s9] sm:$0xf]
        %v1594 = vlaneseq
        %v1595 = vshrl.u32 %v1594, 7
        %v1596 = vsub.s32 0, %v1595
        %v1597 = vrot.slane %v1592, %v1596
        %v1598 = vlaneseq
        %v1599 = vshrl.u32 %v1598, 7
        %v1600 = vsub.s32 1, %v1599
        %v1601 = vrot.slane %v1592, %v1600
        %v1602 = vlaneseq
        %v1603 = vshrl.u32 %v1602, 7
        %v1604 = vsub.s32 2, %v1603
        %v1605 = vrot.slane %v1592, %v1604
        %v1606 = vlaneseq
        %v1607 = vshrl.u32 %v1606, 7
        %v1608 = vsub.s32 3, %v1607
        %v1609 = vrot.slane %v1592, %v1608
        %1614 = vmatprep.subr.mxu0 %v1529
        %1615 = vmatpush1.msra.mxu0 %v1528
        %1616 = vmatprep.subr.mxu0 %v1533
        %1617 = vmatpush1.msra.mxu0 %v1532
        %1618 = vmatprep.subr.mxu0 %v1537
        %1619 = vmatpush1.msra.mxu0 %v1536
        %1620 = vmatprep.subr.mxu0 %v1541
        %1621 = vmatpush1.msra.mxu0 %v1540
        %1622 = vmatprep.subr.mxu0 %v1545
        %1623 = vmatpush1.msra.mxu0 %v1544
        %1624 = vmatprep.subr.mxu0 %v1549
        %1625 = vmatpush1.msra.mxu0 %v1548
        %1626 = vmatprep.subr.mxu0 %v1553
        %1627 = vmatpush1.msra.mxu0 %v1552
        %1628 = vmatprep.subr.mxu0 %v1557
        %1629 = vmatpush1.msra.mxu0 %v1556
        %1630 = vmatprep.subr.mxu0 %v1561
        %1631 = vmatpush1.msra.mxu0 %v1560
        %1632 = vmatprep.subr.mxu0 %v1565
        %1633 = vmatpush1.msra.mxu0 %v1564
        %1634 = vmatprep.subr.mxu0 %v1569
        %1635 = vmatpush1.msra.mxu0 %v1568
        %1636 = vmatprep.subr.mxu0 %v1573
        %1637 = vmatpush1.msra.mxu0 %v1572
        %1638 = vmatprep.subr.mxu0 %v1577
        %1639 = vmatpush1.msra.mxu0 %v1576
        %1640 = vmatprep.subr.mxu0 %v1581
        %1641 = vmatpush1.msra.mxu0 %v1580
        %1642 = vmatprep.subr.mxu0 %v1585
        %1643 = vmatpush1.msra.mxu0 %v1584
        %1644 = vmatprep.subr.mxu0 %v1589
        %1645 = vmatpush1.msra.mxu0 %v1588
        %1646 = vmatprep.subr.mxu0 0.0
        %1647 = vmatpush1.msra.mxu0 0.0
        %1648 = vmatprep.subr.mxu0 0.0
        %1649 = vmatpush1.msra.mxu0 0.0
        %1650 = vmatprep.subr.mxu0 0.0
        %1651 = vmatpush1.msra.mxu0 0.0
        %1652 = vmatprep.subr.mxu0 0.0
        %1653 = vmatpush1.msra.mxu0 0.0
        %1654 = vmatprep.subr.mxu0 0.0
        %1655 = vmatpush1.msra.mxu0 0.0
        %1656 = vmatprep.subr.mxu0 0.0
        %1657 = vmatpush1.msra.mxu0 0.0
        %1658 = vmatprep.subr.mxu0 0.0
        %1659 = vmatpush1.msra.mxu0 0.0
        %1660 = vmatprep.subr.mxu0 0.0
        %1661 = vmatpush1.msra.mxu0 0.0
        %1662 = vmatprep.subr.mxu0 0.0
        %1663 = vmatpush1.msra.mxu0 0.0
        %1664 = vmatprep.subr.mxu0 0.0
        %1665 = vmatpush1.msra.mxu0 0.0
        %1666 = vmatprep.subr.mxu0 0.0
        %1667 = vmatpush1.msra.mxu0 0.0
        %1668 = vmatprep.subr.mxu0 0.0
        %1669 = vmatpush1.msra.mxu0 0.0
        %1670 = vmatprep.subr.mxu0 0.0
        %1671 = vmatpush1.msra.mxu0 0.0
        %1672 = vmatprep.subr.mxu0 0.0
        %1673 = vmatpush1.msra.mxu0 0.0
        %1674 = vmatprep.subr.mxu0 0.0
        %1675 = vmatpush1.msra.mxu0 0.0
        %1676 = vmatprep.subr.mxu0 0.0
        %1677 = vmatpush1.msra.mxu0 0.0
        %1678 = vmatprep.mubr.f32.mxu0 0.0
        %1679 = vmatmul.mubr.f32.gmra.mrb[0].mxu0 %v1527
        %v1680 = vpop.f32.mrb[0].mxu0
        %v1681 = vadd.f32 %v1597, %v1680
        %v1682 = vpop.f32.mrb[0].mxu0
        %v1683 = vadd.f32 %v1601, %v1682
        %1684 = vdwg.mxu0
        %1685 = vmatprep.subr.mxu0 %v1531
        %1686 = vmatpush1.msra.mxu0 %v1530
        %1687 = vmatprep.subr.mxu0 %v1535
        %1688 = vmatpush1.msra.mxu0 %v1534
        %1689 = vmatprep.subr.mxu0 %v1539
        %1690 = vmatpush1.msra.mxu0 %v1538
        %1691 = vmatprep.subr.mxu0 %v1543
        %1692 = vmatpush1.msra.mxu0 %v1542
        %1693 = vmatprep.subr.mxu0 %v1547
        %1694 = vmatpush1.msra.mxu0 %v1546
        %1695 = vmatprep.subr.mxu0 %v1551
        %1696 = vmatpush1.msra.mxu0 %v1550
        %1697 = vmatprep.subr.mxu0 %v1555
        %1698 = vmatpush1.msra.mxu0 %v1554
        %1699 = vmatprep.subr.mxu0 %v1559
        %1700 = vmatpush1.msra.mxu0 %v1558
        %1701 = vmatprep.subr.mxu0 %v1563
        %1702 = vmatpush1.msra.mxu0 %v1562
        %1703 = vmatprep.subr.mxu0 %v1567
        %1704 = vmatpush1.msra.mxu0 %v1566
        %1705 = vmatprep.subr.mxu0 %v1571
        %1706 = vmatpush1.msra.mxu0 %v1570
        %1707 = vmatprep.subr.mxu0 %v1575
        %1708 = vmatpush1.msra.mxu0 %v1574
        %1709 = vmatprep.subr.mxu0 %v1579
        %1710 = vmatpush1.msra.mxu0 %v1578
        %1711 = vmatprep.subr.mxu0 %v1583
        %1712 = vmatpush1.msra.mxu0 %v1582
        %1713 = vmatprep.subr.mxu0 %v1587
        %1714 = vmatpush1.msra.mxu0 %v1586
        %1715 = vmatprep.subr.mxu0 %v1591
        %1716 = vmatpush1.msra.mxu0 %v1590
        %1717 = vmatprep.subr.mxu0 0.0
        %1718 = vmatpush1.msra.mxu0 0.0
        %1719 = vmatprep.subr.mxu0 0.0
        %1720 = vmatpush1.msra.mxu0 0.0
        %1721 = vmatprep.subr.mxu0 0.0
        %1722 = vmatpush1.msra.mxu0 0.0
        %1723 = vmatprep.subr.mxu0 0.0
        %1724 = vmatpush1.msra.mxu0 0.0
        %1725 = vmatprep.subr.mxu0 0.0
        %1726 = vmatpush1.msra.mxu0 0.0
        %1727 = vmatprep.subr.mxu0 0.0
        %1728 = vmatpush1.msra.mxu0 0.0
        %1729 = vmatprep.subr.mxu0 0.0
        %1730 = vmatpush1.msra.mxu0 0.0
        %1731 = vmatprep.subr.mxu0 0.0
        %1732 = vmatpush1.msra.mxu0 0.0
        %1733 = vmatprep.subr.mxu0 0.0
        %1734 = vmatpush1.msra.mxu0 0.0
        %1735 = vmatprep.subr.mxu0 0.0
        %1736 = vmatpush1.msra.mxu0 0.0
        %1737 = vmatprep.subr.mxu0 0.0
        %1738 = vmatpush1.msra.mxu0 0.0
        %1739 = vmatprep.subr.mxu0 0.0
        %1740 = vmatpush1.msra.mxu0 0.0
        %1741 = vmatprep.subr.mxu0 0.0
        %1742 = vmatpush1.msra.mxu0 0.0
        %1743 = vmatprep.subr.mxu0 0.0
        %1744 = vmatpush1.msra.mxu0 0.0
        %1745 = vmatprep.subr.mxu0 0.0
        %1746 = vmatpush1.msra.mxu0 0.0
        %1747 = vmatprep.subr.mxu0 0.0
        %1748 = vmatpush1.msra.mxu0 0.0
        %1749 = vmatprep.mubr.f32.mxu0 0.0
        %1750 = vmatmul.mubr.f32.gmra.mrb[0].mxu0 %v1527
        %v1751 = vpop.f32.mrb[0].mxu0
        %v1752 = vadd.f32 %v1605, %v1751
        %v1753 = vpop.f32.mrb[0].mxu0
        %v1754 = vadd.f32 %v1609, %v1753
        %1755 = vdwg.mxu0
        %v1756 = vmax.f32 %v1681, 0.0
        %v1757 = vmax.f32 %v1683, 0.0
        %v1758 = vmax.f32 %v1752, 0.0
        %v1759 = vmax.f32 %v1754, 0.0
        %v1760 = vld [vmem:[#allocation12] sm:$0xff]
        %v1761 = vld [vmem:[#allocation12 + $0x8] sm:$0xff]
        %v1762 = vld [vmem:[#allocation12 + $0x10] sm:$0xff]
        %v1763 = vld [vmem:[#allocation12 + $0x18] sm:$0xff]
        %v1764 = vld [vmem:[#allocation12 + $0x20] sm:$0xff]
        %v1765 = vld [vmem:[#allocation12 + $0x28] sm:$0xff]
        %v1766 = vld [vmem:[#allocation12 + $0x30] sm:$0xff]
        %v1767 = vld [vmem:[#allocation12 + $0x38] sm:$0xff]
        %v1768 = vld [vmem:[#allocation12 + $0x40] sm:$0xff]
        %v1769 = vld [vmem:[#allocation12 + $0x48] sm:$0xff]
        %v1770 = vld [vmem:[#allocation12 + $0x50] sm:$0xff]
        %v1771 = vld [vmem:[#allocation12 + $0x58] sm:$0xff]
        %v1772 = vld [vmem:[#allocation12 + $0x60] sm:$0xff]
        %v1773 = vld [vmem:[#allocation12 + $0x68] sm:$0xff]
        %v1774 = vld [vmem:[#allocation12 + $0x70] sm:$0xff]
        %v1775 = vld [vmem:[#allocation12 + $0x78] sm:$0xff]
        %v1776 = vld [vmem:[#allocation12 + $0x80] sm:$0xff]
        %v1777 = vld [vmem:[#allocation12 + $0x88] sm:$0xff]
        %v1778 = vld [vmem:[#allocation12 + $0x90] sm:$0xff]
        %v1779 = vld [vmem:[#allocation12 + $0x98] sm:$0xff]
        %v1780 = vld [vmem:[#allocation12 + $0xa0] sm:$0xff]
        %v1781 = vld [vmem:[#allocation12 + $0xa8] sm:$0xff]
        %v1782 = vld [vmem:[#allocation12 + $0xb0] sm:$0xff]
        %v1783 = vld [vmem:[#allocation12 + $0xb8] sm:$0xff]
        %v1784 = vld [vmem:[#allocation12 + $0xc0] sm:$0xff]
        %v1785 = vld [vmem:[#allocation12 + $0xc8] sm:$0xff]
        %v1786 = vld [vmem:[#allocation12 + $0xd0] sm:$0xff]
        %v1787 = vld [vmem:[#allocation12 + $0xd8] sm:$0xff]
        %v1788 = vld [vmem:[#allocation12 + $0xe0] sm:$0xff]
        %v1789 = vld [vmem:[#allocation12 + $0xe8] sm:$0xff]
        %v1790 = vld [vmem:[#allocation12 + $0xf0] sm:$0xff]
        %v1791 = vld [vmem:[#allocation12 + $0xf8] sm:$0xff]
        %v1792 = vld [vmem:[#allocation12 + $0x100] sm:$0xff]
        %v1793 = vld [vmem:[#allocation12 + $0x108] sm:$0xff]
        %v1794 = vld [vmem:[#allocation12 + $0x110] sm:$0xff]
        %v1795 = vld [vmem:[#allocation12 + $0x118] sm:$0xff]
        %v1796 = vld [vmem:[#allocation12 + $0x120] sm:$0xff]
        %v1797 = vld [vmem:[#allocation12 + $0x128] sm:$0xff]
        %v1798 = vld [vmem:[#allocation12 + $0x130] sm:$0xff]
        %v1799 = vld [vmem:[#allocation12 + $0x138] sm:$0xff]
        %v1800 = vld [vmem:[#allocation12 + $0x140] sm:$0xff]
        %v1801 = vld [vmem:[#allocation12 + $0x148] sm:$0xff]
        %v1802 = vld [vmem:[#allocation12 + $0x150] sm:$0xff]
        %v1803 = vld [vmem:[#allocation12 + $0x158] sm:$0xff]
        %v1804 = vld [vmem:[#allocation12 + $0x160] sm:$0xff]
        %v1805 = vld [vmem:[#allocation12 + $0x168] sm:$0xff]
        %v1806 = vld [vmem:[#allocation12 + $0x170] sm:$0xff]
        %v1807 = vld [vmem:[#allocation12 + $0x178] sm:$0xff]
        %v1808 = vld [vmem:[#allocation12 + $0x180] sm:$0xff]
        %v1809 = vld [vmem:[#allocation12 + $0x188] sm:$0xff]
        %v1810 = vld [vmem:[#allocation12 + $0x190] sm:$0xff]
        %v1811 = vld [vmem:[#allocation12 + $0x198] sm:$0xff]
        %v1812 = vld [vmem:[#allocation12 + $0x1a0] sm:$0xff]
        %v1813 = vld [vmem:[#allocation12 + $0x1a8] sm:$0xff]
        %v1814 = vld [vmem:[#allocation12 + $0x1b0] sm:$0xff]
        %v1815 = vld [vmem:[#allocation12 + $0x1b8] sm:$0xff]
        %v1816 = vld [vmem:[#allocation12 + $0x1c0] sm:$0xff]
        %v1817 = vld [vmem:[#allocation12 + $0x1c8] sm:$0xff]
        %v1818 = vld [vmem:[#allocation12 + $0x1d0] sm:$0xff]
        %v1819 = vld [vmem:[#allocation12 + $0x1d8] sm:$0xff]
        %v1820 = vld [vmem:[#allocation12 + $0x1e0] sm:$0xff]
        %v1821 = vld [vmem:[#allocation12 + $0x1e8] sm:$0xff]
        %v1822 = vld [vmem:[#allocation12 + $0x1f0] sm:$0xff]
        %v1823 = vld [vmem:[#allocation12 + $0x1f8] sm:$0xff]
        %v1824 = vld [vmem:[%s11] sm:$0x1]
        %v1826 = vlaneseq
        %v1827 = vshrl.u32 %v1826, 7
        %v1828 = vsub.s32 0, %v1827
        %v1829 = vrot.slane %v1824, %v1828
        %1831 = vmatprep.subr.mxu0 0.0
        %1832 = vmatpush1.msra.mxu0 %v1760
        %1833 = vmatprep.subr.mxu0 0.0
        %1834 = vmatpush1.msra.mxu0 %v1761
        %1835 = vmatprep.subr.mxu0 0.0
        %1836 = vmatpush1.msra.mxu0 %v1762
        %1837 = vmatprep.subr.mxu0 0.0
        %1838 = vmatpush1.msra.mxu0 %v1763
        %1839 = vmatprep.subr.mxu0 0.0
        %1840 = vmatpush1.msra.mxu0 %v1764
        %1841 = vmatprep.subr.mxu0 0.0
        %1842 = vmatpush1.msra.mxu0 %v1765
        %1843 = vmatprep.subr.mxu0 0.0
        %1844 = vmatpush1.msra.mxu0 %v1766
        %1845 = vmatprep.subr.mxu0 0.0
        %1846 = vmatpush1.msra.mxu0 %v1767
        %1847 = vmatprep.subr.mxu0 0.0
        %1848 = vmatpush1.msra.mxu0 %v1768
        %1849 = vmatprep.subr.mxu0 0.0
        %1850 = vmatpush1.msra.mxu0 %v1769
        %1851 = vmatprep.subr.mxu0 0.0
        %1852 = vmatpush1.msra.mxu0 %v1770
        %1853 = vmatprep.subr.mxu0 0.0
        %1854 = vmatpush1.msra.mxu0 %v1771
        %1855 = vmatprep.subr.mxu0 0.0
        %1856 = vmatpush1.msra.mxu0 %v1772
        %1857 = vmatprep.subr.mxu0 0.0
        %1858 = vmatpush1.msra.mxu0 %v1773
        %1859 = vmatprep.subr.mxu0 0.0
        %1860 = vmatpush1.msra.mxu0 %v1774
        %1861 = vmatprep.subr.mxu0 0.0
        %1862 = vmatpush1.msra.mxu0 %v1775
        %1863 = vmatprep.subr.mxu0 0.0
        %1864 = vmatpush1.msra.mxu0 %v1776
        %1865 = vmatprep.subr.mxu0 0.0
        %1866 = vmatpush1.msra.mxu0 %v1777
        %1867 = vmatprep.subr.mxu0 0.0
        %1868 = vmatpush1.msra.mxu0 %v1778
        %1869 = vmatprep.subr.mxu0 0.0
        %1870 = vmatpush1.msra.mxu0 %v1779
        %1871 = vmatprep.subr.mxu0 0.0
        %1872 = vmatpush1.msra.mxu0 %v1780
        %1873 = vmatprep.subr.mxu0 0.0
        %1874 = vmatpush1.msra.mxu0 %v1781
        %1875 = vmatprep.subr.mxu0 0.0
        %1876 = vmatpush1.msra.mxu0 %v1782
        %1877 = vmatprep.subr.mxu0 0.0
        %1878 = vmatpush1.msra.mxu0 %v1783
        %1879 = vmatprep.subr.mxu0 0.0
        %1880 = vmatpush1.msra.mxu0 %v1784
        %1881 = vmatprep.subr.mxu0 0.0
        %1882 = vmatpush1.msra.mxu0 %v1785
        %1883 = vmatprep.subr.mxu0 0.0
        %1884 = vmatpush1.msra.mxu0 %v1786
        %1885 = vmatprep.subr.mxu0 0.0
        %1886 = vmatpush1.msra.mxu0 %v1787
        %1887 = vmatprep.subr.mxu0 0.0
        %1888 = vmatpush1.msra.mxu0 %v1788
        %1889 = vmatprep.subr.mxu0 0.0
        %1890 = vmatpush1.msra.mxu0 %v1789
        %1891 = vmatprep.subr.mxu0 0.0
        %1892 = vmatpush1.msra.mxu0 %v1790
        %1893 = vmatprep.subr.mxu0 0.0
        %1894 = vmatpush1.msra.mxu0 %v1791
        %1895 = vmatprep.mubr.f32.mxu0 %v1757
        %1896 = vmatmul.mubr.f32.gmra.mrb[0].mxu0 %v1756
        %v1897 = vpop.f32.mrb[0].mxu0
        %v1898 = vadd.f32 %v1829, %v1897
        %v1899 = vpop.f32.mrb[0].mxu0
        %1900 = vdwg.mxu0
        %1901 = vmatprep.subr.mxu0 0.0
        %1902 = vmatpush1.msra.mxu0 %v1792
        %1903 = vmatprep.subr.mxu0 0.0
        %1904 = vmatpush1.msra.mxu0 %v1793
        %1905 = vmatprep.subr.mxu0 0.0
        %1906 = vmatpush1.msra.mxu0 %v1794
        %1907 = vmatprep.subr.mxu0 0.0
        %1908 = vmatpush1.msra.mxu0 %v1795
        %1909 = vmatprep.subr.mxu0 0.0
        %1910 = vmatpush1.msra.mxu0 %v1796
        %1911 = vmatprep.subr.mxu0 0.0
        %1912 = vmatpush1.msra.mxu0 %v1797
        %1913 = vmatprep.subr.mxu0 0.0
        %1914 = vmatpush1.msra.mxu0 %v1798
        %1915 = vmatprep.subr.mxu0 0.0
        %1916 = vmatpush1.msra.mxu0 %v1799
        %1917 = vmatprep.subr.mxu0 0.0
        %1918 = vmatpush1.msra.mxu0 %v1800
        %1919 = vmatprep.subr.mxu0 0.0
        %1920 = vmatpush1.msra.mxu0 %v1801
        %1921 = vmatprep.subr.mxu0 0.0
        %1922 = vmatpush1.msra.mxu0 %v1802
        %1923 = vmatprep.subr.mxu0 0.0
        %1924 = vmatpush1.msra.mxu0 %v1803
        %1925 = vmatprep.subr.mxu0 0.0
        %1926 = vmatpush1.msra.mxu0 %v1804
        %1927 = vmatprep.subr.mxu0 0.0
        %1928 = vmatpush1.msra.mxu0 %v1805
        %1929 = vmatprep.subr.mxu0 0.0
        %1930 = vmatpush1.msra.mxu0 %v1806
        %1931 = vmatprep.subr.mxu0 0.0
        %1932 = vmatpush1.msra.mxu0 %v1807
        %1933 = vmatprep.subr.mxu0 0.0
        %1934 = vmatpush1.msra.mxu0 %v1808
        %1935 = vmatprep.subr.mxu0 0.0
        %1936 = vmatpush1.msra.mxu0 %v1809
        %1937 = vmatprep.subr.mxu0 0.0
        %1938 = vmatpush1.msra.mxu0 %v1810
        %1939 = vmatprep.subr.mxu0 0.0
        %1940 = vmatpush1.msra.mxu0 %v1811
        %1941 = vmatprep.subr.mxu0 0.0
        %1942 = vmatpush1.msra.mxu0 %v1812
        %1943 = vmatprep.subr.mxu0 0.0
        %1944 = vmatpush1.msra.mxu0 %v1813
        %1945 = vmatprep.subr.mxu0 0.0
        %1946 = vmatpush1.msra.mxu0 %v1814
        %1947 = vmatprep.subr.mxu0 0.0
        %1948 = vmatpush1.msra.mxu0 %v1815
        %1949 = vmatprep.subr.mxu0 0.0
        %1950 = vmatpush1.msra.mxu0 %v1816
        %1951 = vmatprep.subr.mxu0 0.0
        %1952 = vmatpush1.msra.mxu0 %v1817
        %1953 = vmatprep.subr.mxu0 0.0
        %1954 = vmatpush1.msra.mxu0 %v1818
        %1955 = vmatprep.subr.mxu0 0.0
        %1956 = vmatpush1.msra.mxu0 %v1819
        %1957 = vmatprep.subr.mxu0 0.0
        %1958 = vmatpush1.msra.mxu0 %v1820
        %1959 = vmatprep.subr.mxu0 0.0
        %1960 = vmatpush1.msra.mxu0 %v1821
        %1961 = vmatprep.subr.mxu0 0.0
        %1962 = vmatpush1.msra.mxu0 %v1822
        %1963 = vmatprep.subr.mxu0 0.0
        %1964 = vmatpush1.msra.mxu0 %v1823
        %1965 = vmatprep.mubr.f32.mxu0 %v1759
        %1966 = vmatmul.mubr.f32.gmra.mrb[0].mxu0 %v1758
        %v1967 = vpop.f32.mrb[0].mxu0
        %v1968 = vadd.f32 %v1898, %v1967
        %v1969 = vpop.f32.mrb[0].mxu0
        %1970 = vdwg.mxu0
        %v1971 = vadd.f32 %v1527, %v1968
        %v1972 = vld [vmem:[%s6] sm:$0x1]
        %v1973 = vld [vmem:[%s7] sm:$0x1]
        %1974 = vadd.xlane.f32.xlu0 %v1971
        %v1975 = vpop.xlane.xlu0 %1974
        %v1976 = vmul.f32 %v1975, %v1502
        %v1977 = vmul.f32 %v1971, %v1971
        %1978 = vadd.xlane.f32.xlu0 %v1977
        %v1979 = vpop.xlane.xlu0 %1978
        %v1980 = vmul.f32 %v1979, %v1502
        %v1981 = vmul.f32 %v1976, %v1976
        %v1982 = vsub.f32 %v1980, %v1981
        %v1983 = vsub.f32 %v1971, %v1976
        %v1984 = vadd.f32 %v1982, 1e-05
        %v1985 = vrsqrt.pop %v1984
        %v1986 = vmul.f32 %v1983, %v1985
        %v1988 = vlaneseq
        %v1989 = vshrl.u32 %v1988, 7
        %v1990 = vsub.s32 0, %v1989
        %v1991 = vrot.slane %v1972, %v1990
        %v1993 = vmul.f32 %v1986, %v1991
        %v1995 = vlaneseq
        %v1996 = vshrl.u32 %v1995, 7
        %v1997 = vsub.s32 0, %v1996
        %v1998 = vrot.slane %v1973, %v1997
        %v2000 = vadd.f32 %v1993, %v1998
        %2001 = vst [vmem:[%s523] sm:$0xff] %v2000
        %s2002 = sand.u32 %s304, 1
        %s2003 = scalar_lea.sflag [#allocation5], %s2002
        %s2004 = sand.u32 %s304, 1
        %s2005 = smul.addr %s2004, 8
        %s2006 = scalar_lea.vmem [#allocation14], %s2005
        // Predicated region
        $region93: #{tpu_custom_call.1} parent=67 // pred_check
          %p2007 = pneg %p314
        $region94: #{tpu_custom_call.1} parent=67 // pred_check_branch
          %2009 = sbr.rel (%p2007) target = $region96
        $region95: #{tpu_custom_call.1} parent=67 // pred_region
          %s2011 = ssub.s32 128, 128
          %2012 = vsyncadd %s2003, %s2011
          %s2013 = smul.addr %s34, 128
          %s2014 = scalar_lea.hbm %s12, %s2013
          %s2016 = sshll.u32 %s2006, 4
          %s2017 = int_to_ptr.vmem [resolvable:$true] %s2016
          %2019 = dma.vmem_to_hbm [thread:$0]  %s2017, 128, %s2014, %s2003
        $region96: #{tpu_custom_call.1} parent=67 // pred_fallthru
          _
      $region68: #{tpu_custom_call.1} parent=5 // pred_fallthru
        _
      %p2020 = scmp.le.s32.totalorder 2, %s29
      // Predicated region
      $region97: #{tpu_custom_call.1} parent=5 // pred_check
        %p2021 = pneg %p2020
      $region98: #{tpu_custom_call.1} parent=5 // pred_check_branch
        %2023 = sbr.rel (%p2021) target = $region100
      $region99: #{tpu_custom_call.1} parent=5 // pred_region
        %s2024 = ssub.s32 %s29, 2
        // Predicated region
        $region101: #{tpu_custom_call.1} parent=99 // pred_check
          %p2025 = pneg %p320
        $region102: #{tpu_custom_call.1} parent=99 // pred_check_branch
          %2027 = sbr.rel (%p2025) target = $region104
        $region103: #{tpu_custom_call.1} parent=99 // pred_region
          %s2028 = sand.u32 %s305, 1
          %s2029 = scalar_lea.sflag [#allocation5], %s2028
          %s2030 = sand.u32 %s305, 1
          %s2031 = smul.addr %s2030, 8
          %s2032 = scalar_lea.vmem [#allocation14], %s2031
          %2033 = dma.done %s2029, 128
        $region104: #{tpu_custom_call.1} parent=99 // pred_fallthru
          _
      $region100: #{tpu_custom_call.1} parent=5 // pred_fallthru
        _
    $region6: #{tpu_custom_call.1} parent=1 // loop_footer
      %s33 = sadd.s32 1, %s29
    $region7: #{tpu_custom_call.1} parent=1 // loop_footer_branch
      %28 = sbr.rel target = $region3
    $region8: #{tpu_custom_call.1} parent=1 // loop_exit
      _
    %2034 = vsyncpa [#allocation4], 1
    %s2035 = scalar_lea.sflag [#allocation4], 1
    %2036 = vsyncpa %s2035, 1
    %2037 = vsyncpa [#allocation7], 1
    %s2038 = scalar_lea.sflag [#allocation7], 1
    %2039 = vsyncpa %s2038, 1
    %2040 = vsyncpa [#allocation10], 1
    %2041 = vsyncpa [#allocation13], 1
    %2042 = vsyncpa [#allocation5], 1
    %s2043 = scalar_lea.sflag [#allocation5], 1
    %2044 = vsyncpa %s2043, 1

</llo_original>
